<compile_context>
chip_gen: v7x
topology: tpu7x:2x2x1
jax: 0.10.0
libtpu: 0.0.40
codegen_flags: <defaults>
</compile_context>

<pallas_src>
import functools

import jax
import jax.numpy as jnp
from jax.experimental import pallas as pl
from jax.experimental.pallas import tpu as pltpu


# Set to jnp.bfloat16 on v6e/v7x for ~2x MXU throughput (f32 accumulation kept).
COMPUTE_DTYPE = jnp.float32


# ------------------------------ tiling helpers ------------------------------

def _round_up(x, m):
    return ((x + m - 1) // m) * m


def _row_tiling(m, max_tile=512):
    """Pad the row count to a multiple of 8, pick a tile <= max_tile that
    divides the padded count.  Returns (padded_rows, tile)."""
    mp = _round_up(m, 8)
    tile = min(mp, max_tile)
    mp = _round_up(mp, tile)
    return mp, tile


def _pad_rows(x, mp):
    m = x.shape[0]
    if mp == m:
        return x
    pad = [(0, mp - m)] + [(0, 0)] * (x.ndim - 1)
    return jnp.pad(x, pad)


# ----------------------------- Pallas kernels ------------------------------

def _linear_kernel(x_ref, w_ref, b_ref, o_ref, *, activation):
    cd = COMPUTE_DTYPE
    y = jnp.dot(x_ref[...].astype(cd), w_ref[...].astype(cd),
                preferred_element_type=jnp.float32) + b_ref[...]
    if activation == "hardswish":
        y = y * jnp.clip(y + 3.0, 0.0, 6.0) * (1.0 / 6.0)
    o_ref[...] = y.astype(o_ref.dtype)


def linear_pallas(x, w, b, activation=None, max_tile=512):
    """out = act(x @ w + b); x:[M,K] w:[K,N] b:[N]. Rows padded + tiled."""
    M, K = x.shape
    N = w.shape[1]
    Mp, TM = _row_tiling(M, max_tile)
    xp = _pad_rows(x.astype(jnp.float32), Mp)
    # NOTE: weight/bias blocks have a constant index_map -> they stay VMEM
    # resident across grid steps (no re-DMA per step).
    out = pl.pallas_call(
        functools.partial(_linear_kernel, activation=activation),
        out_shape=jax.ShapeDtypeStruct((Mp, N), jnp.float32),
        grid=(Mp // TM,),
        in_specs=[
            pl.BlockSpec((TM, K), lambda i: (i, 0)),
            pl.BlockSpec((K, N), lambda i: (0, 0)),
            pl.BlockSpec((1, N), lambda i: (0, 0)),
        ],
        out_specs=pl.BlockSpec((TM, N), lambda i: (i, 0)),
        compiler_params=pltpu.CompilerParams(dimension_semantics=("parallel",)),
    )(xp, w, b.reshape(1, N))
    return out[:M]


def _alpha_kernel(xi_ref, xj_ref, ea_ref, ylm_ref, we_ref, wy_ref, b_ref,
                  att_ref, o_ref, *, negative_slope):
    # Fused: e = lin_e_v([edge_attr, ylm]) (as two partial dots, no concat),
    #        x = leaky_relu(x_i + x_j + e), alpha_logit = sum(x * att, -1).
    cd = COMPUTE_DTYPE
    e = (jnp.dot(ea_ref[...].astype(cd), we_ref[...].astype(cd),
                 preferred_element_type=jnp.float32)
         + jnp.dot(ylm_ref[...].astype(cd), wy_ref[...].astype(cd),
                   preferred_element_type=jnp.float32)
         + b_ref[...])
    x = xi_ref[...] + xj_ref[...] + e
    x = jnp.where(x >= 0.0, x, negative_slope * x)          # leaky_relu
    o_ref[...] = jnp.sum(x * att_ref[...], axis=-1, keepdims=True)


def gat_alpha_pallas(x_i, x_j, edge_attr, ylm, w_e, w_y, b, att,
                     negative_slope=0.2, max_tile=512):
    E, C = x_i.shape
    DE = edge_attr.shape[1]
    DY = ylm.shape[1]
    Mp, TE = _row_tiling(E, max_tile)
    out = pl.pallas_call(
        functools.partial(_alpha_kernel, negative_slope=negative_slope),
        out_shape=jax.ShapeDtypeStruct((Mp, 1), jnp.float32),
        grid=(Mp // TE,),
        in_specs=[
            pl.BlockSpec((TE, C), lambda i: (i, 0)),
            pl.BlockSpec((TE, C), lambda i: (i, 0)),
            pl.BlockSpec((TE, DE), lambda i: (i, 0)),
            pl.BlockSpec((TE, DY), lambda i: (i, 0)),
            pl.BlockSpec((DE, C), lambda i: (0, 0)),
            pl.BlockSpec((DY, C), lambda i: (0, 0)),
            pl.BlockSpec((1, C), lambda i: (0, 0)),
            pl.BlockSpec((1, C), lambda i: (0, 0)),
        ],
        out_specs=pl.BlockSpec((TE, 1), lambda i: (i, 0)),
        compiler_params=pltpu.CompilerParams(dimension_semantics=("parallel",)),
    )(_pad_rows(x_i, Mp), _pad_rows(x_j, Mp), _pad_rows(edge_attr, Mp),
      _pad_rows(ylm, Mp), w_e, w_y, b.reshape(1, C), att.reshape(1, C))
    return out[:E, 0]


def _edge_mlp_kernel(*refs, use_mask):
    # Fused 2-layer edge MLP: lin1 over [xi | xj | edge_attr | ylm] computed as
    # four partial dots (no HBM concat), hardswish, lin2, optional row mask.
    if use_mask:
        (xi_ref, xj_ref, ea_ref, ylm_ref, mask_ref,
         w1i_ref, w1j_ref, w1e_ref, w1y_ref, b1_ref, w2_ref, b2_ref,
         o_ref) = refs
    else:
        (xi_ref, xj_ref, ea_ref, ylm_ref,
         w1i_ref, w1j_ref, w1e_ref, w1y_ref, b1_ref, w2_ref, b2_ref,
         o_ref) = refs
        mask_ref = None
    cd = COMPUTE_DTYPE
    h = (jnp.dot(xi_ref[...].astype(cd), w1i_ref[...].astype(cd),
                 preferred_element_type=jnp.float32)
         + jnp.dot(xj_ref[...].astype(cd), w1j_ref[...].astype(cd),
                   preferred_element_type=jnp.float32)
         + jnp.dot(ea_ref[...].astype(cd), w1e_ref[...].astype(cd),
                   preferred_element_type=jnp.float32)
         + jnp.dot(ylm_ref[...].astype(cd), w1y_ref[...].astype(cd),
                   preferred_element_type=jnp.float32)
         + b1_ref[...])
    h = h * jnp.clip(h + 3.0, 0.0, 6.0) * (1.0 / 6.0)           # hardswish
    y = jnp.dot(h.astype(cd), w2_ref[...].astype(cd),
                preferred_element_type=jnp.float32) + b2_ref[...]
    if use_mask:
        y = y * mask_ref[...]
    o_ref[...] = y.astype(o_ref.dtype)


def edge_mlp_pallas(xi, xj, edge_attr, ylm, w1, b1, w2, b2, mask=None,
                    max_tile=256):
    """Fused lin1(hardswish) -> lin2 over split inputs; optional 0/1 row mask."""
    E, C = xi.shape
    DE = edge_attr.shape[1]
    DY = ylm.shape[1]
    H1 = w1.shape[1]
    H2 = w2.shape[1]
    # Split the first-layer weight into per-input K-blocks (tiny XLA slices).
    w1i, w1j, w1e, w1y = (w1[:C], w1[C:2 * C], w1[2 * C:2 * C + DE],
                          w1[2 * C + DE:])
    Mp, TE = _row_tiling(E, max_tile)
    inputs = [_pad_rows(xi, Mp), _pad_rows(xj, Mp), _pad_rows(edge_attr, Mp),
              _pad_rows(ylm, Mp)]
    in_specs = [
        pl.BlockSpec((TE, C), lambda i: (i, 0)),
        pl.BlockSpec((TE, C), lambda i: (i, 0)),
        pl.BlockSpec((TE, DE), lambda i: (i, 0)),
        pl.BlockSpec((TE, DY), lambda i: (i, 0)),
    ]
    use_mask = mask is not None
    if use_mask:
        inputs.append(_pad_rows(mask.astype(jnp.float32).reshape(E, 1), Mp))
        in_specs.append(pl.BlockSpec((TE, 1), lambda i: (i, 0)))
    inputs += [w1i, w1j, w1e, w1y, b1.reshape(1, H1), w2, b2.reshape(1, H2)]
    in_specs += [
        pl.BlockSpec((C, H1), lambda i: (0, 0)),
        pl.BlockSpec((C, H1), lambda i: (0, 0)),
        pl.BlockSpec((DE, H1), lambda i: (0, 0)),
        pl.BlockSpec((DY, H1), lambda i: (0, 0)),
        pl.BlockSpec((1, H1), lambda i: (0, 0)),
        pl.BlockSpec((H1, H2), lambda i: (0, 0)),
        pl.BlockSpec((1, H2), lambda i: (0, 0)),
    ]
    out = pl.pallas_call(
        functools.partial(_edge_mlp_kernel, use_mask=use_mask),
        out_shape=jax.ShapeDtypeStruct((Mp, H2), jnp.float32),
        grid=(Mp // TE,),
        in_specs=in_specs,
        out_specs=pl.BlockSpec((TE, H2), lambda i: (i, 0)),
        compiler_params=pltpu.CompilerParams(dimension_semantics=("parallel",)),
    )(*inputs)
    return out[:E]


def _ylm_kernel(x_ref, w2_ref, b2_ref, w3_ref, b3_ref, w4_ref, b4_ref,
                wl_ref, bl_ref, o_ref):
    # Fused TextCNN: for K in (2,3,4) build the T=L-K+1 windows in VMEM with
    # static slicing, run ONE (T*TB, K*D) matmul, tanh, max-pool over T; then
    # concat the three pooled features and apply the final linear.
    x = x_ref[...]                                  # (TB, L, D)
    TB, L, D = x.shape
    cd = COMPUTE_DTYPE
    feats = []
    for w_r, b_r, K in ((w2_ref, b2_ref, 2), (w3_ref, b3_ref, 3),
                        (w4_ref, b4_ref, 4)):
        T = L - K + 1
        win = jnp.concatenate(
            [jnp.concatenate([x[:, t + k, :] for k in range(K)], axis=-1)
             for t in range(T)], axis=0)            # (T*TB, K*D)
        y = jnp.tanh(jnp.dot(win.astype(cd), w_r[...].astype(cd),
                             preferred_element_type=jnp.float32) + b_r[...])
        y = y.reshape(T, TB, y.shape[-1])
        feats.append(jnp.max(y, axis=0))            # (TB, NK)
    cat = jnp.concatenate(feats, axis=-1)           # (TB, 3*NK)
    out = jnp.dot(cat.astype(cd), wl_ref[...].astype(cd),
                  preferred_element_type=jnp.float32) + bl_ref[...]
    o_ref[...] = out.astype(o_ref.dtype)


def ylm_conv_pallas(x, p, max_tile=256):
    """Fused YlmConv (3 convs + tanh + max-pool + linear); x:[B, L, 25]."""
    B, L, D = x.shape
    NK = p["conv2_w"].shape[1]
    OD = p["lin_w"].shape[1]
    Mp, TB = _row_tiling(B, max_tile)
    xp = _pad_rows(x, Mp)
    in_specs = [pl.BlockSpec((TB, L, D), lambda i: (i, 0, 0))]
    for K in (2, 3, 4):
        kd = K * D
        in_specs.append(pl.BlockSpec((kd, NK), lambda i: (0, 0)))
        in_specs.append(pl.BlockSpec((1, NK), lambda i: (0, 0)))
    in_specs += [pl.BlockSpec((3 * NK, OD), lambda i: (0, 0)),
                 pl.BlockSpec((1, OD), lambda i: (0, 0))]
    out = pl.pallas_call(
        _ylm_kernel,
        out_shape=jax.ShapeDtypeStruct((Mp, OD), jnp.float32),
        grid=(Mp // TB,),
        in_specs=in_specs,
        out_specs=pl.BlockSpec((TB, OD), lambda i: (i, 0)),
        compiler_params=pltpu.CompilerParams(dimension_semantics=("parallel",)),
    )(xp, p["conv2_w"], p["conv2_b"].reshape(1, NK),
      p["conv3_w"], p["conv3_b"].reshape(1, NK),
      p["conv4_w"], p["conv4_b"].reshape(1, NK),
      p["lin_w"], p["lin_b"].reshape(1, OD))
    return out[:B]


# ------------------------------- JAX glue -----------------------------------

def segment_softmax(logits, segment_ids, num_segments):
    # TODO(synk): segment softmax + scatter-add aggregation are data-dependent
    # gather/scatter; kept in plain JAX segment ops rather than Pallas.
    seg_max = jax.ops.segment_max(logits, segment_ids, num_segments=num_segments)
    seg_max = jnp.where(jnp.isfinite(seg_max), seg_max, 0.0)
    e = jnp.exp(logits - seg_max[segment_ids])
    denom = jax.ops.segment_sum(e, segment_ids, num_segments=num_segments)
    return e / (denom[segment_ids] + 1e-16)


def gat_conv_forward(p, h, edge_index, edge_attr, pbc_index, ylm,
                     negative_slope=0.2):
    # heads == 1, concat == False
    N, C = h.shape
    DE = edge_attr.shape[1]
    src, dst = edge_index[0], edge_index[1]

    # Fused lin_l + lin_r: one streaming pass over h, 2C-wide output lanes.
    w_lr = jnp.concatenate([p["lin_l_w"], p["lin_r_w"]], axis=1)
    b_lr = jnp.concatenate([p["lin_l_b"], p["lin_r_b"]])
    x_lr = linear_pallas(h, w_lr, b_lr)                               # [N, 2C]
    x_l, x_r = x_lr[:, :C], x_lr[:, C:]

    x_j = x_l[src]                                                    # source msgs
    x_i = x_r[dst]                                                    # targets

    # Fused lin_e_v + leaky_relu + attention-logit reduction.
    w_ev = p["lin_e_v_w"]
    logits = gat_alpha_pallas(x_i, x_j, edge_attr, ylm,
                              w_ev[:DE], w_ev[DE:], p["lin_e_v_b"], p["att"],
                              negative_slope)
    alpha = segment_softmax(logits, dst, N)                           # [E]
    out = jax.ops.segment_sum(x_j * alpha[:, None], dst, num_segments=N)
    # mean over heads (H=1) is identity
    out = out + p["bias"]
    out = out[pbc_index]

    xi = out[edge_index[0]]
    xj = out[edge_index[1]]
    # Fused lin_edge -> hardswish -> lin_edge_2 (no HBM concat / round trip).
    eo = edge_mlp_pallas(xi, xj, edge_attr, ylm,
                         p["lin_edge_w"], p["lin_edge_b"],
                         p["lin_edge_2_w"], p["lin_edge_2_b"])
    return out, eo


def lcmp_forward(params, x_nodes, ylm_pair, edge_index, edge_attr, pbc_index,
                 rev, rev_flag=False):
    # TODO(synk): embedding lookup is a data-dependent gather; plain JAX.
    h = params["embedding"][x_nodes]                                  # [N, C]

    # Batch both Ylm halves (data.ylm[0], data.ylm[1]) through one fused call.
    two, E, L, D = ylm_pair.shape
    ylm_both = ylm_conv_pallas(ylm_pair.reshape(two * E, L, D), params["ylm"])
    ylm = jnp.concatenate([ylm_both[:E], ylm_both[E:]], axis=1)       # [E, DY]

    for blk in params["interactions"]:
        h_out, e_out = gat_conv_forward(blk, h, edge_index, edge_attr,
                                        pbc_index, ylm)
        h = h + h_out
        edge_attr = edge_attr + e_out

    xi = h[edge_index[0]]
    xj = h[edge_index[1]]
    mask = rev if rev_flag else jnp.logical_not(rev)
    # Fused head: lin_edge_1(256) -> hardswish -> lin_edge_2(dim_ham) with the
    # rev mask applied in-kernel (256-wide intermediate stays VMEM-resident).
    eo = edge_mlp_pallas(xi, xj, edge_attr, ylm,
                         params["lin_edge_1_w"], params["lin_edge_1_b"],
                         params["lin_edge_2_w"], params["lin_edge_2_b"],
                         mask=mask)
    return eo


# ---------------------------- parameter init --------------------------------

def init_params(key, channels=16, dim_e=32, dim_Y=16, dim_ham=1,
                num_kernel=64, ylm_in_dim=25):
    def dense(k, fan_in, fan_out):
        kw, kb = jax.random.split(k)
        lim = 1.0 / jnp.sqrt(jnp.float32(fan_in))
        w = jax.random.uniform(kw, (fan_in, fan_out), jnp.float32, -lim, lim)
        b = jax.random.uniform(kb, (fan_out,), jnp.float32, -lim, lim)
        return w, b

    keys = iter(jax.random.split(key, 64))
    params = {}
    params["embedding"] = jax.random.normal(next(keys), (100, channels),
                                            jnp.float32)

    ylm = {}
    for K in (2, 3, 4):
        w, b = dense(next(keys), K * ylm_in_dim, num_kernel)
        ylm[f"conv{K}_w"], ylm[f"conv{K}_b"] = w, b
    ylm["lin_w"], ylm["lin_b"] = dense(next(keys), 3 * num_kernel, dim_Y // 2)
    params["ylm"] = ylm

    blocks = []
    for _ in range(5):
        blk = {}
        blk["lin_l_w"], blk["lin_l_b"] = dense(next(keys), channels, channels)
        blk["lin_r_w"], blk["lin_r_b"] = dense(next(keys), channels, channels)
        blk["lin_e_v_w"], blk["lin_e_v_b"] = dense(next(keys),
                                                   dim_e + dim_Y, channels)
        blk["att"] = (jax.random.normal(next(keys), (1, channels), jnp.float32)
                      / jnp.sqrt(jnp.float32(channels)))                # glorot-ish
        blk["bias"] = jnp.zeros((channels,), jnp.float32)               # zeros()
        blk["lin_edge_w"], blk["lin_edge_b"] = dense(
            next(keys), 2 * channels + dim_e + dim_Y, dim_e)
        blk["lin_edge_2_w"], blk["lin_edge_2_b"] = dense(next(keys), dim_e, dim_e)
        blocks.append(blk)
    params["interactions"] = blocks

    params["lin_edge_1_w"], params["lin_edge_1_b"] = dense(
        next(keys), 2 * channels + dim_e + dim_Y, 256)
    params["lin_edge_2_w"], params["lin_edge_2_b"] = dense(next(keys), 256,
                                                           dim_ham)
    return params


# --------------------------------- main --------------------------------------

if __name__ == "__main__":
    C, DE, DY, DH = 16, 32, 16, 1          # channels, dim_e, dim_Y, dim_ham
    N_NODES, N_EDGES, L_YLM = 16, 16, 6    # small synthetic graph

    root = jax.random.PRNGKey(0)
    kp, kx, ky0, ky1, ke, kea, kpbc, krev = jax.random.split(root, 8)

    params = init_params(kp, channels=C, dim_e=DE, dim_Y=DY, dim_ham=DH)

    x_nodes = jax.random.randint(kx, (N_NODES,), 0, 100, dtype=jnp.int32)
    ylm_pair = jnp.stack([
        jax.random.normal(ky0, (N_EDGES, L_YLM, 25), jnp.float32),
        jax.random.normal(ky1, (N_EDGES, L_YLM, 25), jnp.float32),
    ])                                                           # data.ylm
    edge_index = jax.random.randint(ke, (2, N_EDGES), 0, N_NODES,
                                    dtype=jnp.int32)
    edge_attr = jax.random.normal(kea, (N_EDGES, DE), jnp.float32)
    pbc_index = jax.random.permutation(kpbc, N_NODES).astype(jnp.int32)
    rev = jax.random.bernoulli(krev, 0.5, (N_EDGES,))

    fwd = jax.jit(functools.partial(lcmp_forward, rev_flag=False))
    out = fwd(params, x_nodes, ylm_pair, edge_index, edge_attr, pbc_index, rev)
    jax.block_until_ready(out)
    assert out.shape == (N_EDGES, DH)
    assert bool(jnp.all(jnp.isfinite(out)))
    print("KERNEL_OK")
</pallas_src>

<mosaic_0001>
module attributes {stable_mosaic.version = 11 : i64} {
  func.func private @main(%arg0: i32) attributes {dimension_semantics = [#tpu.dimension_semantics<core_parallel>], iteration_bounds = array<i64: 2>, tpu.core_type = #tpu.core_type<sc_scalar_subcore>, window_params = []} {
    return
  }
}

module attributes {stable_mosaic.version = 11 : i64} {
  func.func private @main(%arg0: i32) attributes {dimension_semantics = [#tpu.dimension_semantics<core_parallel>], iteration_bounds = array<i64: 2>, tpu.core_type = #tpu.core_type<sc_scalar_subcore>, window_params = []} {
    return
  }
}

module attributes {stable_mosaic.version = 11 : i64} {
  func.func @_linear_kernel(%arg0: i32, %arg1: memref<16x16xf32, #tpu.memory_space<vmem>>, %arg2: memref<16x32xf32, #tpu.memory_space<vmem>>, %arg3: memref<1x32xf32, #tpu.memory_space<vmem>>, %arg4: memref<16x32xf32, #tpu.memory_space<vmem>>) attributes {dimension_semantics = [#tpu.dimension_semantics<parallel>], iteration_bounds = array<i64: 1>, scalar_prefetch = 0 : i64, scratch_operands = 0 : i64, tpu.core_type = #tpu.core_type<tc>, window_params = [{transform_indices = @transform_0, window_bounds = array<i64: 16, 16>}, {pipeline_mode = #tpu.pipeline_mode<synchronous>, transform_indices = @transform_1, window_bounds = array<i64: 16, 32>}, {pipeline_mode = #tpu.pipeline_mode<synchronous>, transform_indices = @transform_2, window_bounds = array<i64: 1, 32>}, {transform_indices = @transform_3, window_bounds = array<i64: 16, 32>}]} {
    %c0 = arith.constant 0 : index
    %c0_0 = arith.constant 0 : index
    %0 = vector.load %arg1[%c0, %c0_0] : memref<16x16xf32, #tpu.memory_space<vmem>>, vector<16x16xf32>
    %c0_1 = arith.constant 0 : index
    %c0_2 = arith.constant 0 : index
    %1 = vector.load %arg2[%c0_1, %c0_2] : memref<16x32xf32, #tpu.memory_space<vmem>>, vector<16x32xf32>
    %cst = arith.constant dense<0.000000e+00> : vector<16x32xf32>
    %2 = tpu.matmul %0, %1, %cst {dimension_numbers = #tpu.dot_dimension_numbers<[1], [0], [0], [1], [0, 0, 1, 1], [], []>} : vector<16x16xf32>, vector<16x32xf32>, vector<16x32xf32> -> vector<16x32xf32>
    %c0_3 = arith.constant 0 : index
    %c0_4 = arith.constant 0 : index
    %3 = vector.load %arg3[%c0_3, %c0_4] : memref<1x32xf32, #tpu.memory_space<vmem>>, vector<1x32xf32>
    %4 = vector.broadcast %3 : vector<1x32xf32> to vector<16x32xf32>
    %5 = arith.addf %2, %4 : vector<16x32xf32>
    %c0_5 = arith.constant 0 : index
    %c0_6 = arith.constant 0 : index
    %6 = vector.load %arg4[%c0_5, %c0_6] : memref<16x32xf32, #tpu.memory_space<vmem>>, vector<16x32xf32>
    tpu.vector_store %arg4[%c0_5, %c0_6], %5 {strides = array<i32>} : memref<16x32xf32, #tpu.memory_space<vmem>>, vector<16x32xf32>,
    return
  }
  func.func @transform_0(%arg0: i32) -> (i32, i32) {
    %c0_i32 = arith.constant 0 : i32
    %c0_i32_0 = arith.constant 0 : i32
    return %arg0, %c0_i32 : i32, i32
  }
  func.func @transform_1(%arg0: i32) -> (i32, i32) {
    %c0_i32 = arith.constant 0 : i32
    %c0_i32_0 = arith.constant 0 : i32
    %c0_i32_1 = arith.constant 0 : i32
    return %c0_i32, %c0_i32_0 : i32, i32
  }
  func.func @transform_2(%arg0: i32) -> (i32, i32) {
    %c0_i32 = arith.constant 0 : i32
    %c0_i32_0 = arith.constant 0 : i32
    %c0_i32_1 = arith.constant 0 : i32
    return %c0_i32, %c0_i32_0 : i32, i32
  }
  func.func @transform_3(%arg0: i32) -> (i32, i32) {
    %c0_i32 = arith.constant 0 : i32
    %c0_i32_0 = arith.constant 0 : i32
    return %arg0, %c0_i32 : i32, i32
  }
}

module attributes {stable_mosaic.version = 11 : i64} {
  func.func @_ylm_kernel(%arg0: i32, %arg1: memref<32x6x25xf32, #tpu.memory_space<vmem>>, %arg2: memref<50x64xf32, #tpu.memory_space<vmem>>, %arg3: memref<1x64xf32, #tpu.memory_space<vmem>>, %arg4: memref<75x64xf32, #tpu.memory_space<vmem>>, %arg5: memref<1x64xf32, #tpu.memory_space<vmem>>, %arg6: memref<100x64xf32, #tpu.memory_space<vmem>>, %arg7: memref<1x64xf32, #tpu.memory_space<vmem>>, %arg8: memref<192x8xf32, #tpu.memory_space<vmem>>, %arg9: memref<1x8xf32, #tpu.memory_space<vmem>>, %arg10: memref<32x8xf32, #tpu.memory_space<vmem>>) attributes {dimension_semantics = [#tpu.dimension_semantics<parallel>], iteration_bounds = array<i64: 1>, scalar_prefetch = 0 : i64, scratch_operands = 0 : i64, tpu.core_type = #tpu.core_type<tc>, window_params = [{transform_indices = @transform_0, window_bounds = array<i64: 32, 6, 25>}, {pipeline_mode = #tpu.pipeline_mode<synchronous>, transform_indices = @transform_1, window_bounds = array<i64: 50, 64>}, {pipeline_mode = #tpu.pipeline_mode<synchronous>, transform_indices = @transform_2, window_bounds = array<i64: 1, 64>}, {pipeline_mode = #tpu.pipeline_mode<synchronous>, transform_indices = @transform_3, window_bounds = array<i64: 75, 64>}, {pipeline_mode = #tpu.pipeline_mode<synchronous>, transform_indices = @transform_4, window_bounds = array<i64: 1, 64>}, {pipeline_mode = #tpu.pipeline_mode<synchronous>, transform_indices = @transform_5, window_bounds = array<i64: 100, 64>}, {pipeline_mode = #tpu.pipeline_mode<synchronous>, transform_indices = @transform_6, window_bounds = array<i64: 1, 64>}, {pipeline_mode = #tpu.pipeline_mode<synchronous>, transform_indices = @transform_7, window_bounds = array<i64: 192, 8>}, {pipeline_mode = #tpu.pipeline_mode<synchronous>, transform_indices = @transform_8, window_bounds = array<i64: 1, 8>}, {transform_indices = @transform_9, window_bounds = array<i64: 32, 8>}]} {
    %c0 = arith.constant 0 : index
    %c0_0 = arith.constant 0 : index
    %c0_1 = arith.constant 0 : index
    %0 = vector.load %arg1[%c0, %c0_0, %c0_1] : memref<32x6x25xf32, #tpu.memory_space<vmem>>, vector<32x6x25xf32>
    %1 = vector.extract_strided_slice %0 {offsets = [0, 0, 0], sizes = [32, 1, 25], strides = [1, 1, 1]} : vector<32x6x25xf32> to vector<32x1x25xf32>
    %2 = vector.shape_cast %1 : vector<32x1x25xf32> to vector<32x25xf32>
    %3 = vector.extract_strided_slice %0 {offsets = [0, 1, 0], sizes = [32, 1, 25], strides = [1, 1, 1]} : vector<32x6x25xf32> to vector<32x1x25xf32>
    %4 = vector.shape_cast %3 : vector<32x1x25xf32> to vector<32x25xf32>
    %5 = tpu.concatenate %2, %4 in 1 : vector<32x25xf32>, vector<32x25xf32> -> vector<32x50xf32>
    %6 = vector.extract_strided_slice %0 {offsets = [0, 1, 0], sizes = [32, 1, 25], strides = [1, 1, 1]} : vector<32x6x25xf32> to vector<32x1x25xf32>
    %7 = vector.shape_cast %6 : vector<32x1x25xf32> to vector<32x25xf32>
    %8 = vector.extract_strided_slice %0 {offsets = [0, 2, 0], sizes = [32, 1, 25], strides = [1, 1, 1]} : vector<32x6x25xf32> to vector<32x1x25xf32>
    %9 = vector.shape_cast %8 : vector<32x1x25xf32> to vector<32x25xf32>
    %10 = tpu.concatenate %7, %9 in 1 : vector<32x25xf32>, vector<32x25xf32> -> vector<32x50xf32>
    %11 = vector.extract_strided_slice %0 {offsets = [0, 2, 0], sizes = [32, 1, 25], strides = [1, 1, 1]} : vector<32x6x25xf32> to vector<32x1x25xf32>
    %12 = vector.shape_cast %11 : vector<32x1x25xf32> to vector<32x25xf32>
    %13 = vector.extract_strided_slice %0 {offsets = [0, 3, 0], sizes = [32, 1, 25], strides = [1, 1, 1]} : vector<32x6x25xf32> to vector<32x1x25xf32>
    %14 = vector.shape_cast %13 : vector<32x1x25xf32> to vector<32x25xf32>
    %15 = tpu.concatenate %12, %14 in 1 : vector<32x25xf32>, vector<32x25xf32> -> vector<32x50xf32>
    %16 = vector.extract_strided_slice %0 {offsets = [0, 3, 0], sizes = [32, 1, 25], strides = [1, 1, 1]} : vector<32x6x25xf32> to vector<32x1x25xf32>
    %17 = vector.shape_cast %16 : vector<32x1x25xf32> to vector<32x25xf32>
    %18 = vector.extract_strided_slice %0 {offsets = [0, 4, 0], sizes = [32, 1, 25], strides = [1, 1, 1]} : vector<32x6x25xf32> to vector<32x1x25xf32>
    %19 = vector.shape_cast %18 : vector<32x1x25xf32> to vector<32x25xf32>
    %20 = tpu.concatenate %17, %19 in 1 : vector<32x25xf32>, vector<32x25xf32> -> vector<32x50xf32>
    %21 = vector.extract_strided_slice %0 {offsets = [0, 4, 0], sizes = [32, 1, 25], strides = [1, 1, 1]} : vector<32x6x25xf32> to vector<32x1x25xf32>
    %22 = vector.shape_cast %21 : vector<32x1x25xf32> to vector<32x25xf32>
    %23 = vector.extract_strided_slice %0 {offsets = [0, 5, 0], sizes = [32, 1, 25], strides = [1, 1, 1]} : vector<32x6x25xf32> to vector<32x1x25xf32>
    %24 = vector.shape_cast %23 : vector<32x1x25xf32> to vector<32x25xf32>
    %25 = tpu.concatenate %22, %24 in 1 : vector<32x25xf32>, vector<32x25xf32> -> vector<32x50xf32>
    %26 = tpu.concatenate %5, %10, %15, %20, %25 in 0 : vector<32x50xf32>, vector<32x50xf32>, vector<32x50xf32>, vector<32x50xf32>, vector<32x50xf32> -> vector<160x50xf32>
    %c0_2 = arith.constant 0 : index
    %c0_3 = arith.constant 0 : index
    %27 = vector.load %arg2[%c0_2, %c0_3] : memref<50x64xf32, #tpu.memory_space<vmem>>, vector<50x64xf32>
    %cst = arith.constant dense<0.000000e+00> : vector<160x64xf32>
    %28 = tpu.matmul %26, %27, %cst {dimension_numbers = #tpu.dot_dimension_numbers<[1], [0], [0], [1], [0, 0, 1, 1], [], []>} : vector<160x50xf32>, vector<50x64xf32>, vector<160x64xf32> -> vector<160x64xf32>
    %c0_4 = arith.constant 0 : index
    %c0_5 = arith.constant 0 : index
    %29 = vector.load %arg3[%c0_4, %c0_5] : memref<1x64xf32, #tpu.memory_space<vmem>>, vector<1x64xf32>
    %30 = vector.broadcast %29 : vector<1x64xf32> to vector<160x64xf32>
    %31 = arith.addf %28, %30 : vector<160x64xf32>
    %32 = math.tanh %31 : vector<160x64xf32>
    %33 = vector.shape_cast %32 : vector<160x64xf32> to vector<5x32x64xf32>
    %cst_6 = arith.constant dense<0xFF800000> : vector<32x64xf32>
    %34 = vector.multi_reduction <maximumf>, %33, %cst_6 [0] : vector<5x32x64xf32> to vector<32x64xf32>
    %35 = vector.extract_strided_slice %0 {offsets = [0, 0, 0], sizes = [32, 1, 25], strides = [1, 1, 1]} : vector<32x6x25xf32> to vector<32x1x25xf32>
    %36 = vector.shape_cast %35 : vector<32x1x25xf32> to vector<32x25xf32>
    %37 = vector.extract_strided_slice %0 {offsets = [0, 1, 0], sizes = [32, 1, 25], strides = [1, 1, 1]} : vector<32x6x25xf32> to vector<32x1x25xf32>
    %38 = vector.shape_cast %37 : vector<32x1x25xf32> to vector<32x25xf32>
    %39 = vector.extract_strided_slice %0 {offsets = [0, 2, 0], sizes = [32, 1, 25], strides = [1, 1, 1]} : vector<32x6x25xf32> to vector<32x1x25xf32>
    %40 = vector.shape_cast %39 : vector<32x1x25xf32> to vector<32x25xf32>
    %41 = tpu.concatenate %36, %38, %40 in 1 : vector<32x25xf32>, vector<32x25xf32>, vector<32x25xf32> -> vector<32x75xf32>
    %42 = vector.extract_strided_slice %0 {offsets = [0, 1, 0], sizes = [32, 1, 25], strides = [1, 1, 1]} : vector<32x6x25xf32> to vector<32x1x25xf32>
    %43 = vector.shape_cast %42 : vector<32x1x25xf32> to vector<32x25xf32>
    %44 = vector.extract_strided_slice %0 {offsets = [0, 2, 0], sizes = [32, 1, 25], strides = [1, 1, 1]} : vector<32x6x25xf32> to vector<32x1x25xf32>
    %45 = vector.shape_cast %44 : vector<32x1x25xf32> to vector<32x25xf32>
    %46 = vector.extract_strided_slice %0 {offsets = [0, 3, 0], sizes = [32, 1, 25], strides = [1, 1, 1]} : vector<32x6x25xf32> to vector<32x1x25xf32>
    %47 = vector.shape_cast %46 : vector<32x1x25xf32> to vector<32x25xf32>
    %48 = tpu.concatenate %43, %45, %47 in 1 : vector<32x25xf32>, vector<32x25xf32>, vector<32x25xf32> -> vector<32x75xf32>
    %49 = vector.extract_strided_slice %0 {offsets = [0, 2, 0], sizes = [32, 1, 25], strides = [1, 1, 1]} : vector<32x6x25xf32> to vector<32x1x25xf32>
    %50 = vector.shape_cast %49 : vector<32x1x25xf32> to vector<32x25xf32>
    %51 = vector.extract_strided_slice %0 {offsets = [0, 3, 0], sizes = [32, 1, 25], strides = [1, 1, 1]} : vector<32x6x25xf32> to vector<32x1x25xf32>
    %52 = vector.shape_cast %51 : vector<32x1x25xf32> to vector<32x25xf32>
    %53 = vector.extract_strided_slice %0 {offsets = [0, 4, 0], sizes = [32, 1, 25], strides = [1, 1, 1]} : vector<32x6x25xf32> to vector<32x1x25xf32>
    %54 = vector.shape_cast %53 : vector<32x1x25xf32> to vector<32x25xf32>
    %55 = tpu.concatenate %50, %52, %54 in 1 : vector<32x25xf32>, vector<32x25xf32>, vector<32x25xf32> -> vector<32x75xf32>
    %56 = vector.extract_strided_slice %0 {offsets = [0, 3, 0], sizes = [32, 1, 25], strides = [1, 1, 1]} : vector<32x6x25xf32> to vector<32x1x25xf32>
    %57 = vector.shape_cast %56 : vector<32x1x25xf32> to vector<32x25xf32>
    %58 = vector.extract_strided_slice %0 {offsets = [0, 4, 0], sizes = [32, 1, 25], strides = [1, 1, 1]} : vector<32x6x25xf32> to vector<32x1x25xf32>
    %59 = vector.shape_cast %58 : vector<32x1x25xf32> to vector<32x25xf32>
    %60 = vector.extract_strided_slice %0 {offsets = [0, 5, 0], sizes = [32, 1, 25], strides = [1, 1, 1]} : vector<32x6x25xf32> to vector<32x1x25xf32>
    %61 = vector.shape_cast %60 : vector<32x1x25xf32> to vector<32x25xf32>
    %62 = tpu.concatenate %57, %59, %61 in 1 : vector<32x25xf32>, vector<32x25xf32>, vector<32x25xf32> -> vector<32x75xf32>
    %63 = tpu.concatenate %41, %48, %55, %62 in 0 : vector<32x75xf32>, vector<32x75xf32>, vector<32x75xf32>, vector<32x75xf32> -> vector<128x75xf32>
    %c0_7 = arith.constant 0 : index
    %c0_8 = arith.constant 0 : index
    %64 = vector.load %arg4[%c0_7, %c0_8] : memref<75x64xf32, #tpu.memory_space<vmem>>, vector<75x64xf32>
    %cst_9 = arith.constant dense<0.000000e+00> : vector<128x64xf32>
    %65 = tpu.matmul %63, %64, %cst_9 {dimension_numbers = #tpu.dot_dimension_numbers<[1], [0], [0], [1], [0, 0, 1, 1], [], []>} : vector<128x75xf32>, vector<75x64xf32>, vector<128x64xf32> -> vector<128x64xf32>
    %c0_10 = arith.constant 0 : index
    %c0_11 = arith.constant 0 : index
    %66 = vector.load %arg5[%c0_10, %c0_11] : memref<1x64xf32, #tpu.memory_space<vmem>>, vector<1x64xf32>
    %67 = vector.broadcast %66 : vector<1x64xf32> to vector<128x64xf32>
    %68 = arith.addf %65, %67 : vector<128x64xf32>
    %69 = math.tanh %68 : vector<128x64xf32>
    %70 = vector.shape_cast %69 : vector<128x64xf32> to vector<4x32x64xf32>
    %cst_12 = arith.constant dense<0xFF800000> : vector<32x64xf32>
    %71 = vector.multi_reduction <maximumf>, %70, %cst_12 [0] : vector<4x32x64xf32> to vector<32x64xf32>
    %72 = vector.extract_strided_slice %0 {offsets = [0, 0, 0], sizes = [32, 1, 25], strides = [1, 1, 1]} : vector<32x6x25xf32> to vector<32x1x25xf32>
    %73 = vector.shape_cast %72 : vector<32x1x25xf32> to vector<32x25xf32>
    %74 = vector.extract_strided_slice %0 {offsets = [0, 1, 0], sizes = [32, 1, 25], strides = [1, 1, 1]} : vector<32x6x25xf32> to vector<32x1x25xf32>
    %75 = vector.shape_cast %74 : vector<32x1x25xf32> to vector<32x25xf32>
    %76 = vector.extract_strided_slice %0 {offsets = [0, 2, 0], sizes = [32, 1, 25], strides = [1, 1, 1]} : vector<32x6x25xf32> to vector<32x1x25xf32>
    %77 = vector.shape_cast %76 : vector<32x1x25xf32> to vector<32x25xf32>
    %78 = vector.extract_strided_slice %0 {offsets = [0, 3, 0], sizes = [32, 1, 25], strides = [1, 1, 1]} : vector<32x6x25xf32> to vector<32x1x25xf32>
    %79 = vector.shape_cast %78 : vector<32x1x25xf32> to vector<32x25xf32>
    %80 = tpu.concatenate %73, %75, %77, %79 in 1 : vector<32x25xf32>, vector<32x25xf32>, vector<32x25xf32>, vector<32x25xf32> -> vector<32x100xf32>
    %81 = vector.extract_strided_slice %0 {offsets = [0, 1, 0], sizes = [32, 1, 25], strides = [1, 1, 1]} : vector<32x6x25xf32> to vector<32x1x25xf32>
    %82 = vector.shape_cast %81 : vector<32x1x25xf32> to vector<32x25xf32>
    %83 = vector.extract_strided_slice %0 {offsets = [0, 2, 0], sizes = [32, 1, 25], strides = [1, 1, 1]} : vector<32x6x25xf32> to vector<32x1x25xf32>
    %84 = vector.shape_cast %83 : vector<32x1x25xf32> to vector<32x25xf32>
    %85 = vector.extract_strided_slice %0 {offsets = [0, 3, 0], sizes = [32, 1, 25], strides = [1, 1, 1]} : vector<32x6x25xf32> to vector<32x1x25xf32>
    %86 = vector.shape_cast %85 : vector<32x1x25xf32> to vector<32x25xf32>
    %87 = vector.extract_strided_slice %0 {offsets = [0, 4, 0], sizes = [32, 1, 25], strides = [1, 1, 1]} : vector<32x6x25xf32> to vector<32x1x25xf32>
    %88 = vector.shape_cast %87 : vector<32x1x25xf32> to vector<32x25xf32>
    %89 = tpu.concatenate %82, %84, %86, %88 in 1 : vector<32x25xf32>, vector<32x25xf32>, vector<32x25xf32>, vector<32x25xf32> -> vector<32x100xf32>
    %90 = vector.extract_strided_slice %0 {offsets = [0, 2, 0], sizes = [32, 1, 25], strides = [1, 1, 1]} : vector<32x6x25xf32> to vector<32x1x25xf32>
    %91 = vector.shape_cast %90 : vector<32x1x25xf32> to vector<32x25xf32>
    %92 = vector.extract_strided_slice %0 {offsets = [0, 3, 0], sizes = [32, 1, 25], strides = [1, 1, 1]} : vector<32x6x25xf32> to vector<32x1x25xf32>
    %93 = vector.shape_cast %92 : vector<32x1x25xf32> to vector<32x25xf32>
    %94 = vector.extract_strided_slice %0 {offsets = [0, 4, 0], sizes = [32, 1, 25], strides = [1, 1, 1]} : vector<32x6x25xf32> to vector<32x1x25xf32>
    %95 = vector.shape_cast %94 : vector<32x1x25xf32> to vector<32x25xf32>
    %96 = vector.extract_strided_slice %0 {offsets = [0, 5, 0], sizes = [32, 1, 25], strides = [1, 1, 1]} : vector<32x6x25xf32> to vector<32x1x25xf32>
    %97 = vector.shape_cast %96 : vector<32x1x25xf32> to vector<32x25xf32>
    %98 = tpu.concatenate %91, %93, %95, %97 in 1 : vector<32x25xf32>, vector<32x25xf32>, vector<32x25xf32>, vector<32x25xf32> -> vector<32x100xf32>
    %99 = tpu.concatenate %80, %89, %98 in 0 : vector<32x100xf32>, vector<32x100xf32>, vector<32x100xf32> -> vector<96x100xf32>
    %c0_13 = arith.constant 0 : index
    %c0_14 = arith.constant 0 : index
    %100 = vector.load %arg6[%c0_13, %c0_14] : memref<100x64xf32, #tpu.memory_space<vmem>>, vector<100x64xf32>
    %cst_15 = arith.constant dense<0.000000e+00> : vector<96x64xf32>
    %101 = tpu.matmul %99, %100, %cst_15 {dimension_numbers = #tpu.dot_dimension_numbers<[1], [0], [0], [1], [0, 0, 1, 1], [], []>} : vector<96x100xf32>, vector<100x64xf32>, vector<96x64xf32> -> vector<96x64xf32>
    %c0_16 = arith.constant 0 : index
    %c0_17 = arith.constant 0 : index
    %102 = vector.load %arg7[%c0_16, %c0_17] : memref<1x64xf32, #tpu.memory_space<vmem>>, vector<1x64xf32>
    %103 = vector.broadcast %102 : vector<1x64xf32> to vector<96x64xf32>
    %104 = arith.addf %101, %103 : vector<96x64xf32>
    %105 = math.tanh %104 : vector<96x64xf32>
    %106 = vector.shape_cast %105 : vector<96x64xf32> to vector<3x32x64xf32>
    %cst_18 = arith.constant dense<0xFF800000> : vector<32x64xf32>
    %107 = vector.multi_reduction <maximumf>, %106, %cst_18 [0] : vector<3x32x64xf32> to vector<32x64xf32>
    %108 = tpu.concatenate %34, %71, %107 in 1 : vector<32x64xf32>, vector<32x64xf32>, vector<32x64xf32> -> vector<32x192xf32>
    %c0_19 = arith.constant 0 : index
    %c0_20 = arith.constant 0 : index
    %109 = vector.load %arg8[%c0_19, %c0_20] : memref<192x8xf32, #tpu.memory_space<vmem>>, vector<192x8xf32>
    %cst_21 = arith.constant dense<0.000000e+00> : vector<32x8xf32>
    %110 = tpu.matmul %108, %109, %cst_21 {dimension_numbers = #tpu.dot_dimension_numbers<[1], [0], [0], [1], [0, 0, 1, 1], [], []>} : vector<32x192xf32>, vector<192x8xf32>, vector<32x8xf32> -> vector<32x8xf32>
    %c0_22 = arith.constant 0 : index
    %c0_23 = arith.constant 0 : index
    %111 = vector.load %arg9[%c0_22, %c0_23] : memref<1x8xf32, #tpu.memory_space<vmem>>, vector<1x8xf32>
    %112 = vector.broadcast %111 : vector<1x8xf32> to vector<32x8xf32>
    %113 = arith.addf %110, %112 : vector<32x8xf32>
    %c0_24 = arith.constant 0 : index
    %c0_25 = arith.constant 0 : index
    %114 = vector.load %arg10[%c0_24, %c0_25] : memref<32x8xf32, #tpu.memory_space<vmem>>, vector<32x8xf32>
    tpu.vector_store %arg10[%c0_24, %c0_25], %113 {strides = array<i32>} : memref<32x8xf32, #tpu.memory_space<vmem>>, vector<32x8xf32>,
    return
  }
  func.func @transform_0(%arg0: i32) -> (i32, i32, i32) {
    %c0_i32 = arith.constant 0 : i32
    %c0_i32_0 = arith.constant 0 : i32
    %c0_i32_1 = arith.constant 0 : i32
    return %arg0, %c0_i32, %c0_i32_0 : i32, i32, i32
  }
  func.func @transform_1(%arg0: i32) -> (i32, i32) {
    %c0_i32 = arith.constant 0 : i32
    %c0_i32_0 = arith.constant 0 : i32
    %c0_i32_1 = arith.constant 0 : i32
    return %c0_i32, %c0_i32_0 : i32, i32
  }
  func.func @transform_2(%arg0: i32) -> (i32, i32) {
    %c0_i32 = arith.constant 0 : i32
    %c0_i32_0 = arith.constant 0 : i32
    %c0_i32_1 = arith.constant 0 : i32
    return %c0_i32, %c0_i32_0 : i32, i32
  }
  func.func @transform_3(%arg0: i32) -> (i32, i32) {
    %c0_i32 = arith.constant 0 : i32
    %c0_i32_0 = arith.constant 0 : i32
    %c0_i32_1 = arith.constant 0 : i32
    return %c0_i32, %c0_i32_0 : i32, i32
  }
  func.func @transform_4(%arg0: i32) -> (i32, i32) {
    %c0_i32 = arith.constant 0 : i32
    %c0_i32_0 = arith.constant 0 : i32
    %c0_i32_1 = arith.constant 0 : i32
    return %c0_i32, %c0_i32_0 : i32, i32
  }
  func.func @transform_5(%arg0: i32) -> (i32, i32) {
    %c0_i32 = arith.constant 0 : i32
    %c0_i32_0 = arith.constant 0 : i32
    %c0_i32_1 = arith.constant 0 : i32
    return %c0_i32, %c0_i32_0 : i32, i32
  }
  func.func @transform_6(%arg0: i32) -> (i32, i32) {
    %c0_i32 = arith.constant 0 : i32
    %c0_i32_0 = arith.constant 0 : i32
    %c0_i32_1 = arith.constant 0 : i32
    return %c0_i32, %c0_i32_0 : i32, i32
  }
  func.func @transform_7(%arg0: i32) -> (i32, i32) {
    %c0_i32 = arith.constant 0 : i32
    %c0_i32_0 = arith.constant 0 : i32
    %c0_i32_1 = arith.constant 0 : i32
    return %c0_i32, %c0_i32_0 : i32, i32
  }
  func.func @transform_8(%arg0: i32) -> (i32, i32) {
    %c0_i32 = arith.constant 0 : i32
    %c0_i32_0 = arith.constant 0 : i32
    %c0_i32_1 = arith.constant 0 : i32
    return %c0_i32, %c0_i32_0 : i32, i32
  }
  func.func @transform_9(%arg0: i32) -> (i32, i32) {
    %c0_i32 = arith.constant 0 : i32
    %c0_i32_0 = arith.constant 0 : i32
    return %arg0, %c0_i32 : i32, i32
  }
}

module attributes {stable_mosaic.version = 11 : i64} {
  func.func @_alpha_kernel(%arg0: i32, %arg1: memref<16x16xf32, #tpu.memory_space<vmem>>, %arg2: memref<16x16xf32, #tpu.memory_space<vmem>>, %arg3: memref<16x32xf32, #tpu.memory_space<vmem>>, %arg4: memref<16x16xf32, #tpu.memory_space<vmem>>, %arg5: memref<32x16xf32, #tpu.memory_space<vmem>>, %arg6: memref<16x16xf32, #tpu.memory_space<vmem>>, %arg7: memref<1x16xf32, #tpu.memory_space<vmem>>, %arg8: memref<1x16xf32, #tpu.memory_space<vmem>>, %arg9: memref<16x1xf32, #tpu.memory_space<vmem>>) attributes {dimension_semantics = [#tpu.dimension_semantics<parallel>], iteration_bounds = array<i64: 1>, scalar_prefetch = 0 : i64, scratch_operands = 0 : i64, tpu.core_type = #tpu.core_type<tc>, window_params = [{transform_indices = @transform_0, window_bounds = array<i64: 16, 16>}, {transform_indices = @transform_1, window_bounds = array<i64: 16, 16>}, {transform_indices = @transform_2, window_bounds = array<i64: 16, 32>}, {transform_indices = @transform_3, window_bounds = array<i64: 16, 16>}, {pipeline_mode = #tpu.pipeline_mode<synchronous>, transform_indices = @transform_4, window_bounds = array<i64: 32, 16>}, {pipeline_mode = #tpu.pipeline_mode<synchronous>, transform_indices = @transform_5, window_bounds = array<i64: 16, 16>}, {pipeline_mode = #tpu.pipeline_mode<synchronous>, transform_indices = @transform_6, window_bounds = array<i64: 1, 16>}, {pipeline_mode = #tpu.pipeline_mode<synchronous>, transform_indices = @transform_7, window_bounds = array<i64: 1, 16>}, {transform_indices = @transform_8, window_bounds = array<i64: 16, 1>}]} {
    %c0 = arith.constant 0 : index
    %c0_0 = arith.constant 0 : index
    %0 = vector.load %arg3[%c0, %c0_0] : memref<16x32xf32, #tpu.memory_space<vmem>>, vector<16x32xf32>
    %c0_1 = arith.constant 0 : index
    %c0_2 = arith.constant 0 : index
    %1 = vector.load %arg5[%c0_1, %c0_2] : memref<32x16xf32, #tpu.memory_space<vmem>>, vector<32x16xf32>
    %cst = arith.constant dense<0.000000e+00> : vector<16x16xf32>
    %2 = tpu.matmul %0, %1, %cst {dimension_numbers = #tpu.dot_dimension_numbers<[1], [0], [0], [1], [0, 0, 1, 1], [], []>} : vector<16x32xf32>, vector<32x16xf32>, vector<16x16xf32> -> vector<16x16xf32>
    %c0_3 = arith.constant 0 : index
    %c0_4 = arith.constant 0 : index
    %3 = vector.load %arg4[%c0_3, %c0_4] : memref<16x16xf32, #tpu.memory_space<vmem>>, vector<16x16xf32>
    %c0_5 = arith.constant 0 : index
    %c0_6 = arith.constant 0 : index
    %4 = vector.load %arg6[%c0_5, %c0_6] : memref<16x16xf32, #tpu.memory_space<vmem>>, vector<16x16xf32>
    %cst_7 = arith.constant dense<0.000000e+00> : vector<16x16xf32>
    %5 = tpu.matmul %3, %4, %cst_7 {dimension_numbers = #tpu.dot_dimension_numbers<[1], [0], [0], [1], [0, 0, 1, 1], [], []>} : vector<16x16xf32>, vector<16x16xf32>, vector<16x16xf32> -> vector<16x16xf32>
    %6 = arith.addf %2, %5 : vector<16x16xf32>
    %c0_8 = arith.constant 0 : index
    %c0_9 = arith.constant 0 : index
    %7 = vector.load %arg7[%c0_8, %c0_9] : memref<1x16xf32, #tpu.memory_space<vmem>>, vector<1x16xf32>
    %8 = vector.broadcast %7 : vector<1x16xf32> to vector<16x16xf32>
    %9 = arith.addf %6, %8 : vector<16x16xf32>
    %c0_10 = arith.constant 0 : index
    %c0_11 = arith.constant 0 : index
    %10 = vector.load %arg1[%c0_10, %c0_11] : memref<16x16xf32, #tpu.memory_space<vmem>>, vector<16x16xf32>
    %c0_12 = arith.constant 0 : index
    %c0_13 = arith.constant 0 : index
    %11 = vector.load %arg2[%c0_12, %c0_13] : memref<16x16xf32, #tpu.memory_space<vmem>>, vector<16x16xf32>
    %12 = arith.addf %10, %11 : vector<16x16xf32>
    %13 = arith.addf %12, %9 : vector<16x16xf32>
    %cst_14 = arith.constant 0.000000e+00 : f32
    %14 = vector.broadcast %cst_14 : f32 to vector<16x16xf32>
    %15 = arith.cmpf oge, %13, %14 : vector<16x16xf32>
    %cst_15 = arith.constant 2.000000e-01 : f32
    %16 = vector.broadcast %cst_15 : f32 to vector<16x16xf32>
    %17 = arith.mulf %16, %13 : vector<16x16xf32>
    %18 = arith.select %15, %13, %17 : vector<16x16xi1>, vector<16x16xf32>
    %c0_16 = arith.constant 0 : index
    %c0_17 = arith.constant 0 : index
    %19 = vector.load %arg8[%c0_16, %c0_17] : memref<1x16xf32, #tpu.memory_space<vmem>>, vector<1x16xf32>
    %20 = vector.broadcast %19 : vector<1x16xf32> to vector<16x16xf32>
    %21 = arith.mulf %18, %20 : vector<16x16xf32>
    %cst_18 = arith.constant dense<0.000000e+00> : vector<16xf32>
    %22 = vector.multi_reduction <add>, %21, %cst_18 [1] : vector<16x16xf32> to vector<16xf32>
    %23 = vector.shape_cast %22 : vector<16xf32> to vector<16x1xf32>
    %c0_19 = arith.constant 0 : index
    %c0_20 = arith.constant 0 : index
    %24 = vector.load %arg9[%c0_19, %c0_20] : memref<16x1xf32, #tpu.memory_space<vmem>>, vector<16x1xf32>
    tpu.vector_store %arg9[%c0_19, %c0_20], %23 {strides = array<i32>} : memref<16x1xf32, #tpu.memory_space<vmem>>, vector<16x1xf32>,
    return
  }
  func.func @transform_0(%arg0: i32) -> (i32, i32) {
    %c0_i32 = arith.constant 0 : i32
    %c0_i32_0 = arith.constant 0 : i32
    return %arg0, %c0_i32 : i32, i32
  }
  func.func @transform_1(%arg0: i32) -> (i32, i32) {
    %c0_i32 = arith.constant 0 : i32
    %c0_i32_0 = arith.constant 0 : i32
    return %arg0, %c0_i32 : i32, i32
  }
  func.func @transform_2(%arg0: i32) -> (i32, i32) {
    %c0_i32 = arith.constant 0 : i32
    %c0_i32_0 = arith.constant 0 : i32
    return %arg0, %c0_i32 : i32, i32
  }
  func.func @transform_3(%arg0: i32) -> (i32, i32) {
    %c0_i32 = arith.constant 0 : i32
    %c0_i32_0 = arith.constant 0 : i32
    return %arg0, %c0_i32 : i32, i32
  }
  func.func @transform_4(%arg0: i32) -> (i32, i32) {
    %c0_i32 = arith.constant 0 : i32
    %c0_i32_0 = arith.constant 0 : i32
    %c0_i32_1 = arith.constant 0 : i32
    return %c0_i32, %c0_i32_0 : i32, i32
  }
  func.func @transform_5(%arg0: i32) -> (i32, i32) {
    %c0_i32 = arith.constant 0 : i32
    %c0_i32_0 = arith.constant 0 : i32
    %c0_i32_1 = arith.constant 0 : i32
    return %c0_i32, %c0_i32_0 : i32, i32
  }
  func.func @transform_6(%arg0: i32) -> (i32, i32) {
    %c0_i32 = arith.constant 0 : i32
    %c0_i32_0 = arith.constant 0 : i32
    %c0_i32_1 = arith.constant 0 : i32
    return %c0_i32, %c0_i32_0 : i32, i32
  }
  func.func @transform_7(%arg0: i32) -> (i32, i32) {
    %c0_i32 = arith.constant 0 : i32
    %c0_i32_0 = arith.constant 0 : i32
    %c0_i32_1 = arith.constant 0 : i32
    return %c0_i32, %c0_i32_0 : i32, i32
  }
  func.func @transform_8(%arg0: i32) -> (i32, i32) {
    %c0_i32 = arith.constant 0 : i32
    %c0_i32_0 = arith.constant 0 : i32
    return %arg0, %c0_i32 : i32, i32
  }
}

module attributes {stable_mosaic.version = 11 : i64} {
  func.func @_edge_mlp_kernel(%arg0: i32, %arg1: memref<16x16xf32, #tpu.memory_space<vmem>>, %arg2: memref<16x16xf32, #tpu.memory_space<vmem>>, %arg3: memref<16x32xf32, #tpu.memory_space<vmem>>, %arg4: memref<16x16xf32, #tpu.memory_space<vmem>>, %arg5: memref<16x32xf32, #tpu.memory_space<vmem>>, %arg6: memref<16x32xf32, #tpu.memory_space<vmem>>, %arg7: memref<32x32xf32, #tpu.memory_space<vmem>>, %arg8: memref<16x32xf32, #tpu.memory_space<vmem>>, %arg9: memref<1x32xf32, #tpu.memory_space<vmem>>, %arg10: memref<32x32xf32, #tpu.memory_space<vmem>>, %arg11: memref<1x32xf32, #tpu.memory_space<vmem>>, %arg12: memref<16x32xf32, #tpu.memory_space<vmem>>) attributes {dimension_semantics = [#tpu.dimension_semantics<parallel>], iteration_bounds = array<i64: 1>, scalar_prefetch = 0 : i64, scratch_operands = 0 : i64, tpu.core_type = #tpu.core_type<tc>, window_params = [{transform_indices = @transform_0, window_bounds = array<i64: 16, 16>}, {transform_indices = @transform_1, window_bounds = array<i64: 16, 16>}, {transform_indices = @transform_2, window_bounds = array<i64: 16, 32>}, {transform_indices = @transform_3, window_bounds = array<i64: 16, 16>}, {pipeline_mode = #tpu.pipeline_mode<synchronous>, transform_indices = @transform_4, window_bounds = array<i64: 16, 32>}, {pipeline_mode = #tpu.pipeline_mode<synchronous>, transform_indices = @transform_5, window_bounds = array<i64: 16, 32>}, {pipeline_mode = #tpu.pipeline_mode<synchronous>, transform_indices = @transform_6, window_bounds = array<i64: 32, 32>}, {pipeline_mode = #tpu.pipeline_mode<synchronous>, transform_indices = @transform_7, window_bounds = array<i64: 16, 32>}, {pipeline_mode = #tpu.pipeline_mode<synchronous>, transform_indices = @transform_8, window_bounds = array<i64: 1, 32>}, {pipeline_mode = #tpu.pipeline_mode<synchronous>, transform_indices = @transform_9, window_bounds = array<i64: 32, 32>}, {pipeline_mode = #tpu.pipeline_mode<synchronous>, transform_indices = @transform_10, window_bounds = array<i64: 1, 32>}, {transform_indices = @transform_11, window_bounds = array<i64: 16, 32>}]} {
    %c0 = arith.constant 0 : index
    %c0_0 = arith.constant 0 : index
    %0 = vector.load %arg1[%c0, %c0_0] : memref<16x16xf32, #tpu.memory_space<vmem>>, vector<16x16xf32>
    %c0_1 = arith.constant 0 : index
    %c0_2 = arith.constant 0 : index
    %1 = vector.load %arg5[%c0_1, %c0_2] : memref<16x32xf32, #tpu.memory_space<vmem>>, vector<16x32xf32>
    %cst = arith.constant dense<0.000000e+00> : vector<16x32xf32>
    %2 = tpu.matmul %0, %1, %cst {dimension_numbers = #tpu.dot_dimension_numbers<[1], [0], [0], [1], [0, 0, 1, 1], [], []>} : vector<16x16xf32>, vector<16x32xf32>, vector<16x32xf32> -> vector<16x32xf32>
    %c0_3 = arith.constant 0 : index
    %c0_4 = arith.constant 0 : index
    %3 = vector.load %arg2[%c0_3, %c0_4] : memref<16x16xf32, #tpu.memory_space<vmem>>, vector<16x16xf32>
    %c0_5 = arith.constant 0 : index
    %c0_6 = arith.constant 0 : index
    %4 = vector.load %arg6[%c0_5, %c0_6] : memref<16x32xf32, #tpu.memory_space<vmem>>, vector<16x32xf32>
    %cst_7 = arith.constant dense<0.000000e+00> : vector<16x32xf32>
    %5 = tpu.matmul %3, %4, %cst_7 {dimension_numbers = #tpu.dot_dimension_numbers<[1], [0], [0], [1], [0, 0, 1, 1], [], []>} : vector<16x16xf32>, vector<16x32xf32>, vector<16x32xf32> -> vector<16x32xf32>
    %6 = arith.addf %2, %5 : vector<16x32xf32>
    %c0_8 = arith.constant 0 : index
    %c0_9 = arith.constant 0 : index
    %7 = vector.load %arg3[%c0_8, %c0_9] : memref<16x32xf32, #tpu.memory_space<vmem>>, vector<16x32xf32>
    %c0_10 = arith.constant 0 : index
    %c0_11 = arith.constant 0 : index
    %8 = vector.load %arg7[%c0_10, %c0_11] : memref<32x32xf32, #tpu.memory_space<vmem>>, vector<32x32xf32>
    %cst_12 = arith.constant dense<0.000000e+00> : vector<16x32xf32>
    %9 = tpu.matmul %7, %8, %cst_12 {dimension_numbers = #tpu.dot_dimension_numbers<[1], [0], [0], [1], [0, 0, 1, 1], [], []>} : vector<16x32xf32>, vector<32x32xf32>, vector<16x32xf32> -> vector<16x32xf32>
    %10 = arith.addf %6, %9 : vector<16x32xf32>
    %c0_13 = arith.constant 0 : index
    %c0_14 = arith.constant 0 : index
    %11 = vector.load %arg4[%c0_13, %c0_14] : memref<16x16xf32, #tpu.memory_space<vmem>>, vector<16x16xf32>
    %c0_15 = arith.constant 0 : index
    %c0_16 = arith.constant 0 : index
    %12 = vector.load %arg8[%c0_15, %c0_16] : memref<16x32xf32, #tpu.memory_space<vmem>>, vector<16x32xf32>
    %cst_17 = arith.constant dense<0.000000e+00> : vector<16x32xf32>
    %13 = tpu.matmul %11, %12, %cst_17 {dimension_numbers = #tpu.dot_dimension_numbers<[1], [0], [0], [1], [0, 0, 1, 1], [], []>} : vector<16x16xf32>, vector<16x32xf32>, vector<16x32xf32> -> vector<16x32xf32>
    %14 = arith.addf %10, %13 : vector<16x32xf32>
    %c0_18 = arith.constant 0 : index
    %c0_19 = arith.constant 0 : index
    %15 = vector.load %arg9[%c0_18, %c0_19] : memref<1x32xf32, #tpu.memory_space<vmem>>, vector<1x32xf32>
    %16 = vector.broadcast %15 : vector<1x32xf32> to vector<16x32xf32>
    %17 = arith.addf %14, %16 : vector<16x32xf32>
    %cst_20 = arith.constant 3.000000e+00 : f32
    %18 = vector.broadcast %cst_20 : f32 to vector<16x32xf32>
    %19 = arith.addf %17, %18 : vector<16x32xf32>
    %cst_21 = arith.constant 0.000000e+00 : f32
    %cst_22 = arith.constant 6.000000e+00 : f32
    %20 = vector.broadcast %cst_21 : f32 to vector<16x32xf32>
    %21 = arith.maximumf %20, %19 : vector<16x32xf32>
    %22 = vector.broadcast %cst_22 : f32 to vector<16x32xf32>
    %23 = arith.minimumf %22, %21 : vector<16x32xf32>
    %24 = arith.mulf %17, %23 : vector<16x32xf32>
    %cst_23 = arith.constant 0.166666672 : f32
    %25 = vector.broadcast %cst_23 : f32 to vector<16x32xf32>
    %26 = arith.mulf %24, %25 : vector<16x32xf32>
    %c0_24 = arith.constant 0 : index
    %c0_25 = arith.constant 0 : index
    %27 = vector.load %arg10[%c0_24, %c0_25] : memref<32x32xf32, #tpu.memory_space<vmem>>, vector<32x32xf32>
    %cst_26 = arith.constant dense<0.000000e+00> : vector<16x32xf32>
    %28 = tpu.matmul %26, %27, %cst_26 {dimension_numbers = #tpu.dot_dimension_numbers<[1], [0], [0], [1], [0, 0, 1, 1], [], []>} : vector<16x32xf32>, vector<32x32xf32>, vector<16x32xf32> -> vector<16x32xf32>
    %c0_27 = arith.constant 0 : index
    %c0_28 = arith.constant 0 : index
    %29 = vector.load %arg11[%c0_27, %c0_28] : memref<1x32xf32, #tpu.memory_space<vmem>>, vector<1x32xf32>
    %30 = vector.broadcast %29 : vector<1x32xf32> to vector<16x32xf32>
    %31 = arith.addf %28, %30 : vector<16x32xf32>
    %c0_29 = arith.constant 0 : index
    %c0_30 = arith.constant 0 : index
    %32 = vector.load %arg12[%c0_29, %c0_30] : memref<16x32xf32, #tpu.memory_space<vmem>>, vector<16x32xf32>
    tpu.vector_store %arg12[%c0_29, %c0_30], %31 {strides = array<i32>} : memref<16x32xf32, #tpu.memory_space<vmem>>, vector<16x32xf32>,
    return
  }
  func.func @transform_0(%arg0: i32) -> (i32, i32) {
    %c0_i32 = arith.constant 0 : i32
    %c0_i32_0 = arith.constant 0 : i32
    return %arg0, %c0_i32 : i32, i32
  }
  func.func @transform_1(%arg0: i32) -> (i32, i32) {
    %c0_i32 = arith.constant 0 : i32
    %c0_i32_0 = arith.constant 0 : i32
    return %arg0, %c0_i32 : i32, i32
  }
  func.func @transform_2(%arg0: i32) -> (i32, i32) {
    %c0_i32 = arith.constant 0 : i32
    %c0_i32_0 = arith.constant 0 : i32
    return %arg0, %c0_i32 : i32, i32
  }
  func.func @transform_3(%arg0: i32) -> (i32, i32) {
    %c0_i32 = arith.constant 0 : i32
    %c0_i32_0 = arith.constant 0 : i32
    return %arg0, %c0_i32 : i32, i32
  }
  func.func @transform_4(%arg0: i32) -> (i32, i32) {
    %c0_i32 = arith.constant 0 : i32
    %c0_i32_0 = arith.constant 0 : i32
    %c0_i32_1 = arith.constant 0 : i32
    return %c0_i32, %c0_i32_0 : i32, i32
  }
  func.func @transform_5(%arg0: i32) -> (i32, i32) {
    %c0_i32 = arith.constant 0 : i32
    %c0_i32_0 = arith.constant 0 : i32
    %c0_i32_1 = arith.constant 0 : i32
    return %c0_i32, %c0_i32_0 : i32, i32
  }
  func.func @transform_6(%arg0: i32) -> (i32, i32) {
    %c0_i32 = arith.constant 0 : i32
    %c0_i32_0 = arith.constant 0 : i32
    %c0_i32_1 = arith.constant 0 : i32
    return %c0_i32, %c0_i32_0 : i32, i32
  }
  func.func @transform_7(%arg0: i32) -> (i32, i32) {
    %c0_i32 = arith.constant 0 : i32
    %c0_i32_0 = arith.constant 0 : i32
    %c0_i32_1 = arith.constant 0 : i32
    return %c0_i32, %c0_i32_0 : i32, i32
  }
  func.func @transform_8(%arg0: i32) -> (i32, i32) {
    %c0_i32 = arith.constant 0 : i32
    %c0_i32_0 = arith.constant 0 : i32
    %c0_i32_1 = arith.constant 0 : i32
    return %c0_i32, %c0_i32_0 : i32, i32
  }
  func.func @transform_9(%arg0: i32) -> (i32, i32) {
    %c0_i32 = arith.constant 0 : i32
    %c0_i32_0 = arith.constant 0 : i32
    %c0_i32_1 = arith.constant 0 : i32
    return %c0_i32, %c0_i32_0 : i32, i32
  }
  func.func @transform_10(%arg0: i32) -> (i32, i32) {
    %c0_i32 = arith.constant 0 : i32
    %c0_i32_0 = arith.constant 0 : i32
    %c0_i32_1 = arith.constant 0 : i32
    return %c0_i32, %c0_i32_0 : i32, i32
  }
  func.func @transform_11(%arg0: i32) -> (i32, i32) {
    %c0_i32 = arith.constant 0 : i32
    %c0_i32_0 = arith.constant 0 : i32
    return %arg0, %c0_i32 : i32, i32
  }
}

module attributes {stable_mosaic.version = 11 : i64} {
  func.func @_edge_mlp_kernel(%arg0: i32, %arg1: memref<16x16xf32, #tpu.memory_space<vmem>>, %arg2: memref<16x16xf32, #tpu.memory_space<vmem>>, %arg3: memref<16x32xf32, #tpu.memory_space<vmem>>, %arg4: memref<16x16xf32, #tpu.memory_space<vmem>>, %arg5: memref<16x1xf32, #tpu.memory_space<vmem>>, %arg6: memref<16x256xf32, #tpu.memory_space<vmem>>, %arg7: memref<16x256xf32, #tpu.memory_space<vmem>>, %arg8: memref<32x256xf32, #tpu.memory_space<vmem>>, %arg9: memref<16x256xf32, #tpu.memory_space<vmem>>, %arg10: memref<1x256xf32, #tpu.memory_space<vmem>>, %arg11: memref<256x1xf32, #tpu.memory_space<vmem>>, %arg12: memref<1x1xf32, #tpu.memory_space<vmem>>, %arg13: memref<16x1xf32, #tpu.memory_space<vmem>>) attributes {dimension_semantics = [#tpu.dimension_semantics<parallel>], iteration_bounds = array<i64: 1>, scalar_prefetch = 0 : i64, scratch_operands = 0 : i64, tpu.core_type = #tpu.core_type<tc>, window_params = [{transform_indices = @transform_0, window_bounds = array<i64: 16, 16>}, {transform_indices = @transform_1, window_bounds = array<i64: 16, 16>}, {transform_indices = @transform_2, window_bounds = array<i64: 16, 32>}, {transform_indices = @transform_3, window_bounds = array<i64: 16, 16>}, {transform_indices = @transform_4, window_bounds = array<i64: 16, 1>}, {pipeline_mode = #tpu.pipeline_mode<synchronous>, transform_indices = @transform_5, window_bounds = array<i64: 16, 256>}, {pipeline_mode = #tpu.pipeline_mode<synchronous>, transform_indices = @transform_6, window_bounds = array<i64: 16, 256>}, {pipeline_mode = #tpu.pipeline_mode<synchronous>, transform_indices = @transform_7, window_bounds = array<i64: 32, 256>}, {pipeline_mode = #tpu.pipeline_mode<synchronous>, transform_indices = @transform_8, window_bounds = array<i64: 16, 256>}, {pipeline_mode = #tpu.pipeline_mode<synchronous>, transform_indices = @transform_9, window_bounds = array<i64: 1, 256>}, {pipeline_mode = #tpu.pipeline_mode<synchronous>, transform_indices = @transform_10, window_bounds = array<i64: 256, 1>}, {pipeline_mode = #tpu.pipeline_mode<synchronous>, transform_indices = @transform_11, window_bounds = array<i64: 1, 1>}, {transform_indices = @transform_12, window_bounds = array<i64: 16, 1>}]} {
    %c0 = arith.constant 0 : index
    %c0_0 = arith.constant 0 : index
    %0 = vector.load %arg1[%c0, %c0_0] : memref<16x16xf32, #tpu.memory_space<vmem>>, vector<16x16xf32>
    %c0_1 = arith.constant 0 : index
    %c0_2 = arith.constant 0 : index
    %1 = vector.load %arg6[%c0_1, %c0_2] : memref<16x256xf32, #tpu.memory_space<vmem>>, vector<16x256xf32>
    %cst = arith.constant dense<0.000000e+00> : vector<16x256xf32>
    %2 = tpu.matmul %0, %1, %cst {dimension_numbers = #tpu.dot_dimension_numbers<[1], [0], [0], [1], [0, 0, 1, 1], [], []>} : vector<16x16xf32>, vector<16x256xf32>, vector<16x256xf32> -> vector<16x256xf32>
    %c0_3 = arith.constant 0 : index
    %c0_4 = arith.constant 0 : index
    %3 = vector.load %arg2[%c0_3, %c0_4] : memref<16x16xf32, #tpu.memory_space<vmem>>, vector<16x16xf32>
    %c0_5 = arith.constant 0 : index
    %c0_6 = arith.constant 0 : index
    %4 = vector.load %arg7[%c0_5, %c0_6] : memref<16x256xf32, #tpu.memory_space<vmem>>, vector<16x256xf32>
    %cst_7 = arith.constant dense<0.000000e+00> : vector<16x256xf32>
    %5 = tpu.matmul %3, %4, %cst_7 {dimension_numbers = #tpu.dot_dimension_numbers<[1], [0], [0], [1], [0, 0, 1, 1], [], []>} : vector<16x16xf32>, vector<16x256xf32>, vector<16x256xf32> -> vector<16x256xf32>
    %6 = arith.addf %2, %5 : vector<16x256xf32>
    %c0_8 = arith.constant 0 : index
    %c0_9 = arith.constant 0 : index
    %7 = vector.load %arg3[%c0_8, %c0_9] : memref<16x32xf32, #tpu.memory_space<vmem>>, vector<16x32xf32>
    %c0_10 = arith.constant 0 : index
    %c0_11 = arith.constant 0 : index
    %8 = vector.load %arg8[%c0_10, %c0_11] : memref<32x256xf32, #tpu.memory_space<vmem>>, vector<32x256xf32>
    %cst_12 = arith.constant dense<0.000000e+00> : vector<16x256xf32>
    %9 = tpu.matmul %7, %8, %cst_12 {dimension_numbers = #tpu.dot_dimension_numbers<[1], [0], [0], [1], [0, 0, 1, 1], [], []>} : vector<16x32xf32>, vector<32x256xf32>, vector<16x256xf32> -> vector<16x256xf32>
    %10 = arith.addf %6, %9 : vector<16x256xf32>
    %c0_13 = arith.constant 0 : index
    %c0_14 = arith.constant 0 : index
    %11 = vector.load %arg4[%c0_13, %c0_14] : memref<16x16xf32, #tpu.memory_space<vmem>>, vector<16x16xf32>
    %c0_15 = arith.constant 0 : index
    %c0_16 = arith.constant 0 : index
    %12 = vector.load %arg9[%c0_15, %c0_16] : memref<16x256xf32, #tpu.memory_space<vmem>>, vector<16x256xf32>
    %cst_17 = arith.constant dense<0.000000e+00> : vector<16x256xf32>
    %13 = tpu.matmul %11, %12, %cst_17 {dimension_numbers = #tpu.dot_dimension_numbers<[1], [0], [0], [1], [0, 0, 1, 1], [], []>} : vector<16x16xf32>, vector<16x256xf32>, vector<16x256xf32> -> vector<16x256xf32>
    %14 = arith.addf %10, %13 : vector<16x256xf32>
    %c0_18 = arith.constant 0 : index
    %c0_19 = arith.constant 0 : index
    %15 = vector.load %arg10[%c0_18, %c0_19] : memref<1x256xf32, #tpu.memory_space<vmem>>, vector<1x256xf32>
    %16 = vector.broadcast %15 : vector<1x256xf32> to vector<16x256xf32>
    %17 = arith.addf %14, %16 : vector<16x256xf32>
    %cst_20 = arith.constant 3.000000e+00 : f32
    %18 = vector.broadcast %cst_20 : f32 to vector<16x256xf32>
    %19 = arith.addf %17, %18 : vector<16x256xf32>
    %cst_21 = arith.constant 0.000000e+00 : f32
    %cst_22 = arith.constant 6.000000e+00 : f32
    %20 = vector.broadcast %cst_21 : f32 to vector<16x256xf32>
    %21 = arith.maximumf %20, %19 : vector<16x256xf32>
    %22 = vector.broadcast %cst_22 : f32 to vector<16x256xf32>
    %23 = arith.minimumf %22, %21 : vector<16x256xf32>
    %24 = arith.mulf %17, %23 : vector<16x256xf32>
    %cst_23 = arith.constant 0.166666672 : f32
    %25 = vector.broadcast %cst_23 : f32 to vector<16x256xf32>
    %26 = arith.mulf %24, %25 : vector<16x256xf32>
    %c0_24 = arith.constant 0 : index
    %c0_25 = arith.constant 0 : index
    %27 = vector.load %arg11[%c0_24, %c0_25] : memref<256x1xf32, #tpu.memory_space<vmem>>, vector<256x1xf32>
    %cst_26 = arith.constant dense<0.000000e+00> : vector<16x1xf32>
    %28 = tpu.matmul %26, %27, %cst_26 {dimension_numbers = #tpu.dot_dimension_numbers<[1], [0], [0], [1], [0, 0, 1, 1], [], []>} : vector<16x256xf32>, vector<256x1xf32>, vector<16x1xf32> -> vector<16x1xf32>
    %c0_27 = arith.constant 0 : index
    %c0_28 = arith.constant 0 : index
    %29 = vector.load %arg12[%c0_27, %c0_28] : memref<1x1xf32, #tpu.memory_space<vmem>>, vector<1x1xf32>
    %30 = vector.broadcast %29 : vector<1x1xf32> to vector<16x1xf32>
    %31 = arith.addf %28, %30 : vector<16x1xf32>
    %c0_29 = arith.constant 0 : index
    %c0_30 = arith.constant 0 : index
    %32 = vector.load %arg5[%c0_29, %c0_30] : memref<16x1xf32, #tpu.memory_space<vmem>>, vector<16x1xf32>
    %33 = arith.mulf %31, %32 : vector<16x1xf32>
    %c0_31 = arith.constant 0 : index
    %c0_32 = arith.constant 0 : index
    %34 = vector.load %arg13[%c0_31, %c0_32] : memref<16x1xf32, #tpu.memory_space<vmem>>, vector<16x1xf32>
    tpu.vector_store %arg13[%c0_31, %c0_32], %33 {strides = array<i32>} : memref<16x1xf32, #tpu.memory_space<vmem>>, vector<16x1xf32>,
    return
  }
  func.func @transform_0(%arg0: i32) -> (i32, i32) {
    %c0_i32 = arith.constant 0 : i32
    %c0_i32_0 = arith.constant 0 : i32
    return %arg0, %c0_i32 : i32, i32
  }
  func.func @transform_1(%arg0: i32) -> (i32, i32) {
    %c0_i32 = arith.constant 0 : i32
    %c0_i32_0 = arith.constant 0 : i32
    return %arg0, %c0_i32 : i32, i32
  }
  func.func @transform_2(%arg0: i32) -> (i32, i32) {
    %c0_i32 = arith.constant 0 : i32
    %c0_i32_0 = arith.constant 0 : i32
    return %arg0, %c0_i32 : i32, i32
  }
  func.func @transform_3(%arg0: i32) -> (i32, i32) {
    %c0_i32 = arith.constant 0 : i32
    %c0_i32_0 = arith.constant 0 : i32
    return %arg0, %c0_i32 : i32, i32
  }
  func.func @transform_4(%arg0: i32) -> (i32, i32) {
    %c0_i32 = arith.constant 0 : i32
    %c0_i32_0 = arith.constant 0 : i32
    return %arg0, %c0_i32 : i32, i32
  }
  func.func @transform_5(%arg0: i32) -> (i32, i32) {
    %c0_i32 = arith.constant 0 : i32
    %c0_i32_0 = arith.constant 0 : i32
    %c0_i32_1 = arith.constant 0 : i32
    return %c0_i32, %c0_i32_0 : i32, i32
  }
  func.func @transform_6(%arg0: i32) -> (i32, i32) {
    %c0_i32 = arith.constant 0 : i32
    %c0_i32_0 = arith.constant 0 : i32
    %c0_i32_1 = arith.constant 0 : i32
    return %c0_i32, %c0_i32_0 : i32, i32
  }
  func.func @transform_7(%arg0: i32) -> (i32, i32) {
    %c0_i32 = arith.constant 0 : i32
    %c0_i32_0 = arith.constant 0 : i32
    %c0_i32_1 = arith.constant 0 : i32
    return %c0_i32, %c0_i32_0 : i32, i32
  }
  func.func @transform_8(%arg0: i32) -> (i32, i32) {
    %c0_i32 = arith.constant 0 : i32
    %c0_i32_0 = arith.constant 0 : i32
    %c0_i32_1 = arith.constant 0 : i32
    return %c0_i32, %c0_i32_0 : i32, i32
  }
  func.func @transform_9(%arg0: i32) -> (i32, i32) {
    %c0_i32 = arith.constant 0 : i32
    %c0_i32_0 = arith.constant 0 : i32
    %c0_i32_1 = arith.constant 0 : i32
    return %c0_i32, %c0_i32_0 : i32, i32
  }
  func.func @transform_10(%arg0: i32) -> (i32, i32) {
    %c0_i32 = arith.constant 0 : i32
    %c0_i32_0 = arith.constant 0 : i32
    %c0_i32_1 = arith.constant 0 : i32
    return %c0_i32, %c0_i32_0 : i32, i32
  }
  func.func @transform_11(%arg0: i32) -> (i32, i32) {
    %c0_i32 = arith.constant 0 : i32
    %c0_i32_0 = arith.constant 0 : i32
    %c0_i32_1 = arith.constant 0 : i32
    return %c0_i32, %c0_i32_0 : i32, i32
  }
  func.func @transform_12(%arg0: i32) -> (i32, i32) {
    %c0_i32 = arith.constant 0 : i32
    %c0_i32_0 = arith.constant 0 : i32
    return %arg0, %c0_i32 : i32, i32
  }
}

</mosaic_0001>

<llo_original>
// kernel: lcmp_forward.18
$region0: #{lcmp_forward.18}
  #allocation0 [shape = 'u32[]', space=smem, size = 0x4, offset = 0x4, fixed_abs, tag = 'smem constant byte address 0x4 - core index']
  #allocation1 [shape = 'u32[144,128]{1,0:T(1,128)}', space=vmem, size = 0x12000, scoped, tag = 'internal scratch']
  %s0 = inlined_call_operand.vmem [shape: f32[16,16], index: 0, kind: input, shape index: {}]
  %s1 = inlined_call_operand.vmem [shape: f32[16,32], index: 1, kind: input, shape index: {}]
  %s2 = inlined_call_operand.vmem [shape: f32[1,32], index: 2, kind: input, shape index: {}]
  %s3 = inlined_call_operand.vmem [shape: f32[16,32], index: 3, kind: output, shape index: {}]
  %s4 = sld [smem:[#allocation0]]
  $region22: #{lcmp_forward.18} parent=0
    _
  %s6 = ssub.s32 1, %s4
  %s7 = scalar_select 0, %s6, %s4
  // Predicated region
  $region2: #{lcmp_forward.18} parent=0 // pred_check
    _
  $region3: #{lcmp_forward.18} parent=0 // pred_check_branch
    %9 = sbr.rel (0) target = $region5
  $region4: #{lcmp_forward.18} parent=0 // pred_region
    _
  $region5: #{lcmp_forward.18} parent=0 // pred_fallthru
    _
  // Predicated region
  $region6: #{lcmp_forward.18} parent=0 // pred_check
    _
  $region7: #{lcmp_forward.18} parent=0 // pred_check_branch
    %11 = sbr.rel (0) target = $region9
  $region8: #{lcmp_forward.18} parent=0 // pred_region
    _
  $region9: #{lcmp_forward.18} parent=0 // pred_fallthru
    _
  // Predicated region
  $region10: #{lcmp_forward.18} parent=0 // pred_check
    _
  $region11: #{lcmp_forward.18} parent=0 // pred_check_branch
    %13 = sbr.rel (0) target = $region13
  $region12: #{lcmp_forward.18} parent=0 // pred_region
    _
  $region13: #{lcmp_forward.18} parent=0 // pred_fallthru
    _
  %v14 = vld [vmem:[%s0] sm:$0xff]
  %v15 = vld [vmem:[%s0 + $0x8] sm:$0xff]
  %v16 = vld [vmem:[%s1] sm:$0xff]
  %v17 = vld [vmem:[%s1 + $0x8] sm:$0xff]
  %v18 = vld [vmem:[%s2] sm:$0x1]
  %v20 = vlaneseq
  %v21 = vshrl.u32 %v20, 7
  %v22 = vsub.s32 0, %v21
  %v23 = vrot.slane %v18, %v22
  %vm25 = vcmask 130048
  %v27 = vsel %vm25, %v14, 0
  %v30 = vsel %vm25, %v15, 0
  %32 = vmatprep.subr.mxu0 0.0
  %33 = vmatpush1.msra.mxu0 %v16
  %34 = vmatprep.subr.mxu0 0.0
  %35 = vmatpush1.msra.mxu0 %v17
  %36 = vmatprep.subr.mxu0 0.0
  %37 = vmatpush1.msra.mxu0 0.0
  %38 = vmatprep.subr.mxu0 0.0
  %39 = vmatpush1.msra.mxu0 0.0
  %40 = vmatprep.subr.mxu0 0.0
  %41 = vmatpush1.msra.mxu0 0.0
  %42 = vmatprep.subr.mxu0 0.0
  %43 = vmatpush1.msra.mxu0 0.0
  %44 = vmatprep.subr.mxu0 0.0
  %45 = vmatpush1.msra.mxu0 0.0
  %46 = vmatprep.subr.mxu0 0.0
  %47 = vmatpush1.msra.mxu0 0.0
  %48 = vmatprep.subr.mxu0 0.0
  %49 = vmatpush1.msra.mxu0 0.0
  %50 = vmatprep.subr.mxu0 0.0
  %51 = vmatpush1.msra.mxu0 0.0
  %52 = vmatprep.subr.mxu0 0.0
  %53 = vmatpush1.msra.mxu0 0.0
  %54 = vmatprep.subr.mxu0 0.0
  %55 = vmatpush1.msra.mxu0 0.0
  %56 = vmatprep.subr.mxu0 0.0
  %57 = vmatpush1.msra.mxu0 0.0
  %58 = vmatprep.subr.mxu0 0.0
  %59 = vmatpush1.msra.mxu0 0.0
  %60 = vmatprep.subr.mxu0 0.0
  %61 = vmatpush1.msra.mxu0 0.0
  %62 = vmatprep.subr.mxu0 0.0
  %63 = vmatpush1.msra.mxu0 0.0
  %64 = vmatprep.subr.mxu0 0.0
  %65 = vmatpush1.msra.mxu0 0.0
  %66 = vmatprep.subr.mxu0 0.0
  %67 = vmatpush1.msra.mxu0 0.0
  %68 = vmatprep.subr.mxu0 0.0
  %69 = vmatpush1.msra.mxu0 0.0
  %70 = vmatprep.subr.mxu0 0.0
  %71 = vmatpush1.msra.mxu0 0.0
  %72 = vmatprep.subr.mxu0 0.0
  %73 = vmatpush1.msra.mxu0 0.0
  %74 = vmatprep.subr.mxu0 0.0
  %75 = vmatpush1.msra.mxu0 0.0
  %76 = vmatprep.subr.mxu0 0.0
  %77 = vmatpush1.msra.mxu0 0.0
  %78 = vmatprep.subr.mxu0 0.0
  %79 = vmatpush1.msra.mxu0 0.0
  %80 = vmatprep.subr.mxu0 0.0
  %81 = vmatpush1.msra.mxu0 0.0
  %82 = vmatprep.subr.mxu0 0.0
  %83 = vmatpush1.msra.mxu0 0.0
  %84 = vmatprep.subr.mxu0 0.0
  %85 = vmatpush1.msra.mxu0 0.0
  %86 = vmatprep.subr.mxu0 0.0
  %87 = vmatpush1.msra.mxu0 0.0
  %88 = vmatprep.subr.mxu0 0.0
  %89 = vmatpush1.msra.mxu0 0.0
  %90 = vmatprep.subr.mxu0 0.0
  %91 = vmatpush1.msra.mxu0 0.0
  %92 = vmatprep.subr.mxu0 0.0
  %93 = vmatpush1.msra.mxu0 0.0
  %94 = vmatprep.subr.mxu0 0.0
  %95 = vmatpush1.msra.mxu0 0.0
  %96 = vmatprep.mubr.f32.mxu0 0.0
  %97 = vmatmul.mubr.f32.gmra.mrb[0].mxu0 %v27
  %v98 = vpop.f32.mrb[0].mxu0
  %v99 = vadd.f32 %v23, %v98
  %v100 = vpop.f32.mrb[0].mxu0
  %101 = vmatprep.mubr.f32.mxu0 0.0
  %102 = vmatmul.mubr.f32.gmra.mrb[0].mxu0 %v30
  %v103 = vpop.f32.mrb[0].mxu0
  %v104 = vadd.f32 %v23, %v103
  %v105 = vpop.f32.mrb[0].mxu0
  %106 = vdwg.mxu0
  %vm107 = vcmask 261120
  %108 = vst.msk [vmem:[%s3] sm:$0xff] %vm107, %v99
  %109 = vst.msk [vmem:[%s3 + $0x8] sm:$0xff] %vm107, %v104
  // Predicated region
  $region14: #{lcmp_forward.18} parent=0 // pred_check
    _
  $region15: #{lcmp_forward.18} parent=0 // pred_check_branch
    %111 = sbr.rel (0) target = $region17
  $region16: #{lcmp_forward.18} parent=0 // pred_region
    _
  $region17: #{lcmp_forward.18} parent=0 // pred_fallthru
    _
  // Predicated region
  $region18: #{lcmp_forward.18} parent=0 // pred_check
    _
  $region19: #{lcmp_forward.18} parent=0 // pred_check_branch
    %113 = sbr.rel (0) target = $region21
  $region20: #{lcmp_forward.18} parent=0 // pred_region
    _
  $region21: #{lcmp_forward.18} parent=0 // pred_fallthru
    _

// kernel: lcmp_forward.19
$region0: #{lcmp_forward.19}
  #allocation0 [shape = 'u32[]', space=smem, size = 0x4, offset = 0x4, fixed_abs, tag = 'smem constant byte address 0x4 - core index']
  #allocation1 [shape = 'u32[144,128]{1,0:T(1,128)}', space=vmem, size = 0x12000, scoped, tag = 'internal scratch']
  %s0 = inlined_call_operand.vmem [shape: f32[16,16], index: 0, kind: input, shape index: {}]
  %s1 = inlined_call_operand.vmem [shape: f32[16,16], index: 1, kind: input, shape index: {}]
  %s2 = inlined_call_operand.vmem [shape: f32[16,32], index: 2, kind: input, shape index: {}]
  %s3 = inlined_call_operand.vmem [shape: f32[16,16], index: 3, kind: input, shape index: {}]
  %s4 = inlined_call_operand.vmem [shape: f32[32,16], index: 4, kind: input, shape index: {}]
  %s5 = inlined_call_operand.vmem [shape: f32[16,16], index: 5, kind: input, shape index: {}]
  %s6 = inlined_call_operand.vmem [shape: f32[1,16], index: 6, kind: input, shape index: {}]
  %s7 = inlined_call_operand.vmem [shape: f32[1,16], index: 7, kind: input, shape index: {}]
  %s8 = inlined_call_operand.vmem [shape: f32[16,1], index: 8, kind: output, shape index: {}]
  %s9 = sld [smem:[#allocation0]]
  $region42: #{lcmp_forward.19} parent=0
    _
  %s11 = ssub.s32 1, %s9
  %s12 = scalar_select 0, %s11, %s9
  // Predicated region
  $region2: #{lcmp_forward.19} parent=0 // pred_check
    _
  $region3: #{lcmp_forward.19} parent=0 // pred_check_branch
    %14 = sbr.rel (0) target = $region5
  $region4: #{lcmp_forward.19} parent=0 // pred_region
    _
  $region5: #{lcmp_forward.19} parent=0 // pred_fallthru
    _
  // Predicated region
  $region6: #{lcmp_forward.19} parent=0 // pred_check
    _
  $region7: #{lcmp_forward.19} parent=0 // pred_check_branch
    %16 = sbr.rel (0) target = $region9
  $region8: #{lcmp_forward.19} parent=0 // pred_region
    _
  $region9: #{lcmp_forward.19} parent=0 // pred_fallthru
    _
  // Predicated region
  $region10: #{lcmp_forward.19} parent=0 // pred_check
    _
  $region11: #{lcmp_forward.19} parent=0 // pred_check_branch
    %18 = sbr.rel (0) target = $region13
  $region12: #{lcmp_forward.19} parent=0 // pred_region
    _
  $region13: #{lcmp_forward.19} parent=0 // pred_fallthru
    _
  // Predicated region
  $region14: #{lcmp_forward.19} parent=0 // pred_check
    _
  $region15: #{lcmp_forward.19} parent=0 // pred_check_branch
    %20 = sbr.rel (0) target = $region17
  $region16: #{lcmp_forward.19} parent=0 // pred_region
    _
  $region17: #{lcmp_forward.19} parent=0 // pred_fallthru
    _
  // Predicated region
  $region18: #{lcmp_forward.19} parent=0 // pred_check
    _
  $region19: #{lcmp_forward.19} parent=0 // pred_check_branch
    %22 = sbr.rel (0) target = $region21
  $region20: #{lcmp_forward.19} parent=0 // pred_region
    _
  $region21: #{lcmp_forward.19} parent=0 // pred_fallthru
    _
  // Predicated region
  $region22: #{lcmp_forward.19} parent=0 // pred_check
    _
  $region23: #{lcmp_forward.19} parent=0 // pred_check_branch
    %24 = sbr.rel (0) target = $region25
  $region24: #{lcmp_forward.19} parent=0 // pred_region
    _
  $region25: #{lcmp_forward.19} parent=0 // pred_fallthru
    _
  // Predicated region
  $region26: #{lcmp_forward.19} parent=0 // pred_check
    _
  $region27: #{lcmp_forward.19} parent=0 // pred_check_branch
    %26 = sbr.rel (0) target = $region29
  $region28: #{lcmp_forward.19} parent=0 // pred_region
    _
  $region29: #{lcmp_forward.19} parent=0 // pred_fallthru
    _
  // Predicated region
  $region30: #{lcmp_forward.19} parent=0 // pred_check
    _
  $region31: #{lcmp_forward.19} parent=0 // pred_check_branch
    %28 = sbr.rel (0) target = $region33
  $region32: #{lcmp_forward.19} parent=0 // pred_region
    _
  $region33: #{lcmp_forward.19} parent=0 // pred_fallthru
    _
  %v29 = vld [vmem:[%s2] sm:$0xff]
  %v30 = vld [vmem:[%s2 + $0x8] sm:$0xff]
  %v31 = vld [vmem:[%s4] sm:$0xff]
  %v32 = vld [vmem:[%s4 + $0x8] sm:$0xff]
  %v33 = vld [vmem:[%s4 + $0x10] sm:$0xff]
  %v34 = vld [vmem:[%s4 + $0x18] sm:$0xff]
  %v35 = vld [vmem:[%s3] sm:$0xff]
  %v36 = vld [vmem:[%s3 + $0x8] sm:$0xff]
  %v37 = vld [vmem:[%s5] sm:$0xff]
  %v38 = vld [vmem:[%s5 + $0x8] sm:$0xff]
  %vm39 = vcmask 130048
  %v41 = vsel %vm39, %v35, 0
  %v44 = vsel %vm39, %v36, 0
  %46 = vmatprep.subr.mxu0 0.0
  %47 = vmatpush1.msra.mxu0 %v37
  %48 = vmatprep.subr.mxu0 0.0
  %49 = vmatpush1.msra.mxu0 %v38
  %50 = vmatprep.subr.mxu0 0.0
  %51 = vmatpush1.msra.mxu0 0.0
  %52 = vmatprep.subr.mxu0 0.0
  %53 = vmatpush1.msra.mxu0 0.0
  %54 = vmatprep.subr.mxu0 0.0
  %55 = vmatpush1.msra.mxu0 0.0
  %56 = vmatprep.subr.mxu0 0.0
  %57 = vmatpush1.msra.mxu0 0.0
  %58 = vmatprep.subr.mxu0 0.0
  %59 = vmatpush1.msra.mxu0 0.0
  %60 = vmatprep.subr.mxu0 0.0
  %61 = vmatpush1.msra.mxu0 0.0
  %62 = vmatprep.subr.mxu0 0.0
  %63 = vmatpush1.msra.mxu0 0.0
  %64 = vmatprep.subr.mxu0 0.0
  %65 = vmatpush1.msra.mxu0 0.0
  %66 = vmatprep.subr.mxu0 0.0
  %67 = vmatpush1.msra.mxu0 0.0
  %68 = vmatprep.subr.mxu0 0.0
  %69 = vmatpush1.msra.mxu0 0.0
  %70 = vmatprep.subr.mxu0 0.0
  %71 = vmatpush1.msra.mxu0 0.0
  %72 = vmatprep.subr.mxu0 0.0
  %73 = vmatpush1.msra.mxu0 0.0
  %74 = vmatprep.subr.mxu0 0.0
  %75 = vmatpush1.msra.mxu0 0.0
  %76 = vmatprep.subr.mxu0 0.0
  %77 = vmatpush1.msra.mxu0 0.0
  %78 = vmatprep.subr.mxu0 0.0
  %79 = vmatpush1.msra.mxu0 0.0
  %80 = vmatprep.subr.mxu0 0.0
  %81 = vmatpush1.msra.mxu0 0.0
  %82 = vmatprep.subr.mxu0 0.0
  %83 = vmatpush1.msra.mxu0 0.0
  %84 = vmatprep.subr.mxu0 0.0
  %85 = vmatpush1.msra.mxu0 0.0
  %86 = vmatprep.subr.mxu0 0.0
  %87 = vmatpush1.msra.mxu0 0.0
  %88 = vmatprep.subr.mxu0 0.0
  %89 = vmatpush1.msra.mxu0 0.0
  %90 = vmatprep.subr.mxu0 0.0
  %91 = vmatpush1.msra.mxu0 0.0
  %92 = vmatprep.subr.mxu0 0.0
  %93 = vmatpush1.msra.mxu0 0.0
  %94 = vmatprep.subr.mxu0 0.0
  %95 = vmatpush1.msra.mxu0 0.0
  %96 = vmatprep.subr.mxu0 0.0
  %97 = vmatpush1.msra.mxu0 0.0
  %98 = vmatprep.subr.mxu0 0.0
  %99 = vmatpush1.msra.mxu0 0.0
  %100 = vmatprep.subr.mxu0 0.0
  %101 = vmatpush1.msra.mxu0 0.0
  %102 = vmatprep.subr.mxu0 0.0
  %103 = vmatpush1.msra.mxu0 0.0
  %104 = vmatprep.subr.mxu0 0.0
  %105 = vmatpush1.msra.mxu0 0.0
  %106 = vmatprep.subr.mxu0 0.0
  %107 = vmatpush1.msra.mxu0 0.0
  %108 = vmatprep.subr.mxu0 0.0
  %109 = vmatpush1.msra.mxu0 0.0
  %110 = vmatprep.mubr.f32.mxu0 0.0
  %111 = vmatmul.mubr.f32.gmra.mrb[0].mxu0 %v41
  %v112 = vpop.f32.mrb[0].mxu0
  %v113 = vadd.f32 0.0, %v112
  %v114 = vpop.f32.mrb[0].mxu0
  %115 = vmatprep.mubr.f32.mxu0 0.0
  %116 = vmatmul.mubr.f32.gmra.mrb[0].mxu0 %v44
  %v117 = vpop.f32.mrb[0].mxu0
  %v118 = vadd.f32 0.0, %v117
  %v119 = vpop.f32.mrb[0].mxu0
  %120 = vdwg.mxu0
  %vm121 = vcmask 261120
  %v123 = vsel %vm121, %v29, 0
  %v126 = vsel %vm121, %v30, 0
  %128 = vmatprep.subr.mxu0 0.0
  %129 = vmatpush1.msra.mxu0 %v31
  %130 = vmatprep.subr.mxu0 0.0
  %131 = vmatpush1.msra.mxu0 %v32
  %132 = vmatprep.subr.mxu0 0.0
  %133 = vmatpush1.msra.mxu0 %v33
  %134 = vmatprep.subr.mxu0 0.0
  %135 = vmatpush1.msra.mxu0 %v34
  %136 = vmatprep.subr.mxu0 0.0
  %137 = vmatpush1.msra.mxu0 0.0
  %138 = vmatprep.subr.mxu0 0.0
  %139 = vmatpush1.msra.mxu0 0.0
  %140 = vmatprep.subr.mxu0 0.0
  %141 = vmatpush1.msra.mxu0 0.0
  %142 = vmatprep.subr.mxu0 0.0
  %143 = vmatpush1.msra.mxu0 0.0
  %144 = vmatprep.subr.mxu0 0.0
  %145 = vmatpush1.msra.mxu0 0.0
  %146 = vmatprep.subr.mxu0 0.0
  %147 = vmatpush1.msra.mxu0 0.0
  %148 = vmatprep.subr.mxu0 0.0
  %149 = vmatpush1.msra.mxu0 0.0
  %150 = vmatprep.subr.mxu0 0.0
  %151 = vmatpush1.msra.mxu0 0.0
  %152 = vmatprep.subr.mxu0 0.0
  %153 = vmatpush1.msra.mxu0 0.0
  %154 = vmatprep.subr.mxu0 0.0
  %155 = vmatpush1.msra.mxu0 0.0
  %156 = vmatprep.subr.mxu0 0.0
  %157 = vmatpush1.msra.mxu0 0.0
  %158 = vmatprep.subr.mxu0 0.0
  %159 = vmatpush1.msra.mxu0 0.0
  %160 = vmatprep.subr.mxu0 0.0
  %161 = vmatpush1.msra.mxu0 0.0
  %162 = vmatprep.subr.mxu0 0.0
  %163 = vmatpush1.msra.mxu0 0.0
  %164 = vmatprep.subr.mxu0 0.0
  %165 = vmatpush1.msra.mxu0 0.0
  %166 = vmatprep.subr.mxu0 0.0
  %167 = vmatpush1.msra.mxu0 0.0
  %168 = vmatprep.subr.mxu0 0.0
  %169 = vmatpush1.msra.mxu0 0.0
  %170 = vmatprep.subr.mxu0 0.0
  %171 = vmatpush1.msra.mxu0 0.0
  %172 = vmatprep.subr.mxu0 0.0
  %173 = vmatpush1.msra.mxu0 0.0
  %174 = vmatprep.subr.mxu0 0.0
  %175 = vmatpush1.msra.mxu0 0.0
  %176 = vmatprep.subr.mxu0 0.0
  %177 = vmatpush1.msra.mxu0 0.0
  %178 = vmatprep.subr.mxu0 0.0
  %179 = vmatpush1.msra.mxu0 0.0
  %180 = vmatprep.subr.mxu0 0.0
  %181 = vmatpush1.msra.mxu0 0.0
  %182 = vmatprep.subr.mxu0 0.0
  %183 = vmatpush1.msra.mxu0 0.0
  %184 = vmatprep.subr.mxu0 0.0
  %185 = vmatpush1.msra.mxu0 0.0
  %186 = vmatprep.subr.mxu0 0.0
  %187 = vmatpush1.msra.mxu0 0.0
  %188 = vmatprep.subr.mxu0 0.0
  %189 = vmatpush1.msra.mxu0 0.0
  %190 = vmatprep.subr.mxu0 0.0
  %191 = vmatpush1.msra.mxu0 0.0
  %192 = vmatprep.mubr.f32.mxu0 0.0
  %193 = vmatmul.mubr.f32.gmra.mrb[0].mxu0 %v123
  %v194 = vpop.f32.mrb[0].mxu0
  %v195 = vadd.f32 %v113, %v194
  %v196 = vpop.f32.mrb[0].mxu0
  %197 = vmatprep.mubr.f32.mxu0 0.0
  %198 = vmatmul.mubr.f32.gmra.mrb[0].mxu0 %v126
  %v199 = vpop.f32.mrb[0].mxu0
  %v200 = vadd.f32 %v118, %v199
  %v201 = vpop.f32.mrb[0].mxu0
  %202 = vdwg.mxu0
  %v203 = vld [vmem:[%s6] sm:$0x1]
  %v205 = vlaneseq
  %v206 = vshrl.u32 %v205, 7
  %v207 = vsub.s32 0, %v206
  %v208 = vrot.slane %v203, %v207
  %v210 = vadd.f32 %v195, %v208
  %v211 = vadd.f32 %v200, %v208
  %v212 = vld [vmem:[%s0] sm:$0xff]
  %v213 = vld [vmem:[%s0 + $0x8] sm:$0xff]
  %v214 = vld [vmem:[%s1] sm:$0xff]
  %v215 = vld [vmem:[%s1 + $0x8] sm:$0xff]
  %v216 = vadd.f32 %v212, %v214
  %v217 = vadd.f32 %v213, %v215
  %v218 = vadd.f32 %v216, %v210
  %v219 = vadd.f32 %v217, %v211
  %vm220 = vcmp.ge.f32.partialorder %v218, 0.0
  %vm221 = vcmp.ge.f32.partialorder %v219, 0.0
  %v222 = vmul.f32 %v218, 0.2
  %v223 = vmul.f32 %v219, 0.2
  %v224 = vsel %vm220, %v218, %v222
  %v225 = vsel %vm221, %v219, %v223
  %v226 = vld [vmem:[%s7] sm:$0x1]
  %v228 = vlaneseq
  %v229 = vshrl.u32 %v228, 7
  %v230 = vsub.s32 0, %v229
  %v231 = vrot.slane %v226, %v230
  %v233 = vmul.f32 %v224, %v231
  %v234 = vmul.f32 %v225, %v231
  %v235 = vsel %vm39, %v233, 0.0
  %236 = vadd.xlane.f32.xlu0 %v235
  %v237 = vpop.xlane.xlu0 %236
  %v238 = vsel %vm39, %v234, 0.0
  %239 = vadd.xlane.f32.xlu0 %v238
  %v240 = vpop.xlane.xlu0 %239
  %vm241 = vcmask 7168
  %242 = vst.msk [vmem:[%s8] sm:$0xff] %vm241, %v237
  %243 = vst.msk [vmem:[%s8 + $0x8] sm:$0xff] %vm241, %v240
  // Predicated region
  $region34: #{lcmp_forward.19} parent=0 // pred_check
    _
  $region35: #{lcmp_forward.19} parent=0 // pred_check_branch
    %245 = sbr.rel (0) target = $region37
  $region36: #{lcmp_forward.19} parent=0 // pred_region
    _
  $region37: #{lcmp_forward.19} parent=0 // pred_fallthru
    _
  // Predicated region
  $region38: #{lcmp_forward.19} parent=0 // pred_check
    _
  $region39: #{lcmp_forward.19} parent=0 // pred_check_branch
    %247 = sbr.rel (0) target = $region41
  $region40: #{lcmp_forward.19} parent=0 // pred_region
    _
  $region41: #{lcmp_forward.19} parent=0 // pred_fallthru
    _

// kernel: lcmp_forward.20
$region0: #{lcmp_forward.20}
  #allocation0 [shape = 'u32[]', space=smem, size = 0x4, offset = 0x4, fixed_abs, tag = 'smem constant byte address 0x4 - core index']
  #allocation1 [shape = 'u32[144,128]{1,0:T(1,128)}', space=vmem, size = 0x12000, scoped, tag = 'internal scratch']
  %s0 = inlined_call_operand.vmem [shape: f32[16,16], index: 0, kind: input, shape index: {}]
  %s1 = inlined_call_operand.vmem [shape: f32[16,16], index: 1, kind: input, shape index: {}]
  %s2 = inlined_call_operand.vmem [shape: f32[16,32], index: 2, kind: input, shape index: {}]
  %s3 = inlined_call_operand.vmem [shape: f32[16,16], index: 3, kind: input, shape index: {}]
  %s4 = inlined_call_operand.vmem [shape: f32[16,32], index: 4, kind: input, shape index: {}]
  %s5 = inlined_call_operand.vmem [shape: f32[16,32], index: 5, kind: input, shape index: {}]
  %s6 = inlined_call_operand.vmem [shape: f32[32,32], index: 6, kind: input, shape index: {}]
  %s7 = inlined_call_operand.vmem [shape: f32[16,32], index: 7, kind: input, shape index: {}]
  %s8 = inlined_call_operand.vmem [shape: f32[1,32], index: 8, kind: input, shape index: {}]
  %s9 = inlined_call_operand.vmem [shape: f32[32,32], index: 9, kind: input, shape index: {}]
  %s10 = inlined_call_operand.vmem [shape: f32[1,32], index: 10, kind: input, shape index: {}]
  %s11 = inlined_call_operand.vmem [shape: f32[16,32], index: 11, kind: output, shape index: {}]
  %s12 = sld [smem:[#allocation0]]
  $region54: #{lcmp_forward.20} parent=0
    _
  %s14 = ssub.s32 1, %s12
  %s15 = scalar_select 0, %s14, %s12
  // Predicated region
  $region2: #{lcmp_forward.20} parent=0 // pred_check
    _
  $region3: #{lcmp_forward.20} parent=0 // pred_check_branch
    %17 = sbr.rel (0) target = $region5
  $region4: #{lcmp_forward.20} parent=0 // pred_region
    _
  $region5: #{lcmp_forward.20} parent=0 // pred_fallthru
    _
  // Predicated region
  $region6: #{lcmp_forward.20} parent=0 // pred_check
    _
  $region7: #{lcmp_forward.20} parent=0 // pred_check_branch
    %19 = sbr.rel (0) target = $region9
  $region8: #{lcmp_forward.20} parent=0 // pred_region
    _
  $region9: #{lcmp_forward.20} parent=0 // pred_fallthru
    _
  // Predicated region
  $region10: #{lcmp_forward.20} parent=0 // pred_check
    _
  $region11: #{lcmp_forward.20} parent=0 // pred_check_branch
    %21 = sbr.rel (0) target = $region13
  $region12: #{lcmp_forward.20} parent=0 // pred_region
    _
  $region13: #{lcmp_forward.20} parent=0 // pred_fallthru
    _
  // Predicated region
  $region14: #{lcmp_forward.20} parent=0 // pred_check
    _
  $region15: #{lcmp_forward.20} parent=0 // pred_check_branch
    %23 = sbr.rel (0) target = $region17
  $region16: #{lcmp_forward.20} parent=0 // pred_region
    _
  $region17: #{lcmp_forward.20} parent=0 // pred_fallthru
    _
  // Predicated region
  $region18: #{lcmp_forward.20} parent=0 // pred_check
    _
  $region19: #{lcmp_forward.20} parent=0 // pred_check_branch
    %25 = sbr.rel (0) target = $region21
  $region20: #{lcmp_forward.20} parent=0 // pred_region
    _
  $region21: #{lcmp_forward.20} parent=0 // pred_fallthru
    _
  // Predicated region
  $region22: #{lcmp_forward.20} parent=0 // pred_check
    _
  $region23: #{lcmp_forward.20} parent=0 // pred_check_branch
    %27 = sbr.rel (0) target = $region25
  $region24: #{lcmp_forward.20} parent=0 // pred_region
    _
  $region25: #{lcmp_forward.20} parent=0 // pred_fallthru
    _
  // Predicated region
  $region26: #{lcmp_forward.20} parent=0 // pred_check
    _
  $region27: #{lcmp_forward.20} parent=0 // pred_check_branch
    %29 = sbr.rel (0) target = $region29
  $region28: #{lcmp_forward.20} parent=0 // pred_region
    _
  $region29: #{lcmp_forward.20} parent=0 // pred_fallthru
    _
  // Predicated region
  $region30: #{lcmp_forward.20} parent=0 // pred_check
    _
  $region31: #{lcmp_forward.20} parent=0 // pred_check_branch
    %31 = sbr.rel (0) target = $region33
  $region32: #{lcmp_forward.20} parent=0 // pred_region
    _
  $region33: #{lcmp_forward.20} parent=0 // pred_fallthru
    _
  // Predicated region
  $region34: #{lcmp_forward.20} parent=0 // pred_check
    _
  $region35: #{lcmp_forward.20} parent=0 // pred_check_branch
    %33 = sbr.rel (0) target = $region37
  $region36: #{lcmp_forward.20} parent=0 // pred_region
    _
  $region37: #{lcmp_forward.20} parent=0 // pred_fallthru
    _
  // Predicated region
  $region38: #{lcmp_forward.20} parent=0 // pred_check
    _
  $region39: #{lcmp_forward.20} parent=0 // pred_check_branch
    %35 = sbr.rel (0) target = $region41
  $region40: #{lcmp_forward.20} parent=0 // pred_region
    _
  $region41: #{lcmp_forward.20} parent=0 // pred_fallthru
    _
  // Predicated region
  $region42: #{lcmp_forward.20} parent=0 // pred_check
    _
  $region43: #{lcmp_forward.20} parent=0 // pred_check_branch
    %37 = sbr.rel (0) target = $region45
  $region44: #{lcmp_forward.20} parent=0 // pred_region
    _
  $region45: #{lcmp_forward.20} parent=0 // pred_fallthru
    _
  %v38 = vld [vmem:[%s0] sm:$0xff]
  %v39 = vld [vmem:[%s0 + $0x8] sm:$0xff]
  %v40 = vld [vmem:[%s4] sm:$0xff]
  %v41 = vld [vmem:[%s4 + $0x8] sm:$0xff]
  %v42 = vld [vmem:[%s1] sm:$0xff]
  %v43 = vld [vmem:[%s1 + $0x8] sm:$0xff]
  %v44 = vld [vmem:[%s5] sm:$0xff]
  %v45 = vld [vmem:[%s5 + $0x8] sm:$0xff]
  %vm46 = vcmask 130048
  %v48 = vsel %vm46, %v42, 0
  %v51 = vsel %vm46, %v43, 0
  %53 = vmatprep.subr.mxu0 0.0
  %54 = vmatpush1.msra.mxu0 %v44
  %55 = vmatprep.subr.mxu0 0.0
  %56 = vmatpush1.msra.mxu0 %v45
  %57 = vmatprep.subr.mxu0 0.0
  %58 = vmatpush1.msra.mxu0 0.0
  %59 = vmatprep.subr.mxu0 0.0
  %60 = vmatpush1.msra.mxu0 0.0
  %61 = vmatprep.subr.mxu0 0.0
  %62 = vmatpush1.msra.mxu0 0.0
  %63 = vmatprep.subr.mxu0 0.0
  %64 = vmatpush1.msra.mxu0 0.0
  %65 = vmatprep.subr.mxu0 0.0
  %66 = vmatpush1.msra.mxu0 0.0
  %67 = vmatprep.subr.mxu0 0.0
  %68 = vmatpush1.msra.mxu0 0.0
  %69 = vmatprep.subr.mxu0 0.0
  %70 = vmatpush1.msra.mxu0 0.0
  %71 = vmatprep.subr.mxu0 0.0
  %72 = vmatpush1.msra.mxu0 0.0
  %73 = vmatprep.subr.mxu0 0.0
  %74 = vmatpush1.msra.mxu0 0.0
  %75 = vmatprep.subr.mxu0 0.0
  %76 = vmatpush1.msra.mxu0 0.0
  %77 = vmatprep.subr.mxu0 0.0
  %78 = vmatpush1.msra.mxu0 0.0
  %79 = vmatprep.subr.mxu0 0.0
  %80 = vmatpush1.msra.mxu0 0.0
  %81 = vmatprep.subr.mxu0 0.0
  %82 = vmatpush1.msra.mxu0 0.0
  %83 = vmatprep.subr.mxu0 0.0
  %84 = vmatpush1.msra.mxu0 0.0
  %85 = vmatprep.subr.mxu0 0.0
  %86 = vmatpush1.msra.mxu0 0.0
  %87 = vmatprep.subr.mxu0 0.0
  %88 = vmatpush1.msra.mxu0 0.0
  %89 = vmatprep.subr.mxu0 0.0
  %90 = vmatpush1.msra.mxu0 0.0
  %91 = vmatprep.subr.mxu0 0.0
  %92 = vmatpush1.msra.mxu0 0.0
  %93 = vmatprep.subr.mxu0 0.0
  %94 = vmatpush1.msra.mxu0 0.0
  %95 = vmatprep.subr.mxu0 0.0
  %96 = vmatpush1.msra.mxu0 0.0
  %97 = vmatprep.subr.mxu0 0.0
  %98 = vmatpush1.msra.mxu0 0.0
  %99 = vmatprep.subr.mxu0 0.0
  %100 = vmatpush1.msra.mxu0 0.0
  %101 = vmatprep.subr.mxu0 0.0
  %102 = vmatpush1.msra.mxu0 0.0
  %103 = vmatprep.subr.mxu0 0.0
  %104 = vmatpush1.msra.mxu0 0.0
  %105 = vmatprep.subr.mxu0 0.0
  %106 = vmatpush1.msra.mxu0 0.0
  %107 = vmatprep.subr.mxu0 0.0
  %108 = vmatpush1.msra.mxu0 0.0
  %109 = vmatprep.subr.mxu0 0.0
  %110 = vmatpush1.msra.mxu0 0.0
  %111 = vmatprep.subr.mxu0 0.0
  %112 = vmatpush1.msra.mxu0 0.0
  %113 = vmatprep.subr.mxu0 0.0
  %114 = vmatpush1.msra.mxu0 0.0
  %115 = vmatprep.subr.mxu0 0.0
  %116 = vmatpush1.msra.mxu0 0.0
  %117 = vmatprep.mubr.f32.mxu0 0.0
  %118 = vmatmul.mubr.f32.gmra.mrb[0].mxu0 %v48
  %v119 = vpop.f32.mrb[0].mxu0
  %v120 = vadd.f32 0.0, %v119
  %v121 = vpop.f32.mrb[0].mxu0
  %122 = vmatprep.mubr.f32.mxu0 0.0
  %123 = vmatmul.mubr.f32.gmra.mrb[0].mxu0 %v51
  %v124 = vpop.f32.mrb[0].mxu0
  %v125 = vadd.f32 0.0, %v124
  %v126 = vpop.f32.mrb[0].mxu0
  %127 = vdwg.mxu0
  %v129 = vsel %vm46, %v38, 0
  %v132 = vsel %vm46, %v39, 0
  %134 = vmatprep.subr.mxu0 0.0
  %135 = vmatpush1.msra.mxu0 %v40
  %136 = vmatprep.subr.mxu0 0.0
  %137 = vmatpush1.msra.mxu0 %v41
  %138 = vmatprep.subr.mxu0 0.0
  %139 = vmatpush1.msra.mxu0 0.0
  %140 = vmatprep.subr.mxu0 0.0
  %141 = vmatpush1.msra.mxu0 0.0
  %142 = vmatprep.subr.mxu0 0.0
  %143 = vmatpush1.msra.mxu0 0.0
  %144 = vmatprep.subr.mxu0 0.0
  %145 = vmatpush1.msra.mxu0 0.0
  %146 = vmatprep.subr.mxu0 0.0
  %147 = vmatpush1.msra.mxu0 0.0
  %148 = vmatprep.subr.mxu0 0.0
  %149 = vmatpush1.msra.mxu0 0.0
  %150 = vmatprep.subr.mxu0 0.0
  %151 = vmatpush1.msra.mxu0 0.0
  %152 = vmatprep.subr.mxu0 0.0
  %153 = vmatpush1.msra.mxu0 0.0
  %154 = vmatprep.subr.mxu0 0.0
  %155 = vmatpush1.msra.mxu0 0.0
  %156 = vmatprep.subr.mxu0 0.0
  %157 = vmatpush1.msra.mxu0 0.0
  %158 = vmatprep.subr.mxu0 0.0
  %159 = vmatpush1.msra.mxu0 0.0
  %160 = vmatprep.subr.mxu0 0.0
  %161 = vmatpush1.msra.mxu0 0.0
  %162 = vmatprep.subr.mxu0 0.0
  %163 = vmatpush1.msra.mxu0 0.0
  %164 = vmatprep.subr.mxu0 0.0
  %165 = vmatpush1.msra.mxu0 0.0
  %166 = vmatprep.subr.mxu0 0.0
  %167 = vmatpush1.msra.mxu0 0.0
  %168 = vmatprep.subr.mxu0 0.0
  %169 = vmatpush1.msra.mxu0 0.0
  %170 = vmatprep.subr.mxu0 0.0
  %171 = vmatpush1.msra.mxu0 0.0
  %172 = vmatprep.subr.mxu0 0.0
  %173 = vmatpush1.msra.mxu0 0.0
  %174 = vmatprep.subr.mxu0 0.0
  %175 = vmatpush1.msra.mxu0 0.0
  %176 = vmatprep.subr.mxu0 0.0
  %177 = vmatpush1.msra.mxu0 0.0
  %178 = vmatprep.subr.mxu0 0.0
  %179 = vmatpush1.msra.mxu0 0.0
  %180 = vmatprep.subr.mxu0 0.0
  %181 = vmatpush1.msra.mxu0 0.0
  %182 = vmatprep.subr.mxu0 0.0
  %183 = vmatpush1.msra.mxu0 0.0
  %184 = vmatprep.subr.mxu0 0.0
  %185 = vmatpush1.msra.mxu0 0.0
  %186 = vmatprep.subr.mxu0 0.0
  %187 = vmatpush1.msra.mxu0 0.0
  %188 = vmatprep.subr.mxu0 0.0
  %189 = vmatpush1.msra.mxu0 0.0
  %190 = vmatprep.subr.mxu0 0.0
  %191 = vmatpush1.msra.mxu0 0.0
  %192 = vmatprep.subr.mxu0 0.0
  %193 = vmatpush1.msra.mxu0 0.0
  %194 = vmatprep.subr.mxu0 0.0
  %195 = vmatpush1.msra.mxu0 0.0
  %196 = vmatprep.subr.mxu0 0.0
  %197 = vmatpush1.msra.mxu0 0.0
  %198 = vmatprep.mubr.f32.mxu0 0.0
  %199 = vmatmul.mubr.f32.gmra.mrb[0].mxu0 %v129
  %v200 = vpop.f32.mrb[0].mxu0
  %v201 = vadd.f32 %v120, %v200
  %v202 = vpop.f32.mrb[0].mxu0
  %203 = vmatprep.mubr.f32.mxu0 0.0
  %204 = vmatmul.mubr.f32.gmra.mrb[0].mxu0 %v132
  %v205 = vpop.f32.mrb[0].mxu0
  %v206 = vadd.f32 %v125, %v205
  %v207 = vpop.f32.mrb[0].mxu0
  %208 = vdwg.mxu0
  %v209 = vld [vmem:[%s2] sm:$0xff]
  %v210 = vld [vmem:[%s2 + $0x8] sm:$0xff]
  %v211 = vld [vmem:[%s6] sm:$0xff]
  %v212 = vld [vmem:[%s6 + $0x8] sm:$0xff]
  %v213 = vld [vmem:[%s6 + $0x10] sm:$0xff]
  %v214 = vld [vmem:[%s6 + $0x18] sm:$0xff]
  %vm215 = vcmask 261120
  %v217 = vsel %vm215, %v209, 0
  %v220 = vsel %vm215, %v210, 0
  %222 = vmatprep.subr.mxu0 0.0
  %223 = vmatpush1.msra.mxu0 %v211
  %224 = vmatprep.subr.mxu0 0.0
  %225 = vmatpush1.msra.mxu0 %v212
  %226 = vmatprep.subr.mxu0 0.0
  %227 = vmatpush1.msra.mxu0 %v213
  %228 = vmatprep.subr.mxu0 0.0
  %229 = vmatpush1.msra.mxu0 %v214
  %230 = vmatprep.subr.mxu0 0.0
  %231 = vmatpush1.msra.mxu0 0.0
  %232 = vmatprep.subr.mxu0 0.0
  %233 = vmatpush1.msra.mxu0 0.0
  %234 = vmatprep.subr.mxu0 0.0
  %235 = vmatpush1.msra.mxu0 0.0
  %236 = vmatprep.subr.mxu0 0.0
  %237 = vmatpush1.msra.mxu0 0.0
  %238 = vmatprep.subr.mxu0 0.0
  %239 = vmatpush1.msra.mxu0 0.0
  %240 = vmatprep.subr.mxu0 0.0
  %241 = vmatpush1.msra.mxu0 0.0
  %242 = vmatprep.subr.mxu0 0.0
  %243 = vmatpush1.msra.mxu0 0.0
  %244 = vmatprep.subr.mxu0 0.0
  %245 = vmatpush1.msra.mxu0 0.0
  %246 = vmatprep.subr.mxu0 0.0
  %247 = vmatpush1.msra.mxu0 0.0
  %248 = vmatprep.subr.mxu0 0.0
  %249 = vmatpush1.msra.mxu0 0.0
  %250 = vmatprep.subr.mxu0 0.0
  %251 = vmatpush1.msra.mxu0 0.0
  %252 = vmatprep.subr.mxu0 0.0
  %253 = vmatpush1.msra.mxu0 0.0
  %254 = vmatprep.subr.mxu0 0.0
  %255 = vmatpush1.msra.mxu0 0.0
  %256 = vmatprep.subr.mxu0 0.0
  %257 = vmatpush1.msra.mxu0 0.0
  %258 = vmatprep.subr.mxu0 0.0
  %259 = vmatpush1.msra.mxu0 0.0
  %260 = vmatprep.subr.mxu0 0.0
  %261 = vmatpush1.msra.mxu0 0.0
  %262 = vmatprep.subr.mxu0 0.0
  %263 = vmatpush1.msra.mxu0 0.0
  %264 = vmatprep.subr.mxu0 0.0
  %265 = vmatpush1.msra.mxu0 0.0
  %266 = vmatprep.subr.mxu0 0.0
  %267 = vmatpush1.msra.mxu0 0.0
  %268 = vmatprep.subr.mxu0 0.0
  %269 = vmatpush1.msra.mxu0 0.0
  %270 = vmatprep.subr.mxu0 0.0
  %271 = vmatpush1.msra.mxu0 0.0
  %272 = vmatprep.subr.mxu0 0.0
  %273 = vmatpush1.msra.mxu0 0.0
  %274 = vmatprep.subr.mxu0 0.0
  %275 = vmatpush1.msra.mxu0 0.0
  %276 = vmatprep.subr.mxu0 0.0
  %277 = vmatpush1.msra.mxu0 0.0
  %278 = vmatprep.subr.mxu0 0.0
  %279 = vmatpush1.msra.mxu0 0.0
  %280 = vmatprep.subr.mxu0 0.0
  %281 = vmatpush1.msra.mxu0 0.0
  %282 = vmatprep.subr.mxu0 0.0
  %283 = vmatpush1.msra.mxu0 0.0
  %284 = vmatprep.subr.mxu0 0.0
  %285 = vmatpush1.msra.mxu0 0.0
  %286 = vmatprep.mubr.f32.mxu0 0.0
  %287 = vmatmul.mubr.f32.gmra.mrb[0].mxu0 %v217
  %v288 = vpop.f32.mrb[0].mxu0
  %v289 = vadd.f32 0.0, %v288
  %v290 = vpop.f32.mrb[0].mxu0
  %291 = vmatprep.mubr.f32.mxu0 0.0
  %292 = vmatmul.mubr.f32.gmra.mrb[0].mxu0 %v220
  %v293 = vpop.f32.mrb[0].mxu0
  %v294 = vadd.f32 0.0, %v293
  %v295 = vpop.f32.mrb[0].mxu0
  %296 = vdwg.mxu0
  %v297 = vadd.f32 %v201, %v289
  %v298 = vadd.f32 %v206, %v294
  %v299 = vld [vmem:[%s3] sm:$0xff]
  %v300 = vld [vmem:[%s3 + $0x8] sm:$0xff]
  %v301 = vld [vmem:[%s7] sm:$0xff]
  %v302 = vld [vmem:[%s7 + $0x8] sm:$0xff]
  %v304 = vsel %vm46, %v299, 0
  %v307 = vsel %vm46, %v300, 0
  %309 = vmatprep.subr.mxu0 0.0
  %310 = vmatpush1.msra.mxu0 %v301
  %311 = vmatprep.subr.mxu0 0.0
  %312 = vmatpush1.msra.mxu0 %v302
  %313 = vmatprep.subr.mxu0 0.0
  %314 = vmatpush1.msra.mxu0 0.0
  %315 = vmatprep.subr.mxu0 0.0
  %316 = vmatpush1.msra.mxu0 0.0
  %317 = vmatprep.subr.mxu0 0.0
  %318 = vmatpush1.msra.mxu0 0.0
  %319 = vmatprep.subr.mxu0 0.0
  %320 = vmatpush1.msra.mxu0 0.0
  %321 = vmatprep.subr.mxu0 0.0
  %322 = vmatpush1.msra.mxu0 0.0
  %323 = vmatprep.subr.mxu0 0.0
  %324 = vmatpush1.msra.mxu0 0.0
  %325 = vmatprep.subr.mxu0 0.0
  %326 = vmatpush1.msra.mxu0 0.0
  %327 = vmatprep.subr.mxu0 0.0
  %328 = vmatpush1.msra.mxu0 0.0
  %329 = vmatprep.subr.mxu0 0.0
  %330 = vmatpush1.msra.mxu0 0.0
  %331 = vmatprep.subr.mxu0 0.0
  %332 = vmatpush1.msra.mxu0 0.0
  %333 = vmatprep.subr.mxu0 0.0
  %334 = vmatpush1.msra.mxu0 0.0
  %335 = vmatprep.subr.mxu0 0.0
  %336 = vmatpush1.msra.mxu0 0.0
  %337 = vmatprep.subr.mxu0 0.0
  %338 = vmatpush1.msra.mxu0 0.0
  %339 = vmatprep.subr.mxu0 0.0
  %340 = vmatpush1.msra.mxu0 0.0
  %341 = vmatprep.subr.mxu0 0.0
  %342 = vmatpush1.msra.mxu0 0.0
  %343 = vmatprep.subr.mxu0 0.0
  %344 = vmatpush1.msra.mxu0 0.0
  %345 = vmatprep.subr.mxu0 0.0
  %346 = vmatpush1.msra.mxu0 0.0
  %347 = vmatprep.subr.mxu0 0.0
  %348 = vmatpush1.msra.mxu0 0.0
  %349 = vmatprep.subr.mxu0 0.0
  %350 = vmatpush1.msra.mxu0 0.0
  %351 = vmatprep.subr.mxu0 0.0
  %352 = vmatpush1.msra.mxu0 0.0
  %353 = vmatprep.subr.mxu0 0.0
  %354 = vmatpush1.msra.mxu0 0.0
  %355 = vmatprep.subr.mxu0 0.0
  %356 = vmatpush1.msra.mxu0 0.0
  %357 = vmatprep.subr.mxu0 0.0
  %358 = vmatpush1.msra.mxu0 0.0
  %359 = vmatprep.subr.mxu0 0.0
  %360 = vmatpush1.msra.mxu0 0.0
  %361 = vmatprep.subr.mxu0 0.0
  %362 = vmatpush1.msra.mxu0 0.0
  %363 = vmatprep.subr.mxu0 0.0
  %364 = vmatpush1.msra.mxu0 0.0
  %365 = vmatprep.subr.mxu0 0.0
  %366 = vmatpush1.msra.mxu0 0.0
  %367 = vmatprep.subr.mxu0 0.0
  %368 = vmatpush1.msra.mxu0 0.0
  %369 = vmatprep.subr.mxu0 0.0
  %370 = vmatpush1.msra.mxu0 0.0
  %371 = vmatprep.subr.mxu0 0.0
  %372 = vmatpush1.msra.mxu0 0.0
  %373 = vmatprep.mubr.f32.mxu0 0.0
  %374 = vmatmul.mubr.f32.gmra.mrb[0].mxu0 %v304
  %v375 = vpop.f32.mrb[0].mxu0
  %v376 = vadd.f32 0.0, %v375
  %v377 = vpop.f32.mrb[0].mxu0
  %378 = vmatprep.mubr.f32.mxu0 0.0
  %379 = vmatmul.mubr.f32.gmra.mrb[0].mxu0 %v307
  %v380 = vpop.f32.mrb[0].mxu0
  %v381 = vadd.f32 0.0, %v380
  %v382 = vpop.f32.mrb[0].mxu0
  %383 = vdwg.mxu0
  %v384 = vadd.f32 %v297, %v376
  %v385 = vadd.f32 %v298, %v381
  %v386 = vld [vmem:[%s8] sm:$0x1]
  %v388 = vlaneseq
  %v389 = vshrl.u32 %v388, 7
  %v390 = vsub.s32 0, %v389
  %v391 = vrot.slane %v386, %v390
  %v393 = vadd.f32 %v384, %v391
  %v394 = vadd.f32 %v385, %v391
  %v395 = vadd.f32 %v393, 3.0
  %v396 = vadd.f32 %v394, 3.0
  %v397 = vmax.f32 %v395, 0.0
  %v398 = vmax.f32 %v396, 0.0
  %v399 = vmin.f32 %v397, 6.0
  %v400 = vmin.f32 %v398, 6.0
  %v401 = vmul.f32 %v393, %v399
  %v402 = vmul.f32 %v394, %v400
  %v403 = vmul.f32 %v401, 0.16666667
  %v404 = vmul.f32 %v402, 0.16666667
  %v405 = vld [vmem:[%s9] sm:$0xff]
  %v406 = vld [vmem:[%s9 + $0x8] sm:$0xff]
  %v407 = vld [vmem:[%s9 + $0x10] sm:$0xff]
  %v408 = vld [vmem:[%s9 + $0x18] sm:$0xff]
  %v409 = vld [vmem:[%s10] sm:$0x1]
  %v411 = vlaneseq
  %v412 = vshrl.u32 %v411, 7
  %v413 = vsub.s32 0, %v412
  %v414 = vrot.slane %v409, %v413
  %v417 = vsel %vm215, %v403, 0
  %v420 = vsel %vm215, %v404, 0
  %422 = vmatprep.subr.mxu0 0.0
  %423 = vmatpush1.msra.mxu0 %v405
  %424 = vmatprep.subr.mxu0 0.0
  %425 = vmatpush1.msra.mxu0 %v406
  %426 = vmatprep.subr.mxu0 0.0
  %427 = vmatpush1.msra.mxu0 %v407
  %428 = vmatprep.subr.mxu0 0.0
  %429 = vmatpush1.msra.mxu0 %v408
  %430 = vmatprep.subr.mxu0 0.0
  %431 = vmatpush1.msra.mxu0 0.0
  %432 = vmatprep.subr.mxu0 0.0
  %433 = vmatpush1.msra.mxu0 0.0
  %434 = vmatprep.subr.mxu0 0.0
  %435 = vmatpush1.msra.mxu0 0.0
  %436 = vmatprep.subr.mxu0 0.0
  %437 = vmatpush1.msra.mxu0 0.0
  %438 = vmatprep.subr.mxu0 0.0
  %439 = vmatpush1.msra.mxu0 0.0
  %440 = vmatprep.subr.mxu0 0.0
  %441 = vmatpush1.msra.mxu0 0.0
  %442 = vmatprep.subr.mxu0 0.0
  %443 = vmatpush1.msra.mxu0 0.0
  %444 = vmatprep.subr.mxu0 0.0
  %445 = vmatpush1.msra.mxu0 0.0
  %446 = vmatprep.subr.mxu0 0.0
  %447 = vmatpush1.msra.mxu0 0.0
  %448 = vmatprep.subr.mxu0 0.0
  %449 = vmatpush1.msra.mxu0 0.0
  %450 = vmatprep.subr.mxu0 0.0
  %451 = vmatpush1.msra.mxu0 0.0
  %452 = vmatprep.subr.mxu0 0.0
  %453 = vmatpush1.msra.mxu0 0.0
  %454 = vmatprep.subr.mxu0 0.0
  %455 = vmatpush1.msra.mxu0 0.0
  %456 = vmatprep.subr.mxu0 0.0
  %457 = vmatpush1.msra.mxu0 0.0
  %458 = vmatprep.subr.mxu0 0.0
  %459 = vmatpush1.msra.mxu0 0.0
  %460 = vmatprep.subr.mxu0 0.0
  %461 = vmatpush1.msra.mxu0 0.0
  %462 = vmatprep.subr.mxu0 0.0
  %463 = vmatpush1.msra.mxu0 0.0
  %464 = vmatprep.subr.mxu0 0.0
  %465 = vmatpush1.msra.mxu0 0.0
  %466 = vmatprep.subr.mxu0 0.0
  %467 = vmatpush1.msra.mxu0 0.0
  %468 = vmatprep.subr.mxu0 0.0
  %469 = vmatpush1.msra.mxu0 0.0
  %470 = vmatprep.subr.mxu0 0.0
  %471 = vmatpush1.msra.mxu0 0.0
  %472 = vmatprep.subr.mxu0 0.0
  %473 = vmatpush1.msra.mxu0 0.0
  %474 = vmatprep.subr.mxu0 0.0
  %475 = vmatpush1.msra.mxu0 0.0
  %476 = vmatprep.subr.mxu0 0.0
  %477 = vmatpush1.msra.mxu0 0.0
  %478 = vmatprep.subr.mxu0 0.0
  %479 = vmatpush1.msra.mxu0 0.0
  %480 = vmatprep.subr.mxu0 0.0
  %481 = vmatpush1.msra.mxu0 0.0
  %482 = vmatprep.subr.mxu0 0.0
  %483 = vmatpush1.msra.mxu0 0.0
  %484 = vmatprep.subr.mxu0 0.0
  %485 = vmatpush1.msra.mxu0 0.0
  %486 = vmatprep.mubr.f32.mxu0 0.0
  %487 = vmatmul.mubr.f32.gmra.mrb[0].mxu0 %v417
  %v488 = vpop.f32.mrb[0].mxu0
  %v489 = vadd.f32 %v414, %v488
  %v490 = vpop.f32.mrb[0].mxu0
  %491 = vmatprep.mubr.f32.mxu0 0.0
  %492 = vmatmul.mubr.f32.gmra.mrb[0].mxu0 %v420
  %v493 = vpop.f32.mrb[0].mxu0
  %v494 = vadd.f32 %v414, %v493
  %v495 = vpop.f32.mrb[0].mxu0
  %496 = vdwg.mxu0
  %497 = vst.msk [vmem:[%s11] sm:$0xff] %vm215, %v489
  %498 = vst.msk [vmem:[%s11 + $0x8] sm:$0xff] %vm215, %v494
  // Predicated region
  $region46: #{lcmp_forward.20} parent=0 // pred_check
    _
  $region47: #{lcmp_forward.20} parent=0 // pred_check_branch
    %500 = sbr.rel (0) target = $region49
  $region48: #{lcmp_forward.20} parent=0 // pred_region
    _
  $region49: #{lcmp_forward.20} parent=0 // pred_fallthru
    _
  // Predicated region
  $region50: #{lcmp_forward.20} parent=0 // pred_check
    _
  $region51: #{lcmp_forward.20} parent=0 // pred_check_branch
    %502 = sbr.rel (0) target = $region53
  $region52: #{lcmp_forward.20} parent=0 // pred_region
    _
  $region53: #{lcmp_forward.20} parent=0 // pred_fallthru
    _

// kernel: lcmp_forward.33
$region0: #{lcmp_forward.33}
  #allocation0 [shape = 'u32[]', space=smem, size = 0x4, offset = 0x4, fixed_abs, tag = 'smem constant byte address 0x4 - core index']
  #allocation1 [shape = 'u32[144,128]{1,0:T(1,128)}', space=vmem, size = 0x12000, scoped, tag = 'internal scratch']
  #allocation2 [shape = 'f32[1,1]{1,0:T(1,128)S(1)}', space=vmem, size = 0x200, scoped, tag = 'scoped memory for lcmp_forward.33']
  %s0 = inlined_call_operand.vmem [shape: f32[16,16], index: 0, kind: input, shape index: {}]
  %s1 = inlined_call_operand.vmem [shape: f32[16,16], index: 1, kind: input, shape index: {}]
  %s2 = inlined_call_operand.vmem [shape: f32[16,32], index: 2, kind: input, shape index: {}]
  %s3 = inlined_call_operand.vmem [shape: f32[16,16], index: 3, kind: input, shape index: {}]
  %s4 = inlined_call_operand.vmem [shape: f32[16,1], index: 4, kind: input, shape index: {}]
  %s5 = inlined_call_operand.vmem [shape: f32[16,256], index: 5, kind: input, shape index: {}]
  %s6 = inlined_call_operand.vmem [shape: f32[16,256], index: 6, kind: input, shape index: {}]
  %s7 = inlined_call_operand.vmem [shape: f32[32,256], index: 7, kind: input, shape index: {}]
  %s8 = inlined_call_operand.vmem [shape: f32[16,256], index: 8, kind: input, shape index: {}]
  %s9 = inlined_call_operand.vmem [shape: f32[1,256], index: 9, kind: input, shape index: {}]
  %s10 = inlined_call_operand.vmem [shape: f32[256,1], index: 10, kind: input, shape index: {}]
  %s11 = inlined_call_operand.<no memory space> [shape: f32[1,1], index: 11, kind: input, shape index: {}]
  %s12 = inlined_call_operand.vmem [shape: f32[16,1], index: 12, kind: output, shape index: {}]
  %s13 = sld [smem:[#allocation0]]
  $region58: #{lcmp_forward.33} parent=0
    _
  %s15 = ssub.s32 1, %s13
  %s16 = scalar_select 0, %s15, %s13
  %v17 = vstv %s11
  %18 = vst [vmem:[#allocation2] sm:$0x1] %v17
  // Predicated region
  $region2: #{lcmp_forward.33} parent=0 // pred_check
    _
  $region3: #{lcmp_forward.33} parent=0 // pred_check_branch
    %20 = sbr.rel (0) target = $region5
  $region4: #{lcmp_forward.33} parent=0 // pred_region
    _
  $region5: #{lcmp_forward.33} parent=0 // pred_fallthru
    _
  // Predicated region
  $region6: #{lcmp_forward.33} parent=0 // pred_check
    _
  $region7: #{lcmp_forward.33} parent=0 // pred_check_branch
    %22 = sbr.rel (0) target = $region9
  $region8: #{lcmp_forward.33} parent=0 // pred_region
    _
  $region9: #{lcmp_forward.33} parent=0 // pred_fallthru
    _
  // Predicated region
  $region10: #{lcmp_forward.33} parent=0 // pred_check
    _
  $region11: #{lcmp_forward.33} parent=0 // pred_check_branch
    %24 = sbr.rel (0) target = $region13
  $region12: #{lcmp_forward.33} parent=0 // pred_region
    _
  $region13: #{lcmp_forward.33} parent=0 // pred_fallthru
    _
  // Predicated region
  $region14: #{lcmp_forward.33} parent=0 // pred_check
    _
  $region15: #{lcmp_forward.33} parent=0 // pred_check_branch
    %26 = sbr.rel (0) target = $region17
  $region16: #{lcmp_forward.33} parent=0 // pred_region
    _
  $region17: #{lcmp_forward.33} parent=0 // pred_fallthru
    _
  // Predicated region
  $region18: #{lcmp_forward.33} parent=0 // pred_check
    _
  $region19: #{lcmp_forward.33} parent=0 // pred_check_branch
    %28 = sbr.rel (0) target = $region21
  $region20: #{lcmp_forward.33} parent=0 // pred_region
    _
  $region21: #{lcmp_forward.33} parent=0 // pred_fallthru
    _
  // Predicated region
  $region22: #{lcmp_forward.33} parent=0 // pred_check
    _
  $region23: #{lcmp_forward.33} parent=0 // pred_check_branch
    %30 = sbr.rel (0) target = $region25
  $region24: #{lcmp_forward.33} parent=0 // pred_region
    _
  $region25: #{lcmp_forward.33} parent=0 // pred_fallthru
    _
  // Predicated region
  $region26: #{lcmp_forward.33} parent=0 // pred_check
    _
  $region27: #{lcmp_forward.33} parent=0 // pred_check_branch
    %32 = sbr.rel (0) target = $region29
  $region28: #{lcmp_forward.33} parent=0 // pred_region
    _
  $region29: #{lcmp_forward.33} parent=0 // pred_fallthru
    _
  // Predicated region
  $region30: #{lcmp_forward.33} parent=0 // pred_check
    _
  $region31: #{lcmp_forward.33} parent=0 // pred_check_branch
    %34 = sbr.rel (0) target = $region33
  $region32: #{lcmp_forward.33} parent=0 // pred_region
    _
  $region33: #{lcmp_forward.33} parent=0 // pred_fallthru
    _
  // Predicated region
  $region34: #{lcmp_forward.33} parent=0 // pred_check
    _
  $region35: #{lcmp_forward.33} parent=0 // pred_check_branch
    %36 = sbr.rel (0) target = $region37
  $region36: #{lcmp_forward.33} parent=0 // pred_region
    _
  $region37: #{lcmp_forward.33} parent=0 // pred_fallthru
    _
  // Predicated region
  $region38: #{lcmp_forward.33} parent=0 // pred_check
    _
  $region39: #{lcmp_forward.33} parent=0 // pred_check_branch
    %38 = sbr.rel (0) target = $region41
  $region40: #{lcmp_forward.33} parent=0 // pred_region
    _
  $region41: #{lcmp_forward.33} parent=0 // pred_fallthru
    _
  // Predicated region
  $region42: #{lcmp_forward.33} parent=0 // pred_check
    _
  $region43: #{lcmp_forward.33} parent=0 // pred_check_branch
    %40 = sbr.rel (0) target = $region45
  $region44: #{lcmp_forward.33} parent=0 // pred_region
    _
  $region45: #{lcmp_forward.33} parent=0 // pred_fallthru
    _
  // Predicated region
  $region46: #{lcmp_forward.33} parent=0 // pred_check
    _
  $region47: #{lcmp_forward.33} parent=0 // pred_check_branch
    %42 = sbr.rel (0) target = $region49
  $region48: #{lcmp_forward.33} parent=0 // pred_region
    _
  $region49: #{lcmp_forward.33} parent=0 // pred_fallthru
    _
  %v43 = vld [vmem:[%s0] sm:$0xff]
  %v44 = vld [vmem:[%s0 + $0x8] sm:$0xff]
  %v45 = vld [vmem:[%s5] sm:$0xff]
  %v46 = vld [vmem:[%s5 + $0x8] sm:$0xff]
  %v47 = vld [vmem:[%s5 + $0x10] sm:$0xff]
  %v48 = vld [vmem:[%s5 + $0x18] sm:$0xff]
  %v49 = vld [vmem:[%s1] sm:$0xff]
  %v50 = vld [vmem:[%s1 + $0x8] sm:$0xff]
  %v51 = vld [vmem:[%s6] sm:$0xff]
  %v52 = vld [vmem:[%s6 + $0x8] sm:$0xff]
  %v53 = vld [vmem:[%s6 + $0x10] sm:$0xff]
  %v54 = vld [vmem:[%s6 + $0x18] sm:$0xff]
  %vm55 = vcmask 130048
  %v57 = vsel %vm55, %v49, 0
  %v60 = vsel %vm55, %v50, 0
  %62 = vmatprep.subr.mxu0 %v52
  %63 = vmatpush1.msra.mxu0 %v51
  %64 = vmatprep.subr.mxu0 %v54
  %65 = vmatpush1.msra.mxu0 %v53
  %66 = vmatprep.subr.mxu0 0.0
  %67 = vmatpush1.msra.mxu0 0.0
  %68 = vmatprep.subr.mxu0 0.0
  %69 = vmatpush1.msra.mxu0 0.0
  %70 = vmatprep.subr.mxu0 0.0
  %71 = vmatpush1.msra.mxu0 0.0
  %72 = vmatprep.subr.mxu0 0.0
  %73 = vmatpush1.msra.mxu0 0.0
  %74 = vmatprep.subr.mxu0 0.0
  %75 = vmatpush1.msra.mxu0 0.0
  %76 = vmatprep.subr.mxu0 0.0
  %77 = vmatpush1.msra.mxu0 0.0
  %78 = vmatprep.subr.mxu0 0.0
  %79 = vmatpush1.msra.mxu0 0.0
  %80 = vmatprep.subr.mxu0 0.0
  %81 = vmatpush1.msra.mxu0 0.0
  %82 = vmatprep.subr.mxu0 0.0
  %83 = vmatpush1.msra.mxu0 0.0
  %84 = vmatprep.subr.mxu0 0.0
  %85 = vmatpush1.msra.mxu0 0.0
  %86 = vmatprep.subr.mxu0 0.0
  %87 = vmatpush1.msra.mxu0 0.0
  %88 = vmatprep.subr.mxu0 0.0
  %89 = vmatpush1.msra.mxu0 0.0
  %90 = vmatprep.subr.mxu0 0.0
  %91 = vmatpush1.msra.mxu0 0.0
  %92 = vmatprep.subr.mxu0 0.0
  %93 = vmatpush1.msra.mxu0 0.0
  %94 = vmatprep.subr.mxu0 0.0
  %95 = vmatpush1.msra.mxu0 0.0
  %96 = vmatprep.subr.mxu0 0.0
  %97 = vmatpush1.msra.mxu0 0.0
  %98 = vmatprep.subr.mxu0 0.0
  %99 = vmatpush1.msra.mxu0 0.0
  %100 = vmatprep.subr.mxu0 0.0
  %101 = vmatpush1.msra.mxu0 0.0
  %102 = vmatprep.subr.mxu0 0.0
  %103 = vmatpush1.msra.mxu0 0.0
  %104 = vmatprep.subr.mxu0 0.0
  %105 = vmatpush1.msra.mxu0 0.0
  %106 = vmatprep.subr.mxu0 0.0
  %107 = vmatpush1.msra.mxu0 0.0
  %108 = vmatprep.subr.mxu0 0.0
  %109 = vmatpush1.msra.mxu0 0.0
  %110 = vmatprep.subr.mxu0 0.0
  %111 = vmatpush1.msra.mxu0 0.0
  %112 = vmatprep.subr.mxu0 0.0
  %113 = vmatpush1.msra.mxu0 0.0
  %114 = vmatprep.subr.mxu0 0.0
  %115 = vmatpush1.msra.mxu0 0.0
  %116 = vmatprep.subr.mxu0 0.0
  %117 = vmatpush1.msra.mxu0 0.0
  %118 = vmatprep.subr.mxu0 0.0
  %119 = vmatpush1.msra.mxu0 0.0
  %120 = vmatprep.subr.mxu0 0.0
  %121 = vmatpush1.msra.mxu0 0.0
  %122 = vmatprep.subr.mxu0 0.0
  %123 = vmatpush1.msra.mxu0 0.0
  %124 = vmatprep.subr.mxu0 0.0
  %125 = vmatpush1.msra.mxu0 0.0
  %126 = vmatprep.mubr.f32.mxu0 0.0
  %127 = vmatmul.mubr.f32.gmra.mrb[0].mxu0 %v57
  %v128 = vpop.f32.mrb[0].mxu0
  %v129 = vadd.f32 0.0, %v128
  %v130 = vpop.f32.mrb[0].mxu0
  %v131 = vadd.f32 0.0, %v130
  %132 = vmatprep.mubr.f32.mxu0 0.0
  %133 = vmatmul.mubr.f32.gmra.mrb[0].mxu0 %v60
  %v134 = vpop.f32.mrb[0].mxu0
  %v135 = vadd.f32 0.0, %v134
  %v136 = vpop.f32.mrb[0].mxu0
  %v137 = vadd.f32 0.0, %v136
  %138 = vdwg.mxu0
  %v140 = vsel %vm55, %v43, 0
  %v143 = vsel %vm55, %v44, 0
  %145 = vmatprep.subr.mxu0 %v46
  %146 = vmatpush1.msra.mxu0 %v45
  %147 = vmatprep.subr.mxu0 %v48
  %148 = vmatpush1.msra.mxu0 %v47
  %149 = vmatprep.subr.mxu0 0.0
  %150 = vmatpush1.msra.mxu0 0.0
  %151 = vmatprep.subr.mxu0 0.0
  %152 = vmatpush1.msra.mxu0 0.0
  %153 = vmatprep.subr.mxu0 0.0
  %154 = vmatpush1.msra.mxu0 0.0
  %155 = vmatprep.subr.mxu0 0.0
  %156 = vmatpush1.msra.mxu0 0.0
  %157 = vmatprep.subr.mxu0 0.0
  %158 = vmatpush1.msra.mxu0 0.0
  %159 = vmatprep.subr.mxu0 0.0
  %160 = vmatpush1.msra.mxu0 0.0
  %161 = vmatprep.subr.mxu0 0.0
  %162 = vmatpush1.msra.mxu0 0.0
  %163 = vmatprep.subr.mxu0 0.0
  %164 = vmatpush1.msra.mxu0 0.0
  %165 = vmatprep.subr.mxu0 0.0
  %166 = vmatpush1.msra.mxu0 0.0
  %167 = vmatprep.subr.mxu0 0.0
  %168 = vmatpush1.msra.mxu0 0.0
  %169 = vmatprep.subr.mxu0 0.0
  %170 = vmatpush1.msra.mxu0 0.0
  %171 = vmatprep.subr.mxu0 0.0
  %172 = vmatpush1.msra.mxu0 0.0
  %173 = vmatprep.subr.mxu0 0.0
  %174 = vmatpush1.msra.mxu0 0.0
  %175 = vmatprep.subr.mxu0 0.0
  %176 = vmatpush1.msra.mxu0 0.0
  %177 = vmatprep.subr.mxu0 0.0
  %178 = vmatpush1.msra.mxu0 0.0
  %179 = vmatprep.subr.mxu0 0.0
  %180 = vmatpush1.msra.mxu0 0.0
  %181 = vmatprep.subr.mxu0 0.0
  %182 = vmatpush1.msra.mxu0 0.0
  %183 = vmatprep.subr.mxu0 0.0
  %184 = vmatpush1.msra.mxu0 0.0
  %185 = vmatprep.subr.mxu0 0.0
  %186 = vmatpush1.msra.mxu0 0.0
  %187 = vmatprep.subr.mxu0 0.0
  %188 = vmatpush1.msra.mxu0 0.0
  %189 = vmatprep.subr.mxu0 0.0
  %190 = vmatpush1.msra.mxu0 0.0
  %191 = vmatprep.subr.mxu0 0.0
  %192 = vmatpush1.msra.mxu0 0.0
  %193 = vmatprep.subr.mxu0 0.0
  %194 = vmatpush1.msra.mxu0 0.0
  %195 = vmatprep.subr.mxu0 0.0
  %196 = vmatpush1.msra.mxu0 0.0
  %197 = vmatprep.subr.mxu0 0.0
  %198 = vmatpush1.msra.mxu0 0.0
  %199 = vmatprep.subr.mxu0 0.0
  %200 = vmatpush1.msra.mxu0 0.0
  %201 = vmatprep.subr.mxu0 0.0
  %202 = vmatpush1.msra.mxu0 0.0
  %203 = vmatprep.subr.mxu0 0.0
  %204 = vmatpush1.msra.mxu0 0.0
  %205 = vmatprep.subr.mxu0 0.0
  %206 = vmatpush1.msra.mxu0 0.0
  %207 = vmatprep.subr.mxu0 0.0
  %208 = vmatpush1.msra.mxu0 0.0
  %209 = vmatprep.mubr.f32.mxu0 0.0
  %210 = vmatmul.mubr.f32.gmra.mrb[0].mxu0 %v140
  %v211 = vpop.f32.mrb[0].mxu0
  %v212 = vadd.f32 %v129, %v211
  %v213 = vpop.f32.mrb[0].mxu0
  %v214 = vadd.f32 %v131, %v213
  %215 = vmatprep.mubr.f32.mxu0 0.0
  %216 = vmatmul.mubr.f32.gmra.mrb[0].mxu0 %v143
  %v217 = vpop.f32.mrb[0].mxu0
  %v218 = vadd.f32 %v135, %v217
  %v219 = vpop.f32.mrb[0].mxu0
  %v220 = vadd.f32 %v137, %v219
  %221 = vdwg.mxu0
  %v222 = vld [vmem:[%s2] sm:$0xff]
  %v223 = vld [vmem:[%s2 + $0x8] sm:$0xff]
  %v224 = vld [vmem:[%s7] sm:$0xff]
  %v225 = vld [vmem:[%s7 + $0x8] sm:$0xff]
  %v226 = vld [vmem:[%s7 + $0x10] sm:$0xff]
  %v227 = vld [vmem:[%s7 + $0x18] sm:$0xff]
  %v228 = vld [vmem:[%s7 + $0x20] sm:$0xff]
  %v229 = vld [vmem:[%s7 + $0x28] sm:$0xff]
  %v230 = vld [vmem:[%s7 + $0x30] sm:$0xff]
  %v231 = vld [vmem:[%s7 + $0x38] sm:$0xff]
  %vm232 = vcmask 261120
  %v234 = vsel %vm232, %v222, 0
  %v237 = vsel %vm232, %v223, 0
  %239 = vmatprep.subr.mxu0 %v225
  %240 = vmatpush1.msra.mxu0 %v224
  %241 = vmatprep.subr.mxu0 %v227
  %242 = vmatpush1.msra.mxu0 %v226
  %243 = vmatprep.subr.mxu0 %v229
  %244 = vmatpush1.msra.mxu0 %v228
  %245 = vmatprep.subr.mxu0 %v231
  %246 = vmatpush1.msra.mxu0 %v230
  %247 = vmatprep.subr.mxu0 0.0
  %248 = vmatpush1.msra.mxu0 0.0
  %249 = vmatprep.subr.mxu0 0.0
  %250 = vmatpush1.msra.mxu0 0.0
  %251 = vmatprep.subr.mxu0 0.0
  %252 = vmatpush1.msra.mxu0 0.0
  %253 = vmatprep.subr.mxu0 0.0
  %254 = vmatpush1.msra.mxu0 0.0
  %255 = vmatprep.subr.mxu0 0.0
  %256 = vmatpush1.msra.mxu0 0.0
  %257 = vmatprep.subr.mxu0 0.0
  %258 = vmatpush1.msra.mxu0 0.0
  %259 = vmatprep.subr.mxu0 0.0
  %260 = vmatpush1.msra.mxu0 0.0
  %261 = vmatprep.subr.mxu0 0.0
  %262 = vmatpush1.msra.mxu0 0.0
  %263 = vmatprep.subr.mxu0 0.0
  %264 = vmatpush1.msra.mxu0 0.0
  %265 = vmatprep.subr.mxu0 0.0
  %266 = vmatpush1.msra.mxu0 0.0
  %267 = vmatprep.subr.mxu0 0.0
  %268 = vmatpush1.msra.mxu0 0.0
  %269 = vmatprep.subr.mxu0 0.0
  %270 = vmatpush1.msra.mxu0 0.0
  %271 = vmatprep.subr.mxu0 0.0
  %272 = vmatpush1.msra.mxu0 0.0
  %273 = vmatprep.subr.mxu0 0.0
  %274 = vmatpush1.msra.mxu0 0.0
  %275 = vmatprep.subr.mxu0 0.0
  %276 = vmatpush1.msra.mxu0 0.0
  %277 = vmatprep.subr.mxu0 0.0
  %278 = vmatpush1.msra.mxu0 0.0
  %279 = vmatprep.subr.mxu0 0.0
  %280 = vmatpush1.msra.mxu0 0.0
  %281 = vmatprep.subr.mxu0 0.0
  %282 = vmatpush1.msra.mxu0 0.0
  %283 = vmatprep.subr.mxu0 0.0
  %284 = vmatpush1.msra.mxu0 0.0
  %285 = vmatprep.subr.mxu0 0.0
  %286 = vmatpush1.msra.mxu0 0.0
  %287 = vmatprep.subr.mxu0 0.0
  %288 = vmatpush1.msra.mxu0 0.0
  %289 = vmatprep.subr.mxu0 0.0
  %290 = vmatpush1.msra.mxu0 0.0
  %291 = vmatprep.subr.mxu0 0.0
  %292 = vmatpush1.msra.mxu0 0.0
  %293 = vmatprep.subr.mxu0 0.0
  %294 = vmatpush1.msra.mxu0 0.0
  %295 = vmatprep.subr.mxu0 0.0
  %296 = vmatpush1.msra.mxu0 0.0
  %297 = vmatprep.subr.mxu0 0.0
  %298 = vmatpush1.msra.mxu0 0.0
  %299 = vmatprep.subr.mxu0 0.0
  %300 = vmatpush1.msra.mxu0 0.0
  %301 = vmatprep.subr.mxu0 0.0
  %302 = vmatpush1.msra.mxu0 0.0
  %303 = vmatprep.mubr.f32.mxu0 0.0
  %304 = vmatmul.mubr.f32.gmra.mrb[0].mxu0 %v234
  %v305 = vpop.f32.mrb[0].mxu0
  %v306 = vadd.f32 0.0, %v305
  %v307 = vpop.f32.mrb[0].mxu0
  %v308 = vadd.f32 0.0, %v307
  %309 = vmatprep.mubr.f32.mxu0 0.0
  %310 = vmatmul.mubr.f32.gmra.mrb[0].mxu0 %v237
  %v311 = vpop.f32.mrb[0].mxu0
  %v312 = vadd.f32 0.0, %v311
  %v313 = vpop.f32.mrb[0].mxu0
  %v314 = vadd.f32 0.0, %v313
  %315 = vdwg.mxu0
  %v316 = vadd.f32 %v212, %v306
  %v317 = vadd.f32 %v214, %v308
  %v318 = vadd.f32 %v218, %v312
  %v319 = vadd.f32 %v220, %v314
  %v320 = vld [vmem:[%s3] sm:$0xff]
  %v321 = vld [vmem:[%s3 + $0x8] sm:$0xff]
  %v322 = vld [vmem:[%s8] sm:$0xff]
  %v323 = vld [vmem:[%s8 + $0x8] sm:$0xff]
  %v324 = vld [vmem:[%s8 + $0x10] sm:$0xff]
  %v325 = vld [vmem:[%s8 + $0x18] sm:$0xff]
  %v327 = vsel %vm55, %v320, 0
  %v330 = vsel %vm55, %v321, 0
  %332 = vmatprep.subr.mxu0 %v323
  %333 = vmatpush1.msra.mxu0 %v322
  %334 = vmatprep.subr.mxu0 %v325
  %335 = vmatpush1.msra.mxu0 %v324
  %336 = vmatprep.subr.mxu0 0.0
  %337 = vmatpush1.msra.mxu0 0.0
  %338 = vmatprep.subr.mxu0 0.0
  %339 = vmatpush1.msra.mxu0 0.0
  %340 = vmatprep.subr.mxu0 0.0
  %341 = vmatpush1.msra.mxu0 0.0
  %342 = vmatprep.subr.mxu0 0.0
  %343 = vmatpush1.msra.mxu0 0.0
  %344 = vmatprep.subr.mxu0 0.0
  %345 = vmatpush1.msra.mxu0 0.0
  %346 = vmatprep.subr.mxu0 0.0
  %347 = vmatpush1.msra.mxu0 0.0
  %348 = vmatprep.subr.mxu0 0.0
  %349 = vmatpush1.msra.mxu0 0.0
  %350 = vmatprep.subr.mxu0 0.0
  %351 = vmatpush1.msra.mxu0 0.0
  %352 = vmatprep.subr.mxu0 0.0
  %353 = vmatpush1.msra.mxu0 0.0
  %354 = vmatprep.subr.mxu0 0.0
  %355 = vmatpush1.msra.mxu0 0.0
  %356 = vmatprep.subr.mxu0 0.0
  %357 = vmatpush1.msra.mxu0 0.0
  %358 = vmatprep.subr.mxu0 0.0
  %359 = vmatpush1.msra.mxu0 0.0
  %360 = vmatprep.subr.mxu0 0.0
  %361 = vmatpush1.msra.mxu0 0.0
  %362 = vmatprep.subr.mxu0 0.0
  %363 = vmatpush1.msra.mxu0 0.0
  %364 = vmatprep.subr.mxu0 0.0
  %365 = vmatpush1.msra.mxu0 0.0
  %366 = vmatprep.subr.mxu0 0.0
  %367 = vmatpush1.msra.mxu0 0.0
  %368 = vmatprep.subr.mxu0 0.0
  %369 = vmatpush1.msra.mxu0 0.0
  %370 = vmatprep.subr.mxu0 0.0
  %371 = vmatpush1.msra.mxu0 0.0
  %372 = vmatprep.subr.mxu0 0.0
  %373 = vmatpush1.msra.mxu0 0.0
  %374 = vmatprep.subr.mxu0 0.0
  %375 = vmatpush1.msra.mxu0 0.0
  %376 = vmatprep.subr.mxu0 0.0
  %377 = vmatpush1.msra.mxu0 0.0
  %378 = vmatprep.subr.mxu0 0.0
  %379 = vmatpush1.msra.mxu0 0.0
  %380 = vmatprep.subr.mxu0 0.0
  %381 = vmatpush1.msra.mxu0 0.0
  %382 = vmatprep.subr.mxu0 0.0
  %383 = vmatpush1.msra.mxu0 0.0
  %384 = vmatprep.subr.mxu0 0.0
  %385 = vmatpush1.msra.mxu0 0.0
  %386 = vmatprep.subr.mxu0 0.0
  %387 = vmatpush1.msra.mxu0 0.0
  %388 = vmatprep.subr.mxu0 0.0
  %389 = vmatpush1.msra.mxu0 0.0
  %390 = vmatprep.subr.mxu0 0.0
  %391 = vmatpush1.msra.mxu0 0.0
  %392 = vmatprep.subr.mxu0 0.0
  %393 = vmatpush1.msra.mxu0 0.0
  %394 = vmatprep.subr.mxu0 0.0
  %395 = vmatpush1.msra.mxu0 0.0
  %396 = vmatprep.mubr.f32.mxu0 0.0
  %397 = vmatmul.mubr.f32.gmra.mrb[0].mxu0 %v327
  %v398 = vpop.f32.mrb[0].mxu0
  %v399 = vadd.f32 0.0, %v398
  %v400 = vpop.f32.mrb[0].mxu0
  %v401 = vadd.f32 0.0, %v400
  %402 = vmatprep.mubr.f32.mxu0 0.0
  %403 = vmatmul.mubr.f32.gmra.mrb[0].mxu0 %v330
  %v404 = vpop.f32.mrb[0].mxu0
  %v405 = vadd.f32 0.0, %v404
  %v406 = vpop.f32.mrb[0].mxu0
  %v407 = vadd.f32 0.0, %v406
  %408 = vdwg.mxu0
  %v409 = vadd.f32 %v316, %v399
  %v410 = vadd.f32 %v317, %v401
  %v411 = vadd.f32 %v318, %v405
  %v412 = vadd.f32 %v319, %v407
  %v413 = vld [vmem:[%s9] sm:$0x3]
  %v415 = vlaneseq
  %v416 = vshrl.u32 %v415, 7
  %v417 = vsub.s32 0, %v416
  %v418 = vrot.slane %v413, %v417
  %v419 = vlaneseq
  %v420 = vshrl.u32 %v419, 7
  %v421 = vsub.s32 1, %v420
  %v422 = vrot.slane %v413, %v421
  %v425 = vadd.f32 %v409, %v418
  %v426 = vadd.f32 %v410, %v422
  %v427 = vadd.f32 %v411, %v418
  %v428 = vadd.f32 %v412, %v422
  %v429 = vadd.f32 %v425, 3.0
  %v430 = vadd.f32 %v426, 3.0
  %v431 = vadd.f32 %v427, 3.0
  %v432 = vadd.f32 %v428, 3.0
  %v433 = vmax.f32 %v429, 0.0
  %v434 = vmax.f32 %v430, 0.0
  %v435 = vmax.f32 %v431, 0.0
  %v436 = vmax.f32 %v432, 0.0
  %v437 = vmin.f32 %v433, 6.0
  %v438 = vmin.f32 %v434, 6.0
  %v439 = vmin.f32 %v435, 6.0
  %v440 = vmin.f32 %v436, 6.0
  %v441 = vmul.f32 %v425, %v437
  %v442 = vmul.f32 %v426, %v438
  %v443 = vmul.f32 %v427, %v439
  %v444 = vmul.f32 %v428, %v440
  %v445 = vmul.f32 %v441, 0.16666667
  %v446 = vmul.f32 %v442, 0.16666667
  %v447 = vmul.f32 %v443, 0.16666667
  %v448 = vmul.f32 %v444, 0.16666667
  %v449 = vld [vmem:[%s10] sm:$0xff]
  %v450 = vld [vmem:[%s10 + $0x8] sm:$0xff]
  %v451 = vld [vmem:[%s10 + $0x10] sm:$0xff]
  %v452 = vld [vmem:[%s10 + $0x18] sm:$0xff]
  %v453 = vld [vmem:[%s10 + $0x20] sm:$0xff]
  %v454 = vld [vmem:[%s10 + $0x28] sm:$0xff]
  %v455 = vld [vmem:[%s10 + $0x30] sm:$0xff]
  %v456 = vld [vmem:[%s10 + $0x38] sm:$0xff]
  %v457 = vld [vmem:[%s10 + $0x40] sm:$0xff]
  %v458 = vld [vmem:[%s10 + $0x48] sm:$0xff]
  %v459 = vld [vmem:[%s10 + $0x50] sm:$0xff]
  %v460 = vld [vmem:[%s10 + $0x58] sm:$0xff]
  %v461 = vld [vmem:[%s10 + $0x60] sm:$0xff]
  %v462 = vld [vmem:[%s10 + $0x68] sm:$0xff]
  %v463 = vld [vmem:[%s10 + $0x70] sm:$0xff]
  %v464 = vld [vmem:[%s10 + $0x78] sm:$0xff]
  %v465 = vld [vmem:[%s10 + $0x80] sm:$0xff]
  %v466 = vld [vmem:[%s10 + $0x88] sm:$0xff]
  %v467 = vld [vmem:[%s10 + $0x90] sm:$0xff]
  %v468 = vld [vmem:[%s10 + $0x98] sm:$0xff]
  %v469 = vld [vmem:[%s10 + $0xa0] sm:$0xff]
  %v470 = vld [vmem:[%s10 + $0xa8] sm:$0xff]
  %v471 = vld [vmem:[%s10 + $0xb0] sm:$0xff]
  %v472 = vld [vmem:[%s10 + $0xb8] sm:$0xff]
  %v473 = vld [vmem:[%s10 + $0xc0] sm:$0xff]
  %v474 = vld [vmem:[%s10 + $0xc8] sm:$0xff]
  %v475 = vld [vmem:[%s10 + $0xd0] sm:$0xff]
  %v476 = vld [vmem:[%s10 + $0xd8] sm:$0xff]
  %v477 = vld [vmem:[%s10 + $0xe0] sm:$0xff]
  %v478 = vld [vmem:[%s10 + $0xe8] sm:$0xff]
  %v479 = vld [vmem:[%s10 + $0xf0] sm:$0xff]
  %v480 = vld [vmem:[%s10 + $0xf8] sm:$0xff]
  %v481 = vld [vmem:[#allocation2] sm:$0x1]
  %v483 = vlaneseq
  %v484 = vshrl.u32 %v483, 7
  %v485 = vsub.s32 0, %v484
  %v486 = vrot.slane %v481, %v485
  %488 = vmatprep.subr.mxu0 0.0
  %489 = vmatpush1.msra.mxu0 %v449
  %490 = vmatprep.subr.mxu0 0.0
  %491 = vmatpush1.msra.mxu0 %v450
  %492 = vmatprep.subr.mxu0 0.0
  %493 = vmatpush1.msra.mxu0 %v451
  %494 = vmatprep.subr.mxu0 0.0
  %495 = vmatpush1.msra.mxu0 %v452
  %496 = vmatprep.subr.mxu0 0.0
  %497 = vmatpush1.msra.mxu0 %v453
  %498 = vmatprep.subr.mxu0 0.0
  %499 = vmatpush1.msra.mxu0 %v454
  %500 = vmatprep.subr.mxu0 0.0
  %501 = vmatpush1.msra.mxu0 %v455
  %502 = vmatprep.subr.mxu0 0.0
  %503 = vmatpush1.msra.mxu0 %v456
  %504 = vmatprep.subr.mxu0 0.0
  %505 = vmatpush1.msra.mxu0 %v457
  %506 = vmatprep.subr.mxu0 0.0
  %507 = vmatpush1.msra.mxu0 %v458
  %508 = vmatprep.subr.mxu0 0.0
  %509 = vmatpush1.msra.mxu0 %v459
  %510 = vmatprep.subr.mxu0 0.0
  %511 = vmatpush1.msra.mxu0 %v460
  %512 = vmatprep.subr.mxu0 0.0
  %513 = vmatpush1.msra.mxu0 %v461
  %514 = vmatprep.subr.mxu0 0.0
  %515 = vmatpush1.msra.mxu0 %v462
  %516 = vmatprep.subr.mxu0 0.0
  %517 = vmatpush1.msra.mxu0 %v463
  %518 = vmatprep.subr.mxu0 0.0
  %519 = vmatpush1.msra.mxu0 %v464
  %520 = vmatprep.subr.mxu0 0.0
  %521 = vmatpush1.msra.mxu0 %v465
  %522 = vmatprep.subr.mxu0 0.0
  %523 = vmatpush1.msra.mxu0 %v466
  %524 = vmatprep.subr.mxu0 0.0
  %525 = vmatpush1.msra.mxu0 %v467
  %526 = vmatprep.subr.mxu0 0.0
  %527 = vmatpush1.msra.mxu0 %v468
  %528 = vmatprep.subr.mxu0 0.0
  %529 = vmatpush1.msra.mxu0 %v469
  %530 = vmatprep.subr.mxu0 0.0
  %531 = vmatpush1.msra.mxu0 %v470
  %532 = vmatprep.subr.mxu0 0.0
  %533 = vmatpush1.msra.mxu0 %v471
  %534 = vmatprep.subr.mxu0 0.0
  %535 = vmatpush1.msra.mxu0 %v472
  %536 = vmatprep.subr.mxu0 0.0
  %537 = vmatpush1.msra.mxu0 %v473
  %538 = vmatprep.subr.mxu0 0.0
  %539 = vmatpush1.msra.mxu0 %v474
  %540 = vmatprep.subr.mxu0 0.0
  %541 = vmatpush1.msra.mxu0 %v475
  %542 = vmatprep.subr.mxu0 0.0
  %543 = vmatpush1.msra.mxu0 %v476
  %544 = vmatprep.subr.mxu0 0.0
  %545 = vmatpush1.msra.mxu0 %v477
  %546 = vmatprep.subr.mxu0 0.0
  %547 = vmatpush1.msra.mxu0 %v478
  %548 = vmatprep.subr.mxu0 0.0
  %549 = vmatpush1.msra.mxu0 %v479
  %550 = vmatprep.subr.mxu0 0.0
  %551 = vmatpush1.msra.mxu0 %v480
  %552 = vmatprep.mubr.f32.mxu0 %v446
  %553 = vmatmul.mubr.f32.gmra.mrb[0].mxu0 %v445
  %v554 = vpop.f32.mrb[0].mxu0
  %v555 = vadd.f32 %v486, %v554
  %v556 = vpop.f32.mrb[0].mxu0
  %557 = vmatprep.mubr.f32.mxu0 %v448
  %558 = vmatmul.mubr.f32.gmra.mrb[0].mxu0 %v447
  %v559 = vpop.f32.mrb[0].mxu0
  %v560 = vadd.f32 %v486, %v559
  %v561 = vpop.f32.mrb[0].mxu0
  %562 = vdwg.mxu0
  %v563 = vld [vmem:[%s4] sm:$0xff]
  %v564 = vld [vmem:[%s4 + $0x8] sm:$0xff]
  %v565 = vmul.f32 %v555, %v563
  %v566 = vmul.f32 %v560, %v564
  %vm567 = vcmask 7168
  %568 = vst.msk [vmem:[%s12] sm:$0xff] %vm567, %v565
  %569 = vst.msk [vmem:[%s12 + $0x8] sm:$0xff] %vm567, %v566
  // Predicated region
  $region50: #{lcmp_forward.33} parent=0 // pred_check
    _
  $region51: #{lcmp_forward.33} parent=0 // pred_check_branch
    %571 = sbr.rel (0) target = $region53
  $region52: #{lcmp_forward.33} parent=0 // pred_region
    _
  $region53: #{lcmp_forward.33} parent=0 // pred_fallthru
    _
  // Predicated region
  $region54: #{lcmp_forward.33} parent=0 // pred_check
    _
  $region55: #{lcmp_forward.33} parent=0 // pred_check_branch
    %573 = sbr.rel (0) target = $region57
  $region56: #{lcmp_forward.33} parent=0 // pred_region
    _
  $region57: #{lcmp_forward.33} parent=0 // pred_fallthru
    _

// kernel: lcmp_forward.17
$region0: #{lcmp_forward.17}
  #allocation0 [shape = 'u32[]', space=smem, size = 0x4, offset = 0x4, fixed_abs, tag = 'smem constant byte address 0x4 - core index']
  #allocation1 [shape = 'u32[144,128]{1,0:T(1,128)}', space=vmem, size = 0x12000, scoped, tag = 'internal scratch']
  %s0 = inlined_call_operand.vmem [shape: f32[32,6,25], index: 0, kind: input, shape index: {}]
  %s1 = inlined_call_operand.vmem [shape: f32[50,64], index: 1, kind: input, shape index: {}]
  %s2 = inlined_call_operand.vmem [shape: f32[1,64], index: 2, kind: input, shape index: {}]
  %s3 = inlined_call_operand.vmem [shape: f32[75,64], index: 3, kind: input, shape index: {}]
  %s4 = inlined_call_operand.vmem [shape: f32[1,64], index: 4, kind: input, shape index: {}]
  %s5 = inlined_call_operand.vmem [shape: f32[100,64], index: 5, kind: input, shape index: {}]
  %s6 = inlined_call_operand.vmem [shape: f32[1,64], index: 6, kind: input, shape index: {}]
  %s7 = inlined_call_operand.vmem [shape: f32[192,8], index: 7, kind: input, shape index: {}]
  %s8 = inlined_call_operand.vmem [shape: f32[1,8], index: 8, kind: input, shape index: {}]
  %s9 = inlined_call_operand.vmem [shape: f32[32,8], index: 9, kind: output, shape index: {}]
  %s10 = sld [smem:[#allocation0]]
  $region46: #{lcmp_forward.17} parent=0
    _
  %s12 = ssub.s32 1, %s10
  %s13 = scalar_select 0, %s12, %s10
  // Predicated region
  $region2: #{lcmp_forward.17} parent=0 // pred_check
    _
  $region3: #{lcmp_forward.17} parent=0 // pred_check_branch
    %15 = sbr.rel (0) target = $region5
  $region4: #{lcmp_forward.17} parent=0 // pred_region
    _
  $region5: #{lcmp_forward.17} parent=0 // pred_fallthru
    _
  // Predicated region
  $region6: #{lcmp_forward.17} parent=0 // pred_check
    _
  $region7: #{lcmp_forward.17} parent=0 // pred_check_branch
    %17 = sbr.rel (0) target = $region9
  $region8: #{lcmp_forward.17} parent=0 // pred_region
    _
  $region9: #{lcmp_forward.17} parent=0 // pred_fallthru
    _
  // Predicated region
  $region10: #{lcmp_forward.17} parent=0 // pred_check
    _
  $region11: #{lcmp_forward.17} parent=0 // pred_check_branch
    %19 = sbr.rel (0) target = $region13
  $region12: #{lcmp_forward.17} parent=0 // pred_region
    _
  $region13: #{lcmp_forward.17} parent=0 // pred_fallthru
    _
  // Predicated region
  $region14: #{lcmp_forward.17} parent=0 // pred_check
    _
  $region15: #{lcmp_forward.17} parent=0 // pred_check_branch
    %21 = sbr.rel (0) target = $region17
  $region16: #{lcmp_forward.17} parent=0 // pred_region
    _
  $region17: #{lcmp_forward.17} parent=0 // pred_fallthru
    _
  // Predicated region
  $region18: #{lcmp_forward.17} parent=0 // pred_check
    _
  $region19: #{lcmp_forward.17} parent=0 // pred_check_branch
    %23 = sbr.rel (0) target = $region21
  $region20: #{lcmp_forward.17} parent=0 // pred_region
    _
  $region21: #{lcmp_forward.17} parent=0 // pred_fallthru
    _
  // Predicated region
  $region22: #{lcmp_forward.17} parent=0 // pred_check
    _
  $region23: #{lcmp_forward.17} parent=0 // pred_check_branch
    %25 = sbr.rel (0) target = $region25
  $region24: #{lcmp_forward.17} parent=0 // pred_region
    _
  $region25: #{lcmp_forward.17} parent=0 // pred_fallthru
    _
  // Predicated region
  $region26: #{lcmp_forward.17} parent=0 // pred_check
    _
  $region27: #{lcmp_forward.17} parent=0 // pred_check_branch
    %27 = sbr.rel (0) target = $region29
  $region28: #{lcmp_forward.17} parent=0 // pred_region
    _
  $region29: #{lcmp_forward.17} parent=0 // pred_fallthru
    _
  // Predicated region
  $region30: #{lcmp_forward.17} parent=0 // pred_check
    _
  $region31: #{lcmp_forward.17} parent=0 // pred_check_branch
    %29 = sbr.rel (0) target = $region33
  $region32: #{lcmp_forward.17} parent=0 // pred_region
    _
  $region33: #{lcmp_forward.17} parent=0 // pred_fallthru
    _
  // Predicated region
  $region34: #{lcmp_forward.17} parent=0 // pred_check
    _
  $region35: #{lcmp_forward.17} parent=0 // pred_check_branch
    %31 = sbr.rel (0) target = $region37
  $region36: #{lcmp_forward.17} parent=0 // pred_region
    _
  $region37: #{lcmp_forward.17} parent=0 // pred_fallthru
    _
  %v32 = vld [vmem:[%s0] sm:$0x3f]
  %v33 = vld [vmem:[%s0 + $0x8] sm:$0x3f]
  %v34 = vld [vmem:[%s0 + $0x10] sm:$0x3f]
  %v35 = vld [vmem:[%s0 + $0x18] sm:$0x3f]
  %v36 = vld [vmem:[%s0 + $0x20] sm:$0x3f]
  %v37 = vld [vmem:[%s0 + $0x28] sm:$0x3f]
  %v38 = vld [vmem:[%s0 + $0x30] sm:$0x3f]
  %v39 = vld [vmem:[%s0 + $0x38] sm:$0x3f]
  %v40 = vld [vmem:[%s0 + $0x40] sm:$0x3f]
  %v41 = vld [vmem:[%s0 + $0x48] sm:$0x3f]
  %v42 = vld [vmem:[%s0 + $0x50] sm:$0x3f]
  %v43 = vld [vmem:[%s0 + $0x58] sm:$0x3f]
  %v44 = vld [vmem:[%s0 + $0x60] sm:$0x3f]
  %v45 = vld [vmem:[%s0 + $0x68] sm:$0x3f]
  %v46 = vld [vmem:[%s0 + $0x70] sm:$0x3f]
  %v47 = vld [vmem:[%s0 + $0x78] sm:$0x3f]
  %v48 = vld [vmem:[%s0 + $0x80] sm:$0x3f]
  %v49 = vld [vmem:[%s0 + $0x88] sm:$0x3f]
  %v50 = vld [vmem:[%s0 + $0x90] sm:$0x3f]
  %v51 = vld [vmem:[%s0 + $0x98] sm:$0x3f]
  %v52 = vld [vmem:[%s0 + $0xa0] sm:$0x3f]
  %v53 = vld [vmem:[%s0 + $0xa8] sm:$0x3f]
  %v54 = vld [vmem:[%s0 + $0xb0] sm:$0x3f]
  %v55 = vld [vmem:[%s0 + $0xb8] sm:$0x3f]
  %v56 = vld [vmem:[%s0 + $0xc0] sm:$0x3f]
  %v57 = vld [vmem:[%s0 + $0xc8] sm:$0x3f]
  %v58 = vld [vmem:[%s0 + $0xd0] sm:$0x3f]
  %v59 = vld [vmem:[%s0 + $0xd8] sm:$0x3f]
  %v60 = vld [vmem:[%s0 + $0xe0] sm:$0x3f]
  %v61 = vld [vmem:[%s0 + $0xe8] sm:$0x3f]
  %v62 = vld [vmem:[%s0 + $0xf0] sm:$0x3f]
  %v63 = vld [vmem:[%s0 + $0xf8] sm:$0x3f]
  %v96 = vrot.slane %v33, 7
  %vm97 = vcmask 1041409
  %v98 = vsel %vm97, %v96, %v32
  %v99 = vrot.slane %v34, 6
  %vm100 = vcmask 1042434
  %v101 = vsel %vm100, %v99, %v98
  %v102 = vrot.slane %v35, 5
  %vm103 = vcmask 1043459
  %v104 = vsel %vm103, %v102, %v101
  %v105 = vrot.slane %v36, 4
  %vm106 = vcmask 1044484
  %v107 = vsel %vm106, %v105, %v104
  %v108 = vrot.slane %v37, 3
  %vm109 = vcmask 1045509
  %v110 = vsel %vm109, %v108, %v107
  %v111 = vrot.slane %v38, 2
  %vm112 = vcmask 1046534
  %v113 = vsel %vm112, %v111, %v110
  %v114 = vrot.slane %v39, 1
  %vm115 = vcmask 1047559
  %v116 = vsel %vm115, %v114, %v113
  %v117 = vrot.slane %v41, 7
  %v118 = vsel %vm97, %v117, %v40
  %v119 = vrot.slane %v42, 6
  %v120 = vsel %vm100, %v119, %v118
  %v121 = vrot.slane %v43, 5
  %v122 = vsel %vm103, %v121, %v120
  %v123 = vrot.slane %v44, 4
  %v124 = vsel %vm106, %v123, %v122
  %v125 = vrot.slane %v45, 3
  %v126 = vsel %vm109, %v125, %v124
  %v127 = vrot.slane %v46, 2
  %v128 = vsel %vm112, %v127, %v126
  %v129 = vrot.slane %v47, 1
  %v130 = vsel %vm115, %v129, %v128
  %v131 = vrot.slane %v49, 7
  %v132 = vsel %vm97, %v131, %v48
  %v133 = vrot.slane %v50, 6
  %v134 = vsel %vm100, %v133, %v132
  %v135 = vrot.slane %v51, 5
  %v136 = vsel %vm103, %v135, %v134
  %v137 = vrot.slane %v52, 4
  %v138 = vsel %vm106, %v137, %v136
  %v139 = vrot.slane %v53, 3
  %v140 = vsel %vm109, %v139, %v138
  %v141 = vrot.slane %v54, 2
  %v142 = vsel %vm112, %v141, %v140
  %v143 = vrot.slane %v55, 1
  %v144 = vsel %vm115, %v143, %v142
  %v145 = vrot.slane %v57, 7
  %v146 = vsel %vm97, %v145, %v56
  %v147 = vrot.slane %v58, 6
  %v148 = vsel %vm100, %v147, %v146
  %v149 = vrot.slane %v59, 5
  %v150 = vsel %vm103, %v149, %v148
  %v151 = vrot.slane %v60, 4
  %v152 = vsel %vm106, %v151, %v150
  %v153 = vrot.slane %v61, 3
  %v154 = vsel %vm109, %v153, %v152
  %v155 = vrot.slane %v62, 2
  %v156 = vsel %vm112, %v155, %v154
  %v157 = vrot.slane %v63, 1
  %v158 = vsel %vm115, %v157, %v156
  %v163 = vrot.slane %v32, 1
  %v164 = vsel %vm97, %v33, %v163
  %v165 = vrot.slane %v34, 7
  %v166 = vsel %vm100, %v165, %v164
  %v167 = vrot.slane %v35, 6
  %v168 = vsel %vm103, %v167, %v166
  %v169 = vrot.slane %v36, 5
  %v170 = vsel %vm106, %v169, %v168
  %v171 = vrot.slane %v37, 4
  %v172 = vsel %vm109, %v171, %v170
  %v173 = vrot.slane %v38, 3
  %v174 = vsel %vm112, %v173, %v172
  %v175 = vrot.slane %v39, 2
  %v176 = vsel %vm115, %v175, %v174
  %v177 = vrot.slane %v40, 1
  %v178 = vsel %vm97, %v41, %v177
  %v179 = vrot.slane %v42, 7
  %v180 = vsel %vm100, %v179, %v178
  %v181 = vrot.slane %v43, 6
  %v182 = vsel %vm103, %v181, %v180
  %v183 = vrot.slane %v44, 5
  %v184 = vsel %vm106, %v183, %v182
  %v185 = vrot.slane %v45, 4
  %v186 = vsel %vm109, %v185, %v184
  %v187 = vrot.slane %v46, 3
  %v188 = vsel %vm112, %v187, %v186
  %v189 = vrot.slane %v47, 2
  %v190 = vsel %vm115, %v189, %v188
  %v191 = vrot.slane %v48, 1
  %v192 = vsel %vm97, %v49, %v191
  %v193 = vrot.slane %v50, 7
  %v194 = vsel %vm100, %v193, %v192
  %v195 = vrot.slane %v51, 6
  %v196 = vsel %vm103, %v195, %v194
  %v197 = vrot.slane %v52, 5
  %v198 = vsel %vm106, %v197, %v196
  %v199 = vrot.slane %v53, 4
  %v200 = vsel %vm109, %v199, %v198
  %v201 = vrot.slane %v54, 3
  %v202 = vsel %vm112, %v201, %v200
  %v203 = vrot.slane %v55, 2
  %v204 = vsel %vm115, %v203, %v202
  %v205 = vrot.slane %v56, 1
  %v206 = vsel %vm97, %v57, %v205
  %v207 = vrot.slane %v58, 7
  %v208 = vsel %vm100, %v207, %v206
  %v209 = vrot.slane %v59, 6
  %v210 = vsel %vm103, %v209, %v208
  %v211 = vrot.slane %v60, 5
  %v212 = vsel %vm106, %v211, %v210
  %v213 = vrot.slane %v61, 4
  %v214 = vsel %vm109, %v213, %v212
  %v215 = vrot.slane %v62, 3
  %v216 = vsel %vm112, %v215, %v214
  %v217 = vrot.slane %v63, 2
  %v218 = vsel %vm115, %v217, %v216
  %219 = vrot.lane.b32.xlu0 %v176, 25
  %v220 = vpop.permute.xlu0 %219
  %221 = vrot.lane.b32.xlu0 %v190, 25
  %v222 = vpop.permute.xlu0 %221
  %223 = vrot.lane.b32.xlu0 %v204, 25
  %v224 = vpop.permute.xlu0 %223
  %225 = vrot.lane.b32.xlu0 %v218, 25
  %v226 = vpop.permute.xlu0 %225
  %vm231 = vcmask 203776
  %v232 = vsel %vm231, %v116, %v220
  %v233 = vsel %vm231, %v130, %v222
  %v234 = vsel %vm231, %v144, %v224
  %v235 = vsel %vm231, %v158, %v226
  %v236 = vsel %vm100, %v96, %v32
  %v237 = vsel %vm103, %v99, %v236
  %v238 = vsel %vm106, %v102, %v237
  %v239 = vsel %vm109, %v105, %v238
  %v240 = vsel %vm112, %v108, %v239
  %v241 = vsel %vm115, %v111, %v240
  %v242 = vsel %vm97, %v40, %v114
  %v243 = vsel %vm100, %v117, %v242
  %v244 = vsel %vm103, %v119, %v243
  %v245 = vsel %vm106, %v121, %v244
  %v246 = vsel %vm109, %v123, %v245
  %v247 = vsel %vm112, %v125, %v246
  %v248 = vsel %vm115, %v127, %v247
  %v249 = vsel %vm97, %v48, %v129
  %v250 = vsel %vm100, %v131, %v249
  %v251 = vsel %vm103, %v133, %v250
  %v252 = vsel %vm106, %v135, %v251
  %v253 = vsel %vm109, %v137, %v252
  %v254 = vsel %vm112, %v139, %v253
  %v255 = vsel %vm115, %v141, %v254
  %v256 = vsel %vm97, %v56, %v143
  %v257 = vsel %vm100, %v145, %v256
  %v258 = vsel %vm103, %v147, %v257
  %v259 = vsel %vm106, %v149, %v258
  %v260 = vsel %vm109, %v151, %v259
  %v261 = vsel %vm112, %v153, %v260
  %v262 = vsel %vm115, %v155, %v261
  %v268 = vsel %vm100, %v33, %v163
  %v269 = vsel %vm103, %v165, %v268
  %v270 = vsel %vm106, %v167, %v269
  %v271 = vsel %vm109, %v169, %v270
  %v272 = vsel %vm112, %v171, %v271
  %v273 = vsel %vm115, %v173, %v272
  %v274 = vsel %vm97, %v177, %v175
  %v275 = vsel %vm100, %v41, %v274
  %v276 = vsel %vm103, %v179, %v275
  %v277 = vsel %vm106, %v181, %v276
  %v278 = vsel %vm109, %v183, %v277
  %v279 = vsel %vm112, %v185, %v278
  %v280 = vsel %vm115, %v187, %v279
  %v281 = vsel %vm97, %v191, %v189
  %v282 = vsel %vm100, %v49, %v281
  %v283 = vsel %vm103, %v193, %v282
  %v284 = vsel %vm106, %v195, %v283
  %v285 = vsel %vm109, %v197, %v284
  %v286 = vsel %vm112, %v199, %v285
  %v287 = vsel %vm115, %v201, %v286
  %v288 = vsel %vm97, %v205, %v203
  %v289 = vsel %vm100, %v57, %v288
  %v290 = vsel %vm103, %v207, %v289
  %v291 = vsel %vm106, %v209, %v290
  %v292 = vsel %vm109, %v211, %v291
  %v293 = vsel %vm112, %v213, %v292
  %v294 = vsel %vm115, %v215, %v293
  %295 = vrot.lane.b32.xlu0 %v273, 25
  %v296 = vpop.permute.xlu0 %295
  %297 = vrot.lane.b32.xlu0 %v280, 25
  %v298 = vpop.permute.xlu0 %297
  %299 = vrot.lane.b32.xlu0 %v287, 25
  %v300 = vpop.permute.xlu0 %299
  %301 = vrot.lane.b32.xlu0 %v294, 25
  %v302 = vpop.permute.xlu0 %301
  %303 = vrot.lane.b32.xlu0 %v217, 25
  %v304 = vpop.permute.xlu0 %303
  %v310 = vsel %vm231, %v241, %v296
  %v311 = vsel %vm231, %v248, %v298
  %v312 = vsel %vm231, %v255, %v300
  %v313 = vsel %vm231, %v262, %v302
  %v314 = vsel %vm231, %v157, %v304
  %v315 = vsel %vm103, %v96, %v32
  %v316 = vsel %vm106, %v99, %v315
  %v317 = vsel %vm109, %v102, %v316
  %v318 = vsel %vm112, %v105, %v317
  %v319 = vsel %vm115, %v108, %v318
  %v320 = vsel %vm97, %v114, %v111
  %v321 = vsel %vm100, %v40, %v320
  %v322 = vsel %vm103, %v117, %v321
  %v323 = vsel %vm106, %v119, %v322
  %v324 = vsel %vm109, %v121, %v323
  %v325 = vsel %vm112, %v123, %v324
  %v326 = vsel %vm115, %v125, %v325
  %v327 = vsel %vm97, %v129, %v127
  %v328 = vsel %vm100, %v48, %v327
  %v329 = vsel %vm103, %v131, %v328
  %v330 = vsel %vm106, %v133, %v329
  %v331 = vsel %vm109, %v135, %v330
  %v332 = vsel %vm112, %v137, %v331
  %v333 = vsel %vm115, %v139, %v332
  %v334 = vsel %vm97, %v143, %v141
  %v335 = vsel %vm100, %v56, %v334
  %v336 = vsel %vm103, %v145, %v335
  %v337 = vsel %vm106, %v147, %v336
  %v338 = vsel %vm109, %v149, %v337
  %v339 = vsel %vm112, %v151, %v338
  %v340 = vsel %vm115, %v153, %v339
  %v341 = vsel %vm97, %v157, %v155
  %v347 = vsel %vm103, %v33, %v163
  %v348 = vsel %vm106, %v165, %v347
  %v349 = vsel %vm109, %v167, %v348
  %v350 = vsel %vm112, %v169, %v349
  %v351 = vsel %vm115, %v171, %v350
  %v352 = vsel %vm97, %v175, %v173
  %v353 = vsel %vm100, %v177, %v352
  %v354 = vsel %vm103, %v41, %v353
  %v355 = vsel %vm106, %v179, %v354
  %v356 = vsel %vm109, %v181, %v355
  %v357 = vsel %vm112, %v183, %v356
  %v358 = vsel %vm115, %v185, %v357
  %v359 = vsel %vm97, %v189, %v187
  %v360 = vsel %vm100, %v191, %v359
  %v361 = vsel %vm103, %v49, %v360
  %v362 = vsel %vm106, %v193, %v361
  %v363 = vsel %vm109, %v195, %v362
  %v364 = vsel %vm112, %v197, %v363
  %v365 = vsel %vm115, %v199, %v364
  %v366 = vsel %vm97, %v203, %v201
  %v367 = vsel %vm100, %v205, %v366
  %v368 = vsel %vm103, %v57, %v367
  %v369 = vsel %vm106, %v207, %v368
  %v370 = vsel %vm109, %v209, %v369
  %v371 = vsel %vm112, %v211, %v370
  %v372 = vsel %vm115, %v213, %v371
  %v373 = vsel %vm97, %v217, %v215
  %374 = vrot.lane.b32.xlu0 %v351, 25
  %v375 = vpop.permute.xlu0 %374
  %376 = vrot.lane.b32.xlu0 %v358, 25
  %v377 = vpop.permute.xlu0 %376
  %378 = vrot.lane.b32.xlu0 %v365, 25
  %v379 = vpop.permute.xlu0 %378
  %380 = vrot.lane.b32.xlu0 %v372, 25
  %v381 = vpop.permute.xlu0 %380
  %382 = vrot.lane.b32.xlu0 %v373, 25
  %v383 = vpop.permute.xlu0 %382
  %v389 = vsel %vm231, %v319, %v375
  %v390 = vsel %vm231, %v326, %v377
  %v391 = vsel %vm231, %v333, %v379
  %v392 = vsel %vm231, %v340, %v381
  %v393 = vsel %vm231, %v341, %v383
  %v394 = vsel %vm106, %v96, %v32
  %v395 = vsel %vm109, %v99, %v394
  %v396 = vsel %vm112, %v102, %v395
  %v397 = vsel %vm115, %v105, %v396
  %v398 = vsel %vm97, %v111, %v108
  %v399 = vsel %vm100, %v114, %v398
  %v400 = vsel %vm103, %v40, %v399
  %v401 = vsel %vm106, %v117, %v400
  %v402 = vsel %vm109, %v119, %v401
  %v403 = vsel %vm112, %v121, %v402
  %v404 = vsel %vm115, %v123, %v403
  %v405 = vsel %vm97, %v127, %v125
  %v406 = vsel %vm100, %v129, %v405
  %v407 = vsel %vm103, %v48, %v406
  %v408 = vsel %vm106, %v131, %v407
  %v409 = vsel %vm109, %v133, %v408
  %v410 = vsel %vm112, %v135, %v409
  %v411 = vsel %vm115, %v137, %v410
  %v412 = vsel %vm97, %v141, %v139
  %v413 = vsel %vm100, %v143, %v412
  %v414 = vsel %vm103, %v56, %v413
  %v415 = vsel %vm106, %v145, %v414
  %v416 = vsel %vm109, %v147, %v415
  %v417 = vsel %vm112, %v149, %v416
  %v418 = vsel %vm115, %v151, %v417
  %v419 = vsel %vm97, %v155, %v153
  %v420 = vsel %vm100, %v157, %v419
  %v426 = vsel %vm106, %v33, %v163
  %v427 = vsel %vm109, %v165, %v426
  %v428 = vsel %vm112, %v167, %v427
  %v429 = vsel %vm115, %v169, %v428
  %v430 = vsel %vm97, %v173, %v171
  %v431 = vsel %vm100, %v175, %v430
  %v432 = vsel %vm103, %v177, %v431
  %v433 = vsel %vm106, %v41, %v432
  %v434 = vsel %vm109, %v179, %v433
  %v435 = vsel %vm112, %v181, %v434
  %v436 = vsel %vm115, %v183, %v435
  %v437 = vsel %vm97, %v187, %v185
  %v438 = vsel %vm100, %v189, %v437
  %v439 = vsel %vm103, %v191, %v438
  %v440 = vsel %vm106, %v49, %v439
  %v441 = vsel %vm109, %v193, %v440
  %v442 = vsel %vm112, %v195, %v441
  %v443 = vsel %vm115, %v197, %v442
  %v444 = vsel %vm97, %v201, %v199
  %v445 = vsel %vm100, %v203, %v444
  %v446 = vsel %vm103, %v205, %v445
  %v447 = vsel %vm106, %v57, %v446
  %v448 = vsel %vm109, %v207, %v447
  %v449 = vsel %vm112, %v209, %v448
  %v450 = vsel %vm115, %v211, %v449
  %v451 = vsel %vm97, %v215, %v213
  %v452 = vsel %vm100, %v217, %v451
  %453 = vrot.lane.b32.xlu0 %v429, 25
  %v454 = vpop.permute.xlu0 %453
  %455 = vrot.lane.b32.xlu0 %v436, 25
  %v456 = vpop.permute.xlu0 %455
  %457 = vrot.lane.b32.xlu0 %v443, 25
  %v458 = vpop.permute.xlu0 %457
  %459 = vrot.lane.b32.xlu0 %v450, 25
  %v460 = vpop.permute.xlu0 %459
  %461 = vrot.lane.b32.xlu0 %v452, 25
  %v462 = vpop.permute.xlu0 %461
  %v468 = vsel %vm231, %v397, %v454
  %v469 = vsel %vm231, %v404, %v456
  %v470 = vsel %vm231, %v411, %v458
  %v471 = vsel %vm231, %v418, %v460
  %v472 = vsel %vm231, %v420, %v462
  %v473 = vsel %vm109, %v96, %v32
  %v474 = vsel %vm112, %v99, %v473
  %v475 = vsel %vm115, %v102, %v474
  %v476 = vsel %vm97, %v108, %v105
  %v477 = vsel %vm100, %v111, %v476
  %v478 = vsel %vm103, %v114, %v477
  %v479 = vsel %vm106, %v40, %v478
  %v480 = vsel %vm109, %v117, %v479
  %v481 = vsel %vm112, %v119, %v480
  %v482 = vsel %vm115, %v121, %v481
  %v483 = vsel %vm97, %v125, %v123
  %v484 = vsel %vm100, %v127, %v483
  %v485 = vsel %vm103, %v129, %v484
  %v486 = vsel %vm106, %v48, %v485
  %v487 = vsel %vm109, %v131, %v486
  %v488 = vsel %vm112, %v133, %v487
  %v489 = vsel %vm115, %v135, %v488
  %v490 = vsel %vm97, %v139, %v137
  %v491 = vsel %vm100, %v141, %v490
  %v492 = vsel %vm103, %v143, %v491
  %v493 = vsel %vm106, %v56, %v492
  %v494 = vsel %vm109, %v145, %v493
  %v495 = vsel %vm112, %v147, %v494
  %v496 = vsel %vm115, %v149, %v495
  %v497 = vsel %vm97, %v153, %v151
  %v498 = vsel %vm100, %v155, %v497
  %v499 = vsel %vm103, %v157, %v498
  %v505 = vsel %vm109, %v33, %v163
  %v506 = vsel %vm112, %v165, %v505
  %v507 = vsel %vm115, %v167, %v506
  %v508 = vsel %vm97, %v171, %v169
  %v509 = vsel %vm100, %v173, %v508
  %v510 = vsel %vm103, %v175, %v509
  %v511 = vsel %vm106, %v177, %v510
  %v512 = vsel %vm109, %v41, %v511
  %v513 = vsel %vm112, %v179, %v512
  %v514 = vsel %vm115, %v181, %v513
  %v515 = vsel %vm97, %v185, %v183
  %v516 = vsel %vm100, %v187, %v515
  %v517 = vsel %vm103, %v189, %v516
  %v518 = vsel %vm106, %v191, %v517
  %v519 = vsel %vm109, %v49, %v518
  %v520 = vsel %vm112, %v193, %v519
  %v521 = vsel %vm115, %v195, %v520
  %v522 = vsel %vm97, %v199, %v197
  %v523 = vsel %vm100, %v201, %v522
  %v524 = vsel %vm103, %v203, %v523
  %v525 = vsel %vm106, %v205, %v524
  %v526 = vsel %vm109, %v57, %v525
  %v527 = vsel %vm112, %v207, %v526
  %v528 = vsel %vm115, %v209, %v527
  %v529 = vsel %vm97, %v213, %v211
  %v530 = vsel %vm100, %v215, %v529
  %v531 = vsel %vm103, %v217, %v530
  %532 = vrot.lane.b32.xlu0 %v507, 25
  %v533 = vpop.permute.xlu0 %532
  %534 = vrot.lane.b32.xlu0 %v514, 25
  %v535 = vpop.permute.xlu0 %534
  %536 = vrot.lane.b32.xlu0 %v521, 25
  %v537 = vpop.permute.xlu0 %536
  %538 = vrot.lane.b32.xlu0 %v528, 25
  %v539 = vpop.permute.xlu0 %538
  %540 = vrot.lane.b32.xlu0 %v531, 25
  %v541 = vpop.permute.xlu0 %540
  %v547 = vsel %vm231, %v475, %v533
  %v548 = vsel %vm231, %v482, %v535
  %v549 = vsel %vm231, %v489, %v537
  %v550 = vsel %vm231, %v496, %v539
  %v551 = vsel %vm231, %v499, %v541
  %vm557 = vcmask 1046528
  %v558 = vrot.slane %v310, 1
  %v559 = vrot.slane %v311, 1
  %v560 = vsel %vm557, %v558, %v559
  %v561 = vrot.slane %v312, 1
  %v562 = vsel %vm557, %v559, %v561
  %v563 = vrot.slane %v313, 1
  %v564 = vsel %vm557, %v561, %v563
  %v565 = vrot.slane %v314, 1
  %v566 = vsel %vm557, %v563, %v565
  %vm572 = vcmask 1045504
  %v573 = vrot.slane %v389, 2
  %v574 = vrot.slane %v390, 2
  %v575 = vsel %vm572, %v573, %v574
  %v576 = vrot.slane %v391, 2
  %v577 = vsel %vm572, %v574, %v576
  %v578 = vrot.slane %v392, 2
  %v579 = vsel %vm572, %v576, %v578
  %v580 = vrot.slane %v393, 2
  %v581 = vsel %vm572, %v578, %v580
  %vm587 = vcmask 1044480
  %v588 = vrot.slane %v468, 3
  %v589 = vrot.slane %v469, 3
  %v590 = vsel %vm587, %v588, %v589
  %v591 = vrot.slane %v470, 3
  %v592 = vsel %vm587, %v589, %v591
  %v593 = vrot.slane %v471, 3
  %v594 = vsel %vm587, %v591, %v593
  %v595 = vrot.slane %v472, 3
  %v596 = vsel %vm587, %v593, %v595
  %vm602 = vcmask 1043456
  %v603 = vrot.slane %v547, 4
  %v604 = vrot.slane %v548, 4
  %v605 = vsel %vm602, %v603, %v604
  %v606 = vrot.slane %v549, 4
  %v607 = vsel %vm602, %v604, %v606
  %v608 = vrot.slane %v550, 4
  %v609 = vsel %vm602, %v606, %v608
  %v610 = vrot.slane %v551, 4
  %v611 = vsel %vm602, %v608, %v610
  %v612 = vld [vmem:[%s1] sm:$0xff]
  %v613 = vld [vmem:[%s1 + $0x8] sm:$0xff]
  %v614 = vld [vmem:[%s1 + $0x10] sm:$0xff]
  %v615 = vld [vmem:[%s1 + $0x18] sm:$0xff]
  %v616 = vld [vmem:[%s1 + $0x20] sm:$0xff]
  %v617 = vld [vmem:[%s1 + $0x28] sm:$0xff]
  %v618 = vld [vmem:[%s1 + $0x30] sm:$0x3]
  %v619 = vld [vmem:[%s2] sm:$0x1]
  %v621 = vlaneseq
  %v622 = vshrl.u32 %v621, 7
  %v623 = vsub.s32 0, %v622
  %v624 = vrot.slane %v619, %v623
  %vm626 = vcmask 408576
  %v628 = vsel %vm626, %v232, 0
  %v631 = vsel %vm626, %v233, 0
  %v634 = vsel %vm626, %v234, 0
  %v637 = vsel %vm626, %v235, 0
  %v639 = vsel %vm626, %v560, 0
  %v641 = vsel %vm626, %v562, 0
  %v643 = vsel %vm626, %v564, 0
  %v645 = vsel %vm626, %v566, 0
  %v647 = vsel %vm626, %v575, 0
  %v649 = vsel %vm626, %v577, 0
  %v651 = vsel %vm626, %v579, 0
  %v653 = vsel %vm626, %v581, 0
  %v655 = vsel %vm626, %v590, 0
  %v657 = vsel %vm626, %v592, 0
  %v659 = vsel %vm626, %v594, 0
  %v661 = vsel %vm626, %v596, 0
  %v663 = vsel %vm626, %v605, 0
  %v665 = vsel %vm626, %v607, 0
  %v667 = vsel %vm626, %v609, 0
  %v669 = vsel %vm626, %v611, 0
  %vm671 = vcmask 1041408
  %v673 = vsel %vm671, %v618, 0
  %675 = vmatprep.subr.mxu0 0.0
  %676 = vmatpush1.msra.mxu0 %v612
  %677 = vmatprep.subr.mxu0 0.0
  %678 = vmatpush1.msra.mxu0 %v613
  %679 = vmatprep.subr.mxu0 0.0
  %680 = vmatpush1.msra.mxu0 %v614
  %681 = vmatprep.subr.mxu0 0.0
  %682 = vmatpush1.msra.mxu0 %v615
  %683 = vmatprep.subr.mxu0 0.0
  %684 = vmatpush1.msra.mxu0 %v616
  %685 = vmatprep.subr.mxu0 0.0
  %686 = vmatpush1.msra.mxu0 %v617
  %687 = vmatprep.subr.mxu0 0.0
  %688 = vmatpush1.msra.mxu0 %v673
  %689 = vmatprep.subr.mxu0 0.0
  %690 = vmatpush1.msra.mxu0 0.0
  %691 = vmatprep.subr.mxu0 0.0
  %692 = vmatpush1.msra.mxu0 0.0
  %693 = vmatprep.subr.mxu0 0.0
  %694 = vmatpush1.msra.mxu0 0.0
  %695 = vmatprep.subr.mxu0 0.0
  %696 = vmatpush1.msra.mxu0 0.0
  %697 = vmatprep.subr.mxu0 0.0
  %698 = vmatpush1.msra.mxu0 0.0
  %699 = vmatprep.subr.mxu0 0.0
  %700 = vmatpush1.msra.mxu0 0.0
  %701 = vmatprep.subr.mxu0 0.0
  %702 = vmatpush1.msra.mxu0 0.0
  %703 = vmatprep.subr.mxu0 0.0
  %704 = vmatpush1.msra.mxu0 0.0
  %705 = vmatprep.subr.mxu0 0.0
  %706 = vmatpush1.msra.mxu0 0.0
  %707 = vmatprep.subr.mxu0 0.0
  %708 = vmatpush1.msra.mxu0 0.0
  %709 = vmatprep.subr.mxu0 0.0
  %710 = vmatpush1.msra.mxu0 0.0
  %711 = vmatprep.subr.mxu0 0.0
  %712 = vmatpush1.msra.mxu0 0.0
  %713 = vmatprep.subr.mxu0 0.0
  %714 = vmatpush1.msra.mxu0 0.0
  %715 = vmatprep.subr.mxu0 0.0
  %716 = vmatpush1.msra.mxu0 0.0
  %717 = vmatprep.subr.mxu0 0.0
  %718 = vmatpush1.msra.mxu0 0.0
  %719 = vmatprep.subr.mxu0 0.0
  %720 = vmatpush1.msra.mxu0 0.0
  %721 = vmatprep.subr.mxu0 0.0
  %722 = vmatpush1.msra.mxu0 0.0
  %723 = vmatprep.subr.mxu0 0.0
  %724 = vmatpush1.msra.mxu0 0.0
  %725 = vmatprep.subr.mxu0 0.0
  %726 = vmatpush1.msra.mxu0 0.0
  %727 = vmatprep.subr.mxu0 0.0
  %728 = vmatpush1.msra.mxu0 0.0
  %729 = vmatprep.subr.mxu0 0.0
  %730 = vmatpush1.msra.mxu0 0.0
  %731 = vmatprep.subr.mxu0 0.0
  %732 = vmatpush1.msra.mxu0 0.0
  %733 = vmatprep.subr.mxu0 0.0
  %734 = vmatpush1.msra.mxu0 0.0
  %735 = vmatprep.subr.mxu0 0.0
  %736 = vmatpush1.msra.mxu0 0.0
  %737 = vmatprep.subr.mxu0 0.0
  %738 = vmatpush1.msra.mxu0 0.0
  %739 = vmatprep.mubr.f32.mxu0 0.0
  %740 = vmatmul.mubr.f32.gmra.mrb[0].mxu0 %v628
  %v741 = vpop.f32.mrb[0].mxu0
  %v742 = vadd.f32 %v624, %v741
  %v743 = vpop.f32.mrb[0].mxu0
  %744 = vmatprep.mubr.f32.mxu0 0.0
  %745 = vmatmul.mubr.f32.gmra.mrb[0].mxu0 %v631
  %v746 = vpop.f32.mrb[0].mxu0
  %v747 = vadd.f32 %v624, %v746
  %v748 = vpop.f32.mrb[0].mxu0
  %749 = vmatprep.mubr.f32.mxu0 0.0
  %750 = vmatmul.mubr.f32.gmra.mrb[0].mxu0 %v634
  %v751 = vpop.f32.mrb[0].mxu0
  %v752 = vadd.f32 %v624, %v751
  %v753 = vpop.f32.mrb[0].mxu0
  %754 = vmatprep.mubr.f32.mxu0 0.0
  %755 = vmatmul.mubr.f32.gmra.mrb[0].mxu0 %v637
  %v756 = vpop.f32.mrb[0].mxu0
  %v757 = vadd.f32 %v624, %v756
  %v758 = vpop.f32.mrb[0].mxu0
  %759 = vmatprep.mubr.f32.mxu0 0.0
  %760 = vmatmul.mubr.f32.gmra.mrb[0].mxu0 %v639
  %v761 = vpop.f32.mrb[0].mxu0
  %v762 = vadd.f32 %v624, %v761
  %v763 = vpop.f32.mrb[0].mxu0
  %764 = vmatprep.mubr.f32.mxu0 0.0
  %765 = vmatmul.mubr.f32.gmra.mrb[0].mxu0 %v641
  %v766 = vpop.f32.mrb[0].mxu0
  %v767 = vadd.f32 %v624, %v766
  %v768 = vpop.f32.mrb[0].mxu0
  %769 = vmatprep.mubr.f32.mxu0 0.0
  %770 = vmatmul.mubr.f32.gmra.mrb[0].mxu0 %v643
  %v771 = vpop.f32.mrb[0].mxu0
  %v772 = vadd.f32 %v624, %v771
  %v773 = vpop.f32.mrb[0].mxu0
  %774 = vmatprep.mubr.f32.mxu0 0.0
  %775 = vmatmul.mubr.f32.gmra.mrb[0].mxu0 %v645
  %v776 = vpop.f32.mrb[0].mxu0
  %v777 = vadd.f32 %v624, %v776
  %v778 = vpop.f32.mrb[0].mxu0
  %779 = vmatprep.mubr.f32.mxu0 0.0
  %780 = vmatmul.mubr.f32.gmra.mrb[0].mxu0 %v647
  %v781 = vpop.f32.mrb[0].mxu0
  %v782 = vadd.f32 %v624, %v781
  %v783 = vpop.f32.mrb[0].mxu0
  %784 = vmatprep.mubr.f32.mxu0 0.0
  %785 = vmatmul.mubr.f32.gmra.mrb[0].mxu0 %v649
  %v786 = vpop.f32.mrb[0].mxu0
  %v787 = vadd.f32 %v624, %v786
  %v788 = vpop.f32.mrb[0].mxu0
  %789 = vmatprep.mubr.f32.mxu0 0.0
  %790 = vmatmul.mubr.f32.gmra.mrb[0].mxu0 %v651
  %v791 = vpop.f32.mrb[0].mxu0
  %v792 = vadd.f32 %v624, %v791
  %v793 = vpop.f32.mrb[0].mxu0
  %794 = vmatprep.mubr.f32.mxu0 0.0
  %795 = vmatmul.mubr.f32.gmra.mrb[0].mxu0 %v653
  %v796 = vpop.f32.mrb[0].mxu0
  %v797 = vadd.f32 %v624, %v796
  %v798 = vpop.f32.mrb[0].mxu0
  %799 = vmatprep.mubr.f32.mxu0 0.0
  %800 = vmatmul.mubr.f32.gmra.mrb[0].mxu0 %v655
  %v801 = vpop.f32.mrb[0].mxu0
  %v802 = vadd.f32 %v624, %v801
  %v803 = vpop.f32.mrb[0].mxu0
  %804 = vmatprep.mubr.f32.mxu0 0.0
  %805 = vmatmul.mubr.f32.gmra.mrb[0].mxu0 %v657
  %v806 = vpop.f32.mrb[0].mxu0
  %v807 = vadd.f32 %v624, %v806
  %v808 = vpop.f32.mrb[0].mxu0
  %809 = vmatprep.mubr.f32.mxu0 0.0
  %810 = vmatmul.mubr.f32.gmra.mrb[0].mxu0 %v659
  %v811 = vpop.f32.mrb[0].mxu0
  %v812 = vadd.f32 %v624, %v811
  %v813 = vpop.f32.mrb[0].mxu0
  %814 = vmatprep.mubr.f32.mxu0 0.0
  %815 = vmatmul.mubr.f32.gmra.mrb[0].mxu0 %v661
  %v816 = vpop.f32.mrb[0].mxu0
  %v817 = vadd.f32 %v624, %v816
  %v818 = vpop.f32.mrb[0].mxu0
  %819 = vmatprep.mubr.f32.mxu0 0.0
  %820 = vmatmul.mubr.f32.gmra.mrb[0].mxu0 %v663
  %v821 = vpop.f32.mrb[0].mxu0
  %v822 = vadd.f32 %v624, %v821
  %v823 = vpop.f32.mrb[0].mxu0
  %824 = vmatprep.mubr.f32.mxu0 0.0
  %825 = vmatmul.mubr.f32.gmra.mrb[0].mxu0 %v665
  %v826 = vpop.f32.mrb[0].mxu0
  %v827 = vadd.f32 %v624, %v826
  %v828 = vpop.f32.mrb[0].mxu0
  %829 = vmatprep.mubr.f32.mxu0 0.0
  %830 = vmatmul.mubr.f32.gmra.mrb[0].mxu0 %v667
  %v831 = vpop.f32.mrb[0].mxu0
  %v832 = vadd.f32 %v624, %v831
  %v833 = vpop.f32.mrb[0].mxu0
  %834 = vmatprep.mubr.f32.mxu0 0.0
  %835 = vmatmul.mubr.f32.gmra.mrb[0].mxu0 %v669
  %v836 = vpop.f32.mrb[0].mxu0
  %v837 = vadd.f32 %v624, %v836
  %v838 = vpop.f32.mrb[0].mxu0
  %839 = vdwg.mxu0
  %v840 = vtanh.pop %v742
  %v841 = vtanh.pop %v747
  %v842 = vtanh.pop %v752
  %v843 = vtanh.pop %v757
  %v844 = vtanh.pop %v762
  %v845 = vtanh.pop %v767
  %v846 = vtanh.pop %v772
  %v847 = vtanh.pop %v777
  %v848 = vtanh.pop %v782
  %v849 = vtanh.pop %v787
  %v850 = vtanh.pop %v792
  %v851 = vtanh.pop %v797
  %v852 = vtanh.pop %v802
  %v853 = vtanh.pop %v807
  %v854 = vtanh.pop %v812
  %v855 = vtanh.pop %v817
  %v856 = vtanh.pop %v822
  %v857 = vtanh.pop %v827
  %v858 = vtanh.pop %v832
  %v859 = vtanh.pop %v837
  %vm860 = vcmask 523264
  %v861 = vsel %vm860, %v840, -inf
  %v862 = vsel %vm860, %v844, -inf
  %v863 = vmax.f32 %v861, %v862
  %v864 = vsel %vm860, %v848, -inf
  %v865 = vmax.f32 %v863, %v864
  %v866 = vsel %vm860, %v852, -inf
  %v867 = vmax.f32 %v865, %v866
  %v868 = vsel %vm860, %v856, -inf
  %v869 = vmax.f32 %v867, %v868
  %v870 = vsel %vm860, %v841, -inf
  %v871 = vsel %vm860, %v845, -inf
  %v872 = vmax.f32 %v870, %v871
  %v873 = vsel %vm860, %v849, -inf
  %v874 = vmax.f32 %v872, %v873
  %v875 = vsel %vm860, %v853, -inf
  %v876 = vmax.f32 %v874, %v875
  %v877 = vsel %vm860, %v857, -inf
  %v878 = vmax.f32 %v876, %v877
  %v879 = vsel %vm860, %v842, -inf
  %v880 = vsel %vm860, %v846, -inf
  %v881 = vmax.f32 %v879, %v880
  %v882 = vsel %vm860, %v850, -inf
  %v883 = vmax.f32 %v881, %v882
  %v884 = vsel %vm860, %v854, -inf
  %v885 = vmax.f32 %v883, %v884
  %v886 = vsel %vm860, %v858, -inf
  %v887 = vmax.f32 %v885, %v886
  %v888 = vsel %vm860, %v843, -inf
  %v889 = vsel %vm860, %v847, -inf
  %v890 = vmax.f32 %v888, %v889
  %v891 = vsel %vm860, %v851, -inf
  %v892 = vmax.f32 %v890, %v891
  %v893 = vsel %vm860, %v855, -inf
  %v894 = vmax.f32 %v892, %v893
  %v895 = vsel %vm860, %v859, -inf
  %v896 = vmax.f32 %v894, %v895
  %v897 = vrot.slane %v32, 2
  %v898 = vrot.slane %v33, 1
  %v899 = vsel %vm97, %v898, %v897
  %v900 = vsel %vm100, %v34, %v899
  %v901 = vrot.slane %v35, 7
  %v902 = vsel %vm103, %v901, %v900
  %v903 = vrot.slane %v36, 6
  %v904 = vsel %vm106, %v903, %v902
  %v905 = vrot.slane %v37, 5
  %v906 = vsel %vm109, %v905, %v904
  %v907 = vrot.slane %v38, 4
  %v908 = vsel %vm112, %v907, %v906
  %v909 = vrot.slane %v39, 3
  %v910 = vsel %vm115, %v909, %v908
  %v911 = vrot.slane %v40, 2
  %v912 = vrot.slane %v41, 1
  %v913 = vsel %vm97, %v912, %v911
  %v914 = vsel %vm100, %v42, %v913
  %v915 = vrot.slane %v43, 7
  %v916 = vsel %vm103, %v915, %v914
  %v917 = vrot.slane %v44, 6
  %v918 = vsel %vm106, %v917, %v916
  %v919 = vrot.slane %v45, 5
  %v920 = vsel %vm109, %v919, %v918
  %v921 = vrot.slane %v46, 4
  %v922 = vsel %vm112, %v921, %v920
  %v923 = vrot.slane %v47, 3
  %v924 = vsel %vm115, %v923, %v922
  %v925 = vrot.slane %v48, 2
  %v926 = vrot.slane %v49, 1
  %v927 = vsel %vm97, %v926, %v925
  %v928 = vsel %vm100, %v50, %v927
  %v929 = vrot.slane %v51, 7
  %v930 = vsel %vm103, %v929, %v928
  %v931 = vrot.slane %v52, 6
  %v932 = vsel %vm106, %v931, %v930
  %v933 = vrot.slane %v53, 5
  %v934 = vsel %vm109, %v933, %v932
  %v935 = vrot.slane %v54, 4
  %v936 = vsel %vm112, %v935, %v934
  %v937 = vrot.slane %v55, 3
  %v938 = vsel %vm115, %v937, %v936
  %v939 = vrot.slane %v56, 2
  %v940 = vrot.slane %v57, 1
  %v941 = vsel %vm97, %v940, %v939
  %v942 = vsel %vm100, %v58, %v941
  %v943 = vrot.slane %v59, 7
  %v944 = vsel %vm103, %v943, %v942
  %v945 = vrot.slane %v60, 6
  %v946 = vsel %vm106, %v945, %v944
  %v947 = vrot.slane %v61, 5
  %v948 = vsel %vm109, %v947, %v946
  %v949 = vrot.slane %v62, 4
  %v950 = vsel %vm112, %v949, %v948
  %v951 = vrot.slane %v63, 3
  %v952 = vsel %vm115, %v951, %v950
  %953 = vrot.lane.b32.xlu0 %v910, 50
  %v954 = vpop.permute.xlu0 %953
  %955 = vrot.lane.b32.xlu0 %v924, 50
  %v956 = vpop.permute.xlu0 %955
  %957 = vrot.lane.b32.xlu0 %v938, 50
  %v958 = vpop.permute.xlu0 %957
  %959 = vrot.lane.b32.xlu0 %v952, 50
  %v960 = vpop.permute.xlu0 %959
  %v965 = vsel %vm626, %v232, %v954
  %v966 = vsel %vm626, %v233, %v956
  %v967 = vsel %vm626, %v234, %v958
  %v968 = vsel %vm626, %v235, %v960
  %v969 = vsel %vm100, %v898, %v897
  %v970 = vsel %vm103, %v34, %v969
  %v971 = vsel %vm106, %v901, %v970
  %v972 = vsel %vm109, %v903, %v971
  %v973 = vsel %vm112, %v905, %v972
  %v974 = vsel %vm115, %v907, %v973
  %v975 = vsel %vm97, %v911, %v909
  %v976 = vsel %vm100, %v912, %v975
  %v977 = vsel %vm103, %v42, %v976
  %v978 = vsel %vm106, %v915, %v977
  %v979 = vsel %vm109, %v917, %v978
  %v980 = vsel %vm112, %v919, %v979
  %v981 = vsel %vm115, %v921, %v980
  %v982 = vsel %vm97, %v925, %v923
  %v983 = vsel %vm100, %v926, %v982
  %v984 = vsel %vm103, %v50, %v983
  %v985 = vsel %vm106, %v929, %v984
  %v986 = vsel %vm109, %v931, %v985
  %v987 = vsel %vm112, %v933, %v986
  %v988 = vsel %vm115, %v935, %v987
  %v989 = vsel %vm97, %v939, %v937
  %v990 = vsel %vm100, %v940, %v989
  %v991 = vsel %vm103, %v58, %v990
  %v992 = vsel %vm106, %v943, %v991
  %v993 = vsel %vm109, %v945, %v992
  %v994 = vsel %vm112, %v947, %v993
  %v995 = vsel %vm115, %v949, %v994
  %996 = vrot.lane.b32.xlu0 %v974, 50
  %v997 = vpop.permute.xlu0 %996
  %998 = vrot.lane.b32.xlu0 %v981, 50
  %v999 = vpop.permute.xlu0 %998
  %1000 = vrot.lane.b32.xlu0 %v988, 50
  %v1001 = vpop.permute.xlu0 %1000
  %1002 = vrot.lane.b32.xlu0 %v995, 50
  %v1003 = vpop.permute.xlu0 %1002
  %1004 = vrot.lane.b32.xlu0 %v951, 50
  %v1005 = vpop.permute.xlu0 %1004
  %v1011 = vsel %vm626, %v310, %v997
  %v1012 = vsel %vm626, %v311, %v999
  %v1013 = vsel %vm626, %v312, %v1001
  %v1014 = vsel %vm626, %v313, %v1003
  %v1015 = vsel %vm626, %v314, %v1005
  %v1016 = vsel %vm103, %v898, %v897
  %v1017 = vsel %vm106, %v34, %v1016
  %v1018 = vsel %vm109, %v901, %v1017
  %v1019 = vsel %vm112, %v903, %v1018
  %v1020 = vsel %vm115, %v905, %v1019
  %v1021 = vsel %vm97, %v909, %v907
  %v1022 = vsel %vm100, %v911, %v1021
  %v1023 = vsel %vm103, %v912, %v1022
  %v1024 = vsel %vm106, %v42, %v1023
  %v1025 = vsel %vm109, %v915, %v1024
  %v1026 = vsel %vm112, %v917, %v1025
  %v1027 = vsel %vm115, %v919, %v1026
  %v1028 = vsel %vm97, %v923, %v921
  %v1029 = vsel %vm100, %v925, %v1028
  %v1030 = vsel %vm103, %v926, %v1029
  %v1031 = vsel %vm106, %v50, %v1030
  %v1032 = vsel %vm109, %v929, %v1031
  %v1033 = vsel %vm112, %v931, %v1032
  %v1034 = vsel %vm115, %v933, %v1033
  %v1035 = vsel %vm97, %v937, %v935
  %v1036 = vsel %vm100, %v939, %v1035
  %v1037 = vsel %vm103, %v940, %v1036
  %v1038 = vsel %vm106, %v58, %v1037
  %v1039 = vsel %vm109, %v943, %v1038
  %v1040 = vsel %vm112, %v945, %v1039
  %v1041 = vsel %vm115, %v947, %v1040
  %v1042 = vsel %vm97, %v951, %v949
  %1043 = vrot.lane.b32.xlu0 %v1020, 50
  %v1044 = vpop.permute.xlu0 %1043
  %1045 = vrot.lane.b32.xlu0 %v1027, 50
  %v1046 = vpop.permute.xlu0 %1045
  %1047 = vrot.lane.b32.xlu0 %v1034, 50
  %v1048 = vpop.permute.xlu0 %1047
  %1049 = vrot.lane.b32.xlu0 %v1041, 50
  %v1050 = vpop.permute.xlu0 %1049
  %1051 = vrot.lane.b32.xlu0 %v1042, 50
  %v1052 = vpop.permute.xlu0 %1051
  %v1058 = vsel %vm626, %v389, %v1044
  %v1059 = vsel %vm626, %v390, %v1046
  %v1060 = vsel %vm626, %v391, %v1048
  %v1061 = vsel %vm626, %v392, %v1050
  %v1062 = vsel %vm626, %v393, %v1052
  %v1063 = vsel %vm106, %v898, %v897
  %v1064 = vsel %vm109, %v34, %v1063
  %v1065 = vsel %vm112, %v901, %v1064
  %v1066 = vsel %vm115, %v903, %v1065
  %v1067 = vsel %vm97, %v907, %v905
  %v1068 = vsel %vm100, %v909, %v1067
  %v1069 = vsel %vm103, %v911, %v1068
  %v1070 = vsel %vm106, %v912, %v1069
  %v1071 = vsel %vm109, %v42, %v1070
  %v1072 = vsel %vm112, %v915, %v1071
  %v1073 = vsel %vm115, %v917, %v1072
  %v1074 = vsel %vm97, %v921, %v919
  %v1075 = vsel %vm100, %v923, %v1074
  %v1076 = vsel %vm103, %v925, %v1075
  %v1077 = vsel %vm106, %v926, %v1076
  %v1078 = vsel %vm109, %v50, %v1077
  %v1079 = vsel %vm112, %v929, %v1078
  %v1080 = vsel %vm115, %v931, %v1079
  %v1081 = vsel %vm97, %v935, %v933
  %v1082 = vsel %vm100, %v937, %v1081
  %v1083 = vsel %vm103, %v939, %v1082
  %v1084 = vsel %vm106, %v940, %v1083
  %v1085 = vsel %vm109, %v58, %v1084
  %v1086 = vsel %vm112, %v943, %v1085
  %v1087 = vsel %vm115, %v945, %v1086
  %v1088 = vsel %vm97, %v949, %v947
  %v1089 = vsel %vm100, %v951, %v1088
  %1090 = vrot.lane.b32.xlu0 %v1066, 50
  %v1091 = vpop.permute.xlu0 %1090
  %1092 = vrot.lane.b32.xlu0 %v1073, 50
  %v1093 = vpop.permute.xlu0 %1092
  %1094 = vrot.lane.b32.xlu0 %v1080, 50
  %v1095 = vpop.permute.xlu0 %1094
  %1096 = vrot.lane.b32.xlu0 %v1087, 50
  %v1097 = vpop.permute.xlu0 %1096
  %1098 = vrot.lane.b32.xlu0 %v1089, 50
  %v1099 = vpop.permute.xlu0 %1098
  %v1105 = vsel %vm626, %v468, %v1091
  %v1106 = vsel %vm626, %v469, %v1093
  %v1107 = vsel %vm626, %v470, %v1095
  %v1108 = vsel %vm626, %v471, %v1097
  %v1109 = vsel %vm626, %v472, %v1099
  %v1115 = vrot.slane %v1011, 1
  %v1116 = vrot.slane %v1012, 1
  %v1117 = vsel %vm557, %v1115, %v1116
  %v1118 = vrot.slane %v1013, 1
  %v1119 = vsel %vm557, %v1116, %v1118
  %v1120 = vrot.slane %v1014, 1
  %v1121 = vsel %vm557, %v1118, %v1120
  %v1122 = vrot.slane %v1015, 1
  %v1123 = vsel %vm557, %v1120, %v1122
  %v1129 = vrot.slane %v1058, 2
  %v1130 = vrot.slane %v1059, 2
  %v1131 = vsel %vm572, %v1129, %v1130
  %v1132 = vrot.slane %v1060, 2
  %v1133 = vsel %vm572, %v1130, %v1132
  %v1134 = vrot.slane %v1061, 2
  %v1135 = vsel %vm572, %v1132, %v1134
  %v1136 = vrot.slane %v1062, 2
  %v1137 = vsel %vm572, %v1134, %v1136
  %v1143 = vrot.slane %v1105, 3
  %v1144 = vrot.slane %v1106, 3
  %v1145 = vsel %vm587, %v1143, %v1144
  %v1146 = vrot.slane %v1107, 3
  %v1147 = vsel %vm587, %v1144, %v1146
  %v1148 = vrot.slane %v1108, 3
  %v1149 = vsel %vm587, %v1146, %v1148
  %v1150 = vrot.slane %v1109, 3
  %v1151 = vsel %vm587, %v1148, %v1150
  %v1152 = vld [vmem:[%s3] sm:$0xff]
  %v1153 = vld [vmem:[%s3 + $0x8] sm:$0xff]
  %v1154 = vld [vmem:[%s3 + $0x10] sm:$0xff]
  %v1155 = vld [vmem:[%s3 + $0x18] sm:$0xff]
  %v1156 = vld [vmem:[%s3 + $0x20] sm:$0xff]
  %v1157 = vld [vmem:[%s3 + $0x28] sm:$0xff]
  %v1158 = vld [vmem:[%s3 + $0x30] sm:$0xff]
  %v1159 = vld [vmem:[%s3 + $0x38] sm:$0xff]
  %v1160 = vld [vmem:[%s3 + $0x40] sm:$0xff]
  %v1161 = vld [vmem:[%s3 + $0x48] sm:$0x7]
  %v1162 = vld [vmem:[%s4] sm:$0x1]
  %v1164 = vlaneseq
  %v1165 = vshrl.u32 %v1164, 7
  %v1166 = vsub.s32 0, %v1165
  %v1167 = vrot.slane %v1162, %v1166
  %vm1169 = vcmask 613376
  %v1171 = vsel %vm1169, %v965, 0
  %v1174 = vsel %vm1169, %v966, 0
  %v1177 = vsel %vm1169, %v967, 0
  %v1180 = vsel %vm1169, %v968, 0
  %v1182 = vsel %vm1169, %v1117, 0
  %v1184 = vsel %vm1169, %v1119, 0
  %v1186 = vsel %vm1169, %v1121, 0
  %v1188 = vsel %vm1169, %v1123, 0
  %v1190 = vsel %vm1169, %v1131, 0
  %v1192 = vsel %vm1169, %v1133, 0
  %v1194 = vsel %vm1169, %v1135, 0
  %v1196 = vsel %vm1169, %v1137, 0
  %v1198 = vsel %vm1169, %v1145, 0
  %v1200 = vsel %vm1169, %v1147, 0
  %v1202 = vsel %vm1169, %v1149, 0
  %v1204 = vsel %vm1169, %v1151, 0
  %vm1206 = vcmask 1042432
  %v1208 = vsel %vm1206, %v1161, 0
  %1210 = vmatprep.subr.mxu0 0.0
  %1211 = vmatpush1.msra.mxu0 %v1152
  %1212 = vmatprep.subr.mxu0 0.0
  %1213 = vmatpush1.msra.mxu0 %v1153
  %1214 = vmatprep.subr.mxu0 0.0
  %1215 = vmatpush1.msra.mxu0 %v1154
  %1216 = vmatprep.subr.mxu0 0.0
  %1217 = vmatpush1.msra.mxu0 %v1155
  %1218 = vmatprep.subr.mxu0 0.0
  %1219 = vmatpush1.msra.mxu0 %v1156
  %1220 = vmatprep.subr.mxu0 0.0
  %1221 = vmatpush1.msra.mxu0 %v1157
  %1222 = vmatprep.subr.mxu0 0.0
  %1223 = vmatpush1.msra.mxu0 %v1158
  %1224 = vmatprep.subr.mxu0 0.0
  %1225 = vmatpush1.msra.mxu0 %v1159
  %1226 = vmatprep.subr.mxu0 0.0
  %1227 = vmatpush1.msra.mxu0 %v1160
  %1228 = vmatprep.subr.mxu0 0.0
  %1229 = vmatpush1.msra.mxu0 %v1208
  %1230 = vmatprep.subr.mxu0 0.0
  %1231 = vmatpush1.msra.mxu0 0.0
  %1232 = vmatprep.subr.mxu0 0.0
  %1233 = vmatpush1.msra.mxu0 0.0
  %1234 = vmatprep.subr.mxu0 0.0
  %1235 = vmatpush1.msra.mxu0 0.0
  %1236 = vmatprep.subr.mxu0 0.0
  %1237 = vmatpush1.msra.mxu0 0.0
  %1238 = vmatprep.subr.mxu0 0.0
  %1239 = vmatpush1.msra.mxu0 0.0
  %1240 = vmatprep.subr.mxu0 0.0
  %1241 = vmatpush1.msra.mxu0 0.0
  %1242 = vmatprep.subr.mxu0 0.0
  %1243 = vmatpush1.msra.mxu0 0.0
  %1244 = vmatprep.subr.mxu0 0.0
  %1245 = vmatpush1.msra.mxu0 0.0
  %1246 = vmatprep.subr.mxu0 0.0
  %1247 = vmatpush1.msra.mxu0 0.0
  %1248 = vmatprep.subr.mxu0 0.0
  %1249 = vmatpush1.msra.mxu0 0.0
  %1250 = vmatprep.subr.mxu0 0.0
  %1251 = vmatpush1.msra.mxu0 0.0
  %1252 = vmatprep.subr.mxu0 0.0
  %1253 = vmatpush1.msra.mxu0 0.0
  %1254 = vmatprep.subr.mxu0 0.0
  %1255 = vmatpush1.msra.mxu0 0.0
  %1256 = vmatprep.subr.mxu0 0.0
  %1257 = vmatpush1.msra.mxu0 0.0
  %1258 = vmatprep.subr.mxu0 0.0
  %1259 = vmatpush1.msra.mxu0 0.0
  %1260 = vmatprep.subr.mxu0 0.0
  %1261 = vmatpush1.msra.mxu0 0.0
  %1262 = vmatprep.subr.mxu0 0.0
  %1263 = vmatpush1.msra.mxu0 0.0
  %1264 = vmatprep.subr.mxu0 0.0
  %1265 = vmatpush1.msra.mxu0 0.0
  %1266 = vmatprep.subr.mxu0 0.0
  %1267 = vmatpush1.msra.mxu0 0.0
  %1268 = vmatprep.subr.mxu0 0.0
  %1269 = vmatpush1.msra.mxu0 0.0
  %1270 = vmatprep.subr.mxu0 0.0
  %1271 = vmatpush1.msra.mxu0 0.0
  %1272 = vmatprep.subr.mxu0 0.0
  %1273 = vmatpush1.msra.mxu0 0.0
  %1274 = vmatprep.mubr.f32.mxu0 0.0
  %1275 = vmatmul.mubr.f32.gmra.mrb[0].mxu0 %v1171
  %v1276 = vpop.f32.mrb[0].mxu0
  %v1277 = vadd.f32 %v1167, %v1276
  %v1278 = vpop.f32.mrb[0].mxu0
  %1279 = vmatprep.mubr.f32.mxu0 0.0
  %1280 = vmatmul.mubr.f32.gmra.mrb[0].mxu0 %v1174
  %v1281 = vpop.f32.mrb[0].mxu0
  %v1282 = vadd.f32 %v1167, %v1281
  %v1283 = vpop.f32.mrb[0].mxu0
  %1284 = vmatprep.mubr.f32.mxu0 0.0
  %1285 = vmatmul.mubr.f32.gmra.mrb[0].mxu0 %v1177
  %v1286 = vpop.f32.mrb[0].mxu0
  %v1287 = vadd.f32 %v1167, %v1286
  %v1288 = vpop.f32.mrb[0].mxu0
  %1289 = vmatprep.mubr.f32.mxu0 0.0
  %1290 = vmatmul.mubr.f32.gmra.mrb[0].mxu0 %v1180
  %v1291 = vpop.f32.mrb[0].mxu0
  %v1292 = vadd.f32 %v1167, %v1291
  %v1293 = vpop.f32.mrb[0].mxu0
  %1294 = vmatprep.mubr.f32.mxu0 0.0
  %1295 = vmatmul.mubr.f32.gmra.mrb[0].mxu0 %v1182
  %v1296 = vpop.f32.mrb[0].mxu0
  %v1297 = vadd.f32 %v1167, %v1296
  %v1298 = vpop.f32.mrb[0].mxu0
  %1299 = vmatprep.mubr.f32.mxu0 0.0
  %1300 = vmatmul.mubr.f32.gmra.mrb[0].mxu0 %v1184
  %v1301 = vpop.f32.mrb[0].mxu0
  %v1302 = vadd.f32 %v1167, %v1301
  %v1303 = vpop.f32.mrb[0].mxu0
  %1304 = vmatprep.mubr.f32.mxu0 0.0
  %1305 = vmatmul.mubr.f32.gmra.mrb[0].mxu0 %v1186
  %v1306 = vpop.f32.mrb[0].mxu0
  %v1307 = vadd.f32 %v1167, %v1306
  %v1308 = vpop.f32.mrb[0].mxu0
  %1309 = vmatprep.mubr.f32.mxu0 0.0
  %1310 = vmatmul.mubr.f32.gmra.mrb[0].mxu0 %v1188
  %v1311 = vpop.f32.mrb[0].mxu0
  %v1312 = vadd.f32 %v1167, %v1311
  %v1313 = vpop.f32.mrb[0].mxu0
  %1314 = vmatprep.mubr.f32.mxu0 0.0
  %1315 = vmatmul.mubr.f32.gmra.mrb[0].mxu0 %v1190
  %v1316 = vpop.f32.mrb[0].mxu0
  %v1317 = vadd.f32 %v1167, %v1316
  %v1318 = vpop.f32.mrb[0].mxu0
  %1319 = vmatprep.mubr.f32.mxu0 0.0
  %1320 = vmatmul.mubr.f32.gmra.mrb[0].mxu0 %v1192
  %v1321 = vpop.f32.mrb[0].mxu0
  %v1322 = vadd.f32 %v1167, %v1321
  %v1323 = vpop.f32.mrb[0].mxu0
  %1324 = vmatprep.mubr.f32.mxu0 0.0
  %1325 = vmatmul.mubr.f32.gmra.mrb[0].mxu0 %v1194
  %v1326 = vpop.f32.mrb[0].mxu0
  %v1327 = vadd.f32 %v1167, %v1326
  %v1328 = vpop.f32.mrb[0].mxu0
  %1329 = vmatprep.mubr.f32.mxu0 0.0
  %1330 = vmatmul.mubr.f32.gmra.mrb[0].mxu0 %v1196
  %v1331 = vpop.f32.mrb[0].mxu0
  %v1332 = vadd.f32 %v1167, %v1331
  %v1333 = vpop.f32.mrb[0].mxu0
  %1334 = vmatprep.mubr.f32.mxu0 0.0
  %1335 = vmatmul.mubr.f32.gmra.mrb[0].mxu0 %v1198
  %v1336 = vpop.f32.mrb[0].mxu0
  %v1337 = vadd.f32 %v1167, %v1336
  %v1338 = vpop.f32.mrb[0].mxu0
  %1339 = vmatprep.mubr.f32.mxu0 0.0
  %1340 = vmatmul.mubr.f32.gmra.mrb[0].mxu0 %v1200
  %v1341 = vpop.f32.mrb[0].mxu0
  %v1342 = vadd.f32 %v1167, %v1341
  %v1343 = vpop.f32.mrb[0].mxu0
  %1344 = vmatprep.mubr.f32.mxu0 0.0
  %1345 = vmatmul.mubr.f32.gmra.mrb[0].mxu0 %v1202
  %v1346 = vpop.f32.mrb[0].mxu0
  %v1347 = vadd.f32 %v1167, %v1346
  %v1348 = vpop.f32.mrb[0].mxu0
  %1349 = vmatprep.mubr.f32.mxu0 0.0
  %1350 = vmatmul.mubr.f32.gmra.mrb[0].mxu0 %v1204
  %v1351 = vpop.f32.mrb[0].mxu0
  %v1352 = vadd.f32 %v1167, %v1351
  %v1353 = vpop.f32.mrb[0].mxu0
  %1354 = vdwg.mxu0
  %v1355 = vtanh.pop %v1277
  %v1356 = vtanh.pop %v1282
  %v1357 = vtanh.pop %v1287
  %v1358 = vtanh.pop %v1292
  %v1359 = vtanh.pop %v1297
  %v1360 = vtanh.pop %v1302
  %v1361 = vtanh.pop %v1307
  %v1362 = vtanh.pop %v1312
  %v1363 = vtanh.pop %v1317
  %v1364 = vtanh.pop %v1322
  %v1365 = vtanh.pop %v1327
  %v1366 = vtanh.pop %v1332
  %v1367 = vtanh.pop %v1337
  %v1368 = vtanh.pop %v1342
  %v1369 = vtanh.pop %v1347
  %v1370 = vtanh.pop %v1352
  %v1371 = vsel %vm860, %v1355, -inf
  %v1372 = vsel %vm860, %v1359, -inf
  %v1373 = vmax.f32 %v1371, %v1372
  %v1374 = vsel %vm860, %v1363, -inf
  %v1375 = vmax.f32 %v1373, %v1374
  %v1376 = vsel %vm860, %v1367, -inf
  %v1377 = vmax.f32 %v1375, %v1376
  %v1378 = vsel %vm860, %v1356, -inf
  %v1379 = vsel %vm860, %v1360, -inf
  %v1380 = vmax.f32 %v1378, %v1379
  %v1381 = vsel %vm860, %v1364, -inf
  %v1382 = vmax.f32 %v1380, %v1381
  %v1383 = vsel %vm860, %v1368, -inf
  %v1384 = vmax.f32 %v1382, %v1383
  %v1385 = vsel %vm860, %v1357, -inf
  %v1386 = vsel %vm860, %v1361, -inf
  %v1387 = vmax.f32 %v1385, %v1386
  %v1388 = vsel %vm860, %v1365, -inf
  %v1389 = vmax.f32 %v1387, %v1388
  %v1390 = vsel %vm860, %v1369, -inf
  %v1391 = vmax.f32 %v1389, %v1390
  %v1392 = vsel %vm860, %v1358, -inf
  %v1393 = vsel %vm860, %v1362, -inf
  %v1394 = vmax.f32 %v1392, %v1393
  %v1395 = vsel %vm860, %v1366, -inf
  %v1396 = vmax.f32 %v1394, %v1395
  %v1397 = vsel %vm860, %v1370, -inf
  %v1398 = vmax.f32 %v1396, %v1397
  %v1399 = vrot.slane %v32, 3
  %v1400 = vrot.slane %v33, 2
  %v1401 = vsel %vm97, %v1400, %v1399
  %v1402 = vrot.slane %v34, 1
  %v1403 = vsel %vm100, %v1402, %v1401
  %v1404 = vsel %vm103, %v35, %v1403
  %v1405 = vrot.slane %v36, 7
  %v1406 = vsel %vm106, %v1405, %v1404
  %v1407 = vrot.slane %v37, 6
  %v1408 = vsel %vm109, %v1407, %v1406
  %v1409 = vrot.slane %v38, 5
  %v1410 = vsel %vm112, %v1409, %v1408
  %v1411 = vrot.slane %v39, 4
  %v1412 = vsel %vm115, %v1411, %v1410
  %v1413 = vrot.slane %v40, 3
  %v1414 = vrot.slane %v41, 2
  %v1415 = vsel %vm97, %v1414, %v1413
  %v1416 = vrot.slane %v42, 1
  %v1417 = vsel %vm100, %v1416, %v1415
  %v1418 = vsel %vm103, %v43, %v1417
  %v1419 = vrot.slane %v44, 7
  %v1420 = vsel %vm106, %v1419, %v1418
  %v1421 = vrot.slane %v45, 6
  %v1422 = vsel %vm109, %v1421, %v1420
  %v1423 = vrot.slane %v46, 5
  %v1424 = vsel %vm112, %v1423, %v1422
  %v1425 = vrot.slane %v47, 4
  %v1426 = vsel %vm115, %v1425, %v1424
  %v1427 = vrot.slane %v48, 3
  %v1428 = vrot.slane %v49, 2
  %v1429 = vsel %vm97, %v1428, %v1427
  %v1430 = vrot.slane %v50, 1
  %v1431 = vsel %vm100, %v1430, %v1429
  %v1432 = vsel %vm103, %v51, %v1431
  %v1433 = vrot.slane %v52, 7
  %v1434 = vsel %vm106, %v1433, %v1432
  %v1435 = vrot.slane %v53, 6
  %v1436 = vsel %vm109, %v1435, %v1434
  %v1437 = vrot.slane %v54, 5
  %v1438 = vsel %vm112, %v1437, %v1436
  %v1439 = vrot.slane %v55, 4
  %v1440 = vsel %vm115, %v1439, %v1438
  %v1441 = vrot.slane %v56, 3
  %v1442 = vrot.slane %v57, 2
  %v1443 = vsel %vm97, %v1442, %v1441
  %v1444 = vrot.slane %v58, 1
  %v1445 = vsel %vm100, %v1444, %v1443
  %v1446 = vsel %vm103, %v59, %v1445
  %v1447 = vrot.slane %v60, 7
  %v1448 = vsel %vm106, %v1447, %v1446
  %v1449 = vrot.slane %v61, 6
  %v1450 = vsel %vm109, %v1449, %v1448
  %v1451 = vrot.slane %v62, 5
  %v1452 = vsel %vm112, %v1451, %v1450
  %v1453 = vrot.slane %v63, 4
  %v1454 = vsel %vm115, %v1453, %v1452
  %1455 = vrot.lane.b32.xlu0 %v1412, 75
  %v1456 = vpop.permute.xlu0 %1455
  %1457 = vrot.lane.b32.xlu0 %v1426, 75
  %v1458 = vpop.permute.xlu0 %1457
  %1459 = vrot.lane.b32.xlu0 %v1440, 75
  %v1460 = vpop.permute.xlu0 %1459
  %1461 = vrot.lane.b32.xlu0 %v1454, 75
  %v1462 = vpop.permute.xlu0 %1461
  %v1467 = vsel %vm1169, %v965, %v1456
  %v1468 = vsel %vm1169, %v966, %v1458
  %v1469 = vsel %vm1169, %v967, %v1460
  %v1470 = vsel %vm1169, %v968, %v1462
  %v1471 = vsel %vm100, %v1400, %v1399
  %v1472 = vsel %vm103, %v1402, %v1471
  %v1473 = vsel %vm106, %v35, %v1472
  %v1474 = vsel %vm109, %v1405, %v1473
  %v1475 = vsel %vm112, %v1407, %v1474
  %v1476 = vsel %vm115, %v1409, %v1475
  %v1477 = vsel %vm97, %v1413, %v1411
  %v1478 = vsel %vm100, %v1414, %v1477
  %v1479 = vsel %vm103, %v1416, %v1478
  %v1480 = vsel %vm106, %v43, %v1479
  %v1481 = vsel %vm109, %v1419, %v1480
  %v1482 = vsel %vm112, %v1421, %v1481
  %v1483 = vsel %vm115, %v1423, %v1482
  %v1484 = vsel %vm97, %v1427, %v1425
  %v1485 = vsel %vm100, %v1428, %v1484
  %v1486 = vsel %vm103, %v1430, %v1485
  %v1487 = vsel %vm106, %v51, %v1486
  %v1488 = vsel %vm109, %v1433, %v1487
  %v1489 = vsel %vm112, %v1435, %v1488
  %v1490 = vsel %vm115, %v1437, %v1489
  %v1491 = vsel %vm97, %v1441, %v1439
  %v1492 = vsel %vm100, %v1442, %v1491
  %v1493 = vsel %vm103, %v1444, %v1492
  %v1494 = vsel %vm106, %v59, %v1493
  %v1495 = vsel %vm109, %v1447, %v1494
  %v1496 = vsel %vm112, %v1449, %v1495
  %v1497 = vsel %vm115, %v1451, %v1496
  %1498 = vrot.lane.b32.xlu0 %v1476, 75
  %v1499 = vpop.permute.xlu0 %1498
  %1500 = vrot.lane.b32.xlu0 %v1483, 75
  %v1501 = vpop.permute.xlu0 %1500
  %1502 = vrot.lane.b32.xlu0 %v1490, 75
  %v1503 = vpop.permute.xlu0 %1502
  %1504 = vrot.lane.b32.xlu0 %v1497, 75
  %v1505 = vpop.permute.xlu0 %1504
  %1506 = vrot.lane.b32.xlu0 %v1453, 75
  %v1507 = vpop.permute.xlu0 %1506
  %v1513 = vsel %vm1169, %v1011, %v1499
  %v1514 = vsel %vm1169, %v1012, %v1501
  %v1515 = vsel %vm1169, %v1013, %v1503
  %v1516 = vsel %vm1169, %v1014, %v1505
  %v1517 = vsel %vm1169, %v1015, %v1507
  %v1518 = vsel %vm103, %v1400, %v1399
  %v1519 = vsel %vm106, %v1402, %v1518
  %v1520 = vsel %vm109, %v35, %v1519
  %v1521 = vsel %vm112, %v1405, %v1520
  %v1522 = vsel %vm115, %v1407, %v1521
  %v1523 = vsel %vm97, %v1411, %v1409
  %v1524 = vsel %vm100, %v1413, %v1523
  %v1525 = vsel %vm103, %v1414, %v1524
  %v1526 = vsel %vm106, %v1416, %v1525
  %v1527 = vsel %vm109, %v43, %v1526
  %v1528 = vsel %vm112, %v1419, %v1527
  %v1529 = vsel %vm115, %v1421, %v1528
  %v1530 = vsel %vm97, %v1425, %v1423
  %v1531 = vsel %vm100, %v1427, %v1530
  %v1532 = vsel %vm103, %v1428, %v1531
  %v1533 = vsel %vm106, %v1430, %v1532
  %v1534 = vsel %vm109, %v51, %v1533
  %v1535 = vsel %vm112, %v1433, %v1534
  %v1536 = vsel %vm115, %v1435, %v1535
  %v1537 = vsel %vm97, %v1439, %v1437
  %v1538 = vsel %vm100, %v1441, %v1537
  %v1539 = vsel %vm103, %v1442, %v1538
  %v1540 = vsel %vm106, %v1444, %v1539
  %v1541 = vsel %vm109, %v59, %v1540
  %v1542 = vsel %vm112, %v1447, %v1541
  %v1543 = vsel %vm115, %v1449, %v1542
  %v1544 = vsel %vm97, %v1453, %v1451
  %1545 = vrot.lane.b32.xlu0 %v1522, 75
  %v1546 = vpop.permute.xlu0 %1545
  %1547 = vrot.lane.b32.xlu0 %v1529, 75
  %v1548 = vpop.permute.xlu0 %1547
  %1549 = vrot.lane.b32.xlu0 %v1536, 75
  %v1550 = vpop.permute.xlu0 %1549
  %1551 = vrot.lane.b32.xlu0 %v1543, 75
  %v1552 = vpop.permute.xlu0 %1551
  %1553 = vrot.lane.b32.xlu0 %v1544, 75
  %v1554 = vpop.permute.xlu0 %1553
  %v1560 = vsel %vm1169, %v1058, %v1546
  %v1561 = vsel %vm1169, %v1059, %v1548
  %v1562 = vsel %vm1169, %v1060, %v1550
  %v1563 = vsel %vm1169, %v1061, %v1552
  %v1564 = vsel %vm1169, %v1062, %v1554
  %v1570 = vrot.slane %v1513, 1
  %v1571 = vrot.slane %v1514, 1
  %v1572 = vsel %vm557, %v1570, %v1571
  %v1573 = vrot.slane %v1515, 1
  %v1574 = vsel %vm557, %v1571, %v1573
  %v1575 = vrot.slane %v1516, 1
  %v1576 = vsel %vm557, %v1573, %v1575
  %v1577 = vrot.slane %v1517, 1
  %v1578 = vsel %vm557, %v1575, %v1577
  %v1584 = vrot.slane %v1560, 2
  %v1585 = vrot.slane %v1561, 2
  %v1586 = vsel %vm572, %v1584, %v1585
  %v1587 = vrot.slane %v1562, 2
  %v1588 = vsel %vm572, %v1585, %v1587
  %v1589 = vrot.slane %v1563, 2
  %v1590 = vsel %vm572, %v1587, %v1589
  %v1591 = vrot.slane %v1564, 2
  %v1592 = vsel %vm572, %v1589, %v1591
  %v1593 = vld [vmem:[%s5] sm:$0xff]
  %v1594 = vld [vmem:[%s5 + $0x8] sm:$0xff]
  %v1595 = vld [vmem:[%s5 + $0x10] sm:$0xff]
  %v1596 = vld [vmem:[%s5 + $0x18] sm:$0xff]
  %v1597 = vld [vmem:[%s5 + $0x20] sm:$0xff]
  %v1598 = vld [vmem:[%s5 + $0x28] sm:$0xff]
  %v1599 = vld [vmem:[%s5 + $0x30] sm:$0xff]
  %v1600 = vld [vmem:[%s5 + $0x38] sm:$0xff]
  %v1601 = vld [vmem:[%s5 + $0x40] sm:$0xff]
  %v1602 = vld [vmem:[%s5 + $0x48] sm:$0xff]
  %v1603 = vld [vmem:[%s5 + $0x50] sm:$0xff]
  %v1604 = vld [vmem:[%s5 + $0x58] sm:$0xff]
  %v1605 = vld [vmem:[%s5 + $0x60] sm:$0xf]
  %v1606 = vld [vmem:[%s6] sm:$0x1]
  %v1608 = vlaneseq
  %v1609 = vshrl.u32 %v1608, 7
  %v1610 = vsub.s32 0, %v1609
  %v1611 = vrot.slane %v1606, %v1610
  %vm1613 = vcmask 818176
  %v1615 = vsel %vm1613, %v1467, 0
  %v1618 = vsel %vm1613, %v1468, 0
  %v1621 = vsel %vm1613, %v1469, 0
  %v1624 = vsel %vm1613, %v1470, 0
  %v1626 = vsel %vm1613, %v1572, 0
  %v1628 = vsel %vm1613, %v1574, 0
  %v1630 = vsel %vm1613, %v1576, 0
  %v1632 = vsel %vm1613, %v1578, 0
  %v1634 = vsel %vm1613, %v1586, 0
  %v1636 = vsel %vm1613, %v1588, 0
  %v1638 = vsel %vm1613, %v1590, 0
  %v1640 = vsel %vm1613, %v1592, 0
  %v1643 = vsel %vm602, %v1605, 0
  %1645 = vmatprep.subr.mxu0 0.0
  %1646 = vmatpush1.msra.mxu0 %v1593
  %1647 = vmatprep.subr.mxu0 0.0
  %1648 = vmatpush1.msra.mxu0 %v1594
  %1649 = vmatprep.subr.mxu0 0.0
  %1650 = vmatpush1.msra.mxu0 %v1595
  %1651 = vmatprep.subr.mxu0 0.0
  %1652 = vmatpush1.msra.mxu0 %v1596
  %1653 = vmatprep.subr.mxu0 0.0
  %1654 = vmatpush1.msra.mxu0 %v1597
  %1655 = vmatprep.subr.mxu0 0.0
  %1656 = vmatpush1.msra.mxu0 %v1598
  %1657 = vmatprep.subr.mxu0 0.0
  %1658 = vmatpush1.msra.mxu0 %v1599
  %1659 = vmatprep.subr.mxu0 0.0
  %1660 = vmatpush1.msra.mxu0 %v1600
  %1661 = vmatprep.subr.mxu0 0.0
  %1662 = vmatpush1.msra.mxu0 %v1601
  %1663 = vmatprep.subr.mxu0 0.0
  %1664 = vmatpush1.msra.mxu0 %v1602
  %1665 = vmatprep.subr.mxu0 0.0
  %1666 = vmatpush1.msra.mxu0 %v1603
  %1667 = vmatprep.subr.mxu0 0.0
  %1668 = vmatpush1.msra.mxu0 %v1604
  %1669 = vmatprep.subr.mxu0 0.0
  %1670 = vmatpush1.msra.mxu0 %v1643
  %1671 = vmatprep.subr.mxu0 0.0
  %1672 = vmatpush1.msra.mxu0 0.0
  %1673 = vmatprep.subr.mxu0 0.0
  %1674 = vmatpush1.msra.mxu0 0.0
  %1675 = vmatprep.subr.mxu0 0.0
  %1676 = vmatpush1.msra.mxu0 0.0
  %1677 = vmatprep.subr.mxu0 0.0
  %1678 = vmatpush1.msra.mxu0 0.0
  %1679 = vmatprep.subr.mxu0 0.0
  %1680 = vmatpush1.msra.mxu0 0.0
  %1681 = vmatprep.subr.mxu0 0.0
  %1682 = vmatpush1.msra.mxu0 0.0
  %1683 = vmatprep.subr.mxu0 0.0
  %1684 = vmatpush1.msra.mxu0 0.0
  %1685 = vmatprep.subr.mxu0 0.0
  %1686 = vmatpush1.msra.mxu0 0.0
  %1687 = vmatprep.subr.mxu0 0.0
  %1688 = vmatpush1.msra.mxu0 0.0
  %1689 = vmatprep.subr.mxu0 0.0
  %1690 = vmatpush1.msra.mxu0 0.0
  %1691 = vmatprep.subr.mxu0 0.0
  %1692 = vmatpush1.msra.mxu0 0.0
  %1693 = vmatprep.subr.mxu0 0.0
  %1694 = vmatpush1.msra.mxu0 0.0
  %1695 = vmatprep.subr.mxu0 0.0
  %1696 = vmatpush1.msra.mxu0 0.0
  %1697 = vmatprep.subr.mxu0 0.0
  %1698 = vmatpush1.msra.mxu0 0.0
  %1699 = vmatprep.subr.mxu0 0.0
  %1700 = vmatpush1.msra.mxu0 0.0
  %1701 = vmatprep.subr.mxu0 0.0
  %1702 = vmatpush1.msra.mxu0 0.0
  %1703 = vmatprep.subr.mxu0 0.0
  %1704 = vmatpush1.msra.mxu0 0.0
  %1705 = vmatprep.subr.mxu0 0.0
  %1706 = vmatpush1.msra.mxu0 0.0
  %1707 = vmatprep.subr.mxu0 0.0
  %1708 = vmatpush1.msra.mxu0 0.0
  %1709 = vmatprep.mubr.f32.mxu0 0.0
  %1710 = vmatmul.mubr.f32.gmra.mrb[0].mxu0 %v1615
  %v1711 = vpop.f32.mrb[0].mxu0
  %v1712 = vadd.f32 %v1611, %v1711
  %v1713 = vpop.f32.mrb[0].mxu0
  %1714 = vmatprep.mubr.f32.mxu0 0.0
  %1715 = vmatmul.mubr.f32.gmra.mrb[0].mxu0 %v1618
  %v1716 = vpop.f32.mrb[0].mxu0
  %v1717 = vadd.f32 %v1611, %v1716
  %v1718 = vpop.f32.mrb[0].mxu0
  %1719 = vmatprep.mubr.f32.mxu0 0.0
  %1720 = vmatmul.mubr.f32.gmra.mrb[0].mxu0 %v1621
  %v1721 = vpop.f32.mrb[0].mxu0
  %v1722 = vadd.f32 %v1611, %v1721
  %v1723 = vpop.f32.mrb[0].mxu0
  %1724 = vmatprep.mubr.f32.mxu0 0.0
  %1725 = vmatmul.mubr.f32.gmra.mrb[0].mxu0 %v1624
  %v1726 = vpop.f32.mrb[0].mxu0
  %v1727 = vadd.f32 %v1611, %v1726
  %v1728 = vpop.f32.mrb[0].mxu0
  %1729 = vmatprep.mubr.f32.mxu0 0.0
  %1730 = vmatmul.mubr.f32.gmra.mrb[0].mxu0 %v1626
  %v1731 = vpop.f32.mrb[0].mxu0
  %v1732 = vadd.f32 %v1611, %v1731
  %v1733 = vpop.f32.mrb[0].mxu0
  %1734 = vmatprep.mubr.f32.mxu0 0.0
  %1735 = vmatmul.mubr.f32.gmra.mrb[0].mxu0 %v1628
  %v1736 = vpop.f32.mrb[0].mxu0
  %v1737 = vadd.f32 %v1611, %v1736
  %v1738 = vpop.f32.mrb[0].mxu0
  %1739 = vmatprep.mubr.f32.mxu0 0.0
  %1740 = vmatmul.mubr.f32.gmra.mrb[0].mxu0 %v1630
  %v1741 = vpop.f32.mrb[0].mxu0
  %v1742 = vadd.f32 %v1611, %v1741
  %v1743 = vpop.f32.mrb[0].mxu0
  %1744 = vmatprep.mubr.f32.mxu0 0.0
  %1745 = vmatmul.mubr.f32.gmra.mrb[0].mxu0 %v1632
  %v1746 = vpop.f32.mrb[0].mxu0
  %v1747 = vadd.f32 %v1611, %v1746
  %v1748 = vpop.f32.mrb[0].mxu0
  %1749 = vmatprep.mubr.f32.mxu0 0.0
  %1750 = vmatmul.mubr.f32.gmra.mrb[0].mxu0 %v1634
  %v1751 = vpop.f32.mrb[0].mxu0
  %v1752 = vadd.f32 %v1611, %v1751
  %v1753 = vpop.f32.mrb[0].mxu0
  %1754 = vmatprep.mubr.f32.mxu0 0.0
  %1755 = vmatmul.mubr.f32.gmra.mrb[0].mxu0 %v1636
  %v1756 = vpop.f32.mrb[0].mxu0
  %v1757 = vadd.f32 %v1611, %v1756
  %v1758 = vpop.f32.mrb[0].mxu0
  %1759 = vmatprep.mubr.f32.mxu0 0.0
  %1760 = vmatmul.mubr.f32.gmra.mrb[0].mxu0 %v1638
  %v1761 = vpop.f32.mrb[0].mxu0
  %v1762 = vadd.f32 %v1611, %v1761
  %v1763 = vpop.f32.mrb[0].mxu0
  %1764 = vmatprep.mubr.f32.mxu0 0.0
  %1765 = vmatmul.mubr.f32.gmra.mrb[0].mxu0 %v1640
  %v1766 = vpop.f32.mrb[0].mxu0
  %v1767 = vadd.f32 %v1611, %v1766
  %v1768 = vpop.f32.mrb[0].mxu0
  %1769 = vdwg.mxu0
  %v1770 = vtanh.pop %v1712
  %v1771 = vtanh.pop %v1717
  %v1772 = vtanh.pop %v1722
  %v1773 = vtanh.pop %v1727
  %v1774 = vtanh.pop %v1732
  %v1775 = vtanh.pop %v1737
  %v1776 = vtanh.pop %v1742
  %v1777 = vtanh.pop %v1747
  %v1778 = vtanh.pop %v1752
  %v1779 = vtanh.pop %v1757
  %v1780 = vtanh.pop %v1762
  %v1781 = vtanh.pop %v1767
  %v1782 = vsel %vm860, %v1770, -inf
  %v1783 = vsel %vm860, %v1774, -inf
  %v1784 = vmax.f32 %v1782, %v1783
  %v1785 = vsel %vm860, %v1778, -inf
  %v1786 = vmax.f32 %v1784, %v1785
  %v1787 = vsel %vm860, %v1771, -inf
  %v1788 = vsel %vm860, %v1775, -inf
  %v1789 = vmax.f32 %v1787, %v1788
  %v1790 = vsel %vm860, %v1779, -inf
  %v1791 = vmax.f32 %v1789, %v1790
  %v1792 = vsel %vm860, %v1772, -inf
  %v1793 = vsel %vm860, %v1776, -inf
  %v1794 = vmax.f32 %v1792, %v1793
  %v1795 = vsel %vm860, %v1780, -inf
  %v1796 = vmax.f32 %v1794, %v1795
  %v1797 = vsel %vm860, %v1773, -inf
  %v1798 = vsel %vm860, %v1777, -inf
  %v1799 = vmax.f32 %v1797, %v1798
  %v1800 = vsel %vm860, %v1781, -inf
  %v1801 = vmax.f32 %v1799, %v1800
  %1806 = vrot.lane.b32.xlu0 %v1377, 64
  %v1807 = vpop.permute.xlu0 %1806
  %1808 = vrot.lane.b32.xlu0 %v1384, 64
  %v1809 = vpop.permute.xlu0 %1808
  %1810 = vrot.lane.b32.xlu0 %v1391, 64
  %v1811 = vpop.permute.xlu0 %1810
  %1812 = vrot.lane.b32.xlu0 %v1398, 64
  %v1813 = vpop.permute.xlu0 %1812
  %v1818 = vsel %vm860, %v869, %v1807
  %v1819 = vsel %vm860, %v878, %v1809
  %v1820 = vsel %vm860, %v887, %v1811
  %v1821 = vsel %vm860, %v896, %v1813
  %v1822 = vld [vmem:[%s7] sm:$0xff]
  %v1823 = vld [vmem:[%s7 + $0x8] sm:$0xff]
  %v1824 = vld [vmem:[%s7 + $0x10] sm:$0xff]
  %v1825 = vld [vmem:[%s7 + $0x18] sm:$0xff]
  %v1826 = vld [vmem:[%s7 + $0x20] sm:$0xff]
  %v1827 = vld [vmem:[%s7 + $0x28] sm:$0xff]
  %v1828 = vld [vmem:[%s7 + $0x30] sm:$0xff]
  %v1829 = vld [vmem:[%s7 + $0x38] sm:$0xff]
  %v1830 = vld [vmem:[%s7 + $0x40] sm:$0xff]
  %v1831 = vld [vmem:[%s7 + $0x48] sm:$0xff]
  %v1832 = vld [vmem:[%s7 + $0x50] sm:$0xff]
  %v1833 = vld [vmem:[%s7 + $0x58] sm:$0xff]
  %v1834 = vld [vmem:[%s7 + $0x60] sm:$0xff]
  %v1835 = vld [vmem:[%s7 + $0x68] sm:$0xff]
  %v1836 = vld [vmem:[%s7 + $0x70] sm:$0xff]
  %v1837 = vld [vmem:[%s7 + $0x78] sm:$0xff]
  %v1838 = vld [vmem:[%s7 + $0x80] sm:$0xff]
  %v1839 = vld [vmem:[%s7 + $0x88] sm:$0xff]
  %v1840 = vld [vmem:[%s7 + $0x90] sm:$0xff]
  %v1841 = vld [vmem:[%s7 + $0x98] sm:$0xff]
  %v1842 = vld [vmem:[%s7 + $0xa0] sm:$0xff]
  %v1843 = vld [vmem:[%s7 + $0xa8] sm:$0xff]
  %v1844 = vld [vmem:[%s7 + $0xb0] sm:$0xff]
  %v1845 = vld [vmem:[%s7 + $0xb8] sm:$0xff]
  %v1846 = vld [vmem:[%s8] sm:$0x1]
  %v1848 = vlaneseq
  %v1849 = vshrl.u32 %v1848, 7
  %v1850 = vsub.s32 0, %v1849
  %v1851 = vrot.slane %v1846, %v1850
  %v1854 = vsel %vm860, %v1786, 0
  %v1857 = vsel %vm860, %v1791, 0
  %v1860 = vsel %vm860, %v1796, 0
  %v1863 = vsel %vm860, %v1801, 0
  %1865 = vmatprep.subr.mxu0 0.0
  %1866 = vmatpush1.msra.mxu0 %v1822
  %1867 = vmatprep.subr.mxu0 0.0
  %1868 = vmatpush1.msra.mxu0 %v1823
  %1869 = vmatprep.subr.mxu0 0.0
  %1870 = vmatpush1.msra.mxu0 %v1824
  %1871 = vmatprep.subr.mxu0 0.0
  %1872 = vmatpush1.msra.mxu0 %v1825
  %1873 = vmatprep.subr.mxu0 0.0
  %1874 = vmatpush1.msra.mxu0 %v1826
  %1875 = vmatprep.subr.mxu0 0.0
  %1876 = vmatpush1.msra.mxu0 %v1827
  %1877 = vmatprep.subr.mxu0 0.0
  %1878 = vmatpush1.msra.mxu0 %v1828
  %1879 = vmatprep.subr.mxu0 0.0
  %1880 = vmatpush1.msra.mxu0 %v1829
  %1881 = vmatprep.subr.mxu0 0.0
  %1882 = vmatpush1.msra.mxu0 %v1830
  %1883 = vmatprep.subr.mxu0 0.0
  %1884 = vmatpush1.msra.mxu0 %v1831
  %1885 = vmatprep.subr.mxu0 0.0
  %1886 = vmatpush1.msra.mxu0 %v1832
  %1887 = vmatprep.subr.mxu0 0.0
  %1888 = vmatpush1.msra.mxu0 %v1833
  %1889 = vmatprep.subr.mxu0 0.0
  %1890 = vmatpush1.msra.mxu0 %v1834
  %1891 = vmatprep.subr.mxu0 0.0
  %1892 = vmatpush1.msra.mxu0 %v1835
  %1893 = vmatprep.subr.mxu0 0.0
  %1894 = vmatpush1.msra.mxu0 %v1836
  %1895 = vmatprep.subr.mxu0 0.0
  %1896 = vmatpush1.msra.mxu0 %v1837
  %1897 = vmatprep.subr.mxu0 0.0
  %1898 = vmatpush1.msra.mxu0 %v1838
  %1899 = vmatprep.subr.mxu0 0.0
  %1900 = vmatpush1.msra.mxu0 %v1839
  %1901 = vmatprep.subr.mxu0 0.0
  %1902 = vmatpush1.msra.mxu0 %v1840
  %1903 = vmatprep.subr.mxu0 0.0
  %1904 = vmatpush1.msra.mxu0 %v1841
  %1905 = vmatprep.subr.mxu0 0.0
  %1906 = vmatpush1.msra.mxu0 %v1842
  %1907 = vmatprep.subr.mxu0 0.0
  %1908 = vmatpush1.msra.mxu0 %v1843
  %1909 = vmatprep.subr.mxu0 0.0
  %1910 = vmatpush1.msra.mxu0 %v1844
  %1911 = vmatprep.subr.mxu0 0.0
  %1912 = vmatpush1.msra.mxu0 %v1845
  %1913 = vmatprep.subr.mxu0 0.0
  %1914 = vmatpush1.msra.mxu0 0.0
  %1915 = vmatprep.subr.mxu0 0.0
  %1916 = vmatpush1.msra.mxu0 0.0
  %1917 = vmatprep.subr.mxu0 0.0
  %1918 = vmatpush1.msra.mxu0 0.0
  %1919 = vmatprep.subr.mxu0 0.0
  %1920 = vmatpush1.msra.mxu0 0.0
  %1921 = vmatprep.subr.mxu0 0.0
  %1922 = vmatpush1.msra.mxu0 0.0
  %1923 = vmatprep.subr.mxu0 0.0
  %1924 = vmatpush1.msra.mxu0 0.0
  %1925 = vmatprep.subr.mxu0 0.0
  %1926 = vmatpush1.msra.mxu0 0.0
  %1927 = vmatprep.subr.mxu0 0.0
  %1928 = vmatpush1.msra.mxu0 0.0
  %1929 = vmatprep.mubr.f32.mxu0 %v1854
  %1930 = vmatmul.mubr.f32.gmra.mrb[0].mxu0 %v1818
  %v1931 = vpop.f32.mrb[0].mxu0
  %v1932 = vadd.f32 %v1851, %v1931
  %v1933 = vpop.f32.mrb[0].mxu0
  %1934 = vmatprep.mubr.f32.mxu0 %v1857
  %1935 = vmatmul.mubr.f32.gmra.mrb[0].mxu0 %v1819
  %v1936 = vpop.f32.mrb[0].mxu0
  %v1937 = vadd.f32 %v1851, %v1936
  %v1938 = vpop.f32.mrb[0].mxu0
  %1939 = vmatprep.mubr.f32.mxu0 %v1860
  %1940 = vmatmul.mubr.f32.gmra.mrb[0].mxu0 %v1820
  %v1941 = vpop.f32.mrb[0].mxu0
  %v1942 = vadd.f32 %v1851, %v1941
  %v1943 = vpop.f32.mrb[0].mxu0
  %1944 = vmatprep.mubr.f32.mxu0 %v1863
  %1945 = vmatmul.mubr.f32.gmra.mrb[0].mxu0 %v1821
  %v1946 = vpop.f32.mrb[0].mxu0
  %v1947 = vadd.f32 %v1851, %v1946
  %v1948 = vpop.f32.mrb[0].mxu0
  %1949 = vdwg.mxu0
  %vm1950 = vcmask 64512
  %1951 = vst.msk [vmem:[%s9] sm:$0xff] %vm1950, %v1932
  %1952 = vst.msk [vmem:[%s9 + $0x8] sm:$0xff] %vm1950, %v1937
  %1953 = vst.msk [vmem:[%s9 + $0x10] sm:$0xff] %vm1950, %v1942
  %1954 = vst.msk [vmem:[%s9 + $0x18] sm:$0xff] %vm1950, %v1947
  // Predicated region
  $region38: #{lcmp_forward.17} parent=0 // pred_check
    _
  $region39: #{lcmp_forward.17} parent=0 // pred_check_branch
    %1956 = sbr.rel (0) target = $region41
  $region40: #{lcmp_forward.17} parent=0 // pred_region
    _
  $region41: #{lcmp_forward.17} parent=0 // pred_fallthru
    _
  // Predicated region
  $region42: #{lcmp_forward.17} parent=0 // pred_check
    _
  $region43: #{lcmp_forward.17} parent=0 // pred_check_branch
    %1958 = sbr.rel (0) target = $region45
  $region44: #{lcmp_forward.17} parent=0 // pred_region
    _
  $region45: #{lcmp_forward.17} parent=0 // pred_fallthru
    _

</llo_original>
